<compile_context>
chip_gen: v5e
topology: v5e:2x2
jax: 0.10.0
libtpu: 0.0.40
codegen_flags: <defaults>
</compile_context>

<pallas_src>
import functools
import math

import jax
import jax.numpy as jnp
from jax.experimental import pallas as pl
from jax.experimental.pallas import tpu as pltpu


# ----------------------------------------------------------------------------
# In-kernel helpers
# ----------------------------------------------------------------------------
def _layer_norm(x, gamma, beta, inv_width):
    """LayerNorm over last dim, eps=1e-5, two-pass f32 variance."""
    mu = jnp.sum(x, axis=-1, keepdims=True) * inv_width
    xc = x - mu
    var = jnp.sum(xc * xc, axis=-1, keepdims=True) * inv_width
    return xc * jax.lax.rsqrt(var + 1e-5) * gamma + beta


def _attention_core(q, k, v, bias, ctx_ref, wo_ref, bo_ref, *, heads, head_dim):
    """Softmax attention on already-projected (L, E) q/k/v; heads on lane slabs.

    Writes per-head contexts into the VMEM scratch `ctx_ref` (lane offset h*D),
    then applies fc_out (wo already transposed, bf16) + bias from the scratch.
    `bias` is the additive mask (0 keep / -1e20 drop), shared by all heads.
    """
    bf16 = jnp.bfloat16
    for h in range(heads):
        sl = slice(h * head_dim, (h + 1) * head_dim)
        qh = q[:, sl].astype(bf16)
        kh = k[:, sl].astype(bf16)
        vh = v[:, sl].astype(bf16)
        # Contract the D axis of both operands -> no explicit (L,D) transpose.
        energy = jax.lax.dot_general(
            qh, kh, (((1,), (1,)), ((), ())),
            preferred_element_type=jnp.float32) + bias
        m = jnp.max(energy, axis=-1, keepdims=True)
        p = jnp.exp(energy - m)
        attn = p * pl.reciprocal(jnp.sum(p, axis=-1, keepdims=True), approx=True)
        ctx_ref[:, sl] = jnp.dot(attn.astype(bf16), vh,
                                 preferred_element_type=jnp.float32)
    return jnp.dot(ctx_ref[...].astype(bf16), wo_ref[...],
                   preferred_element_type=jnp.float32) + bo_ref[...]


# ----------------------------------------------------------------------------
# Fused DecoderBlock kernel (one batch element per grid step)
# ----------------------------------------------------------------------------
def _decoder_block_kernel(
        x_ref, val_ref, key_ref, trg_mask_ref, src_mask_ref,
        wqkv1_ref, wo1_ref, bo1_ref, g0_ref, be0_ref,
        wq2_ref, wk2_ref, wv2_ref, wo2_ref, bo2_ref, g1_ref, be1_ref,
        w1_ref, b1_ref, w2_ref, b2_ref, g2_ref, be2_ref,
        out_ref, ctx_ref, *, heads, head_dim):
    e = heads * head_dim
    inv_e = 1.0 / e
    bf16 = jnp.bfloat16
    neg_big = jnp.float32(-1e20)
    zero = jnp.float32(0.0)

    x_bf = x_ref[0]                       # (L, E) bf16
    x = x_bf.astype(jnp.float32)

    # ---- 1) masked self-attention + add & LayerNorm -------------------------
    # Fused Q|K|V projection: a single (L,E)@(E,3E) MXU pass (1/sqrt(E) folded
    # into the Q block of the weight).
    qkv = jnp.dot(x_bf, wqkv1_ref[...], preferred_element_type=jnp.float32)
    trg_bias = jnp.where(trg_mask_ref[0] == 0, neg_big, zero)
    a1 = _attention_core(qkv[:, :e], qkv[:, e:2 * e], qkv[:, 2 * e:],
                         trg_bias, ctx_ref, wo1_ref, bo1_ref,
                         heads=heads, head_dim=head_dim)
    # TODO(synk): nn.Dropout is stochastic; modeled as identity (p=0 / eval).
    query = _layer_norm(a1 + x, g0_ref[...], be0_ref[...], inv_e)

    # ---- 2) cross-attention (q=query, k=key, v=value) + add & LayerNorm -----
    q2 = jnp.dot(query.astype(bf16), wq2_ref[...],
                 preferred_element_type=jnp.float32)
    k2 = jnp.dot(key_ref[0], wk2_ref[...], preferred_element_type=jnp.float32)
    v2 = jnp.dot(val_ref[0], wv2_ref[...], preferred_element_type=jnp.float32)
    src_bias = jnp.where(src_mask_ref[0] == 0, neg_big, zero)
    a2 = _attention_core(q2, k2, v2, src_bias, ctx_ref, wo2_ref, bo2_ref,
                         heads=heads, head_dim=head_dim)
    hidden = _layer_norm(a2 + query, g1_ref[...], be1_ref[...], inv_e)

    # ---- 3) FFN (Linear -> ReLU -> Linear) + add & LayerNorm ----------------
    hid = jnp.maximum(
        jnp.dot(hidden.astype(bf16), w1_ref[...],
                preferred_element_type=jnp.float32) + b1_ref[...], 0.0)
    ff = jnp.dot(hid.astype(bf16), w2_ref[...],
                 preferred_element_type=jnp.float32) + b2_ref[...]
    out_ref[0] = _layer_norm(ff + hidden, g2_ref[...], be2_ref[...], inv_e
                             ).astype(out_ref.dtype)


# ----------------------------------------------------------------------------
# Wrapper: weight layout prep + single pallas_call
# ----------------------------------------------------------------------------
def decoder_block(x, value, key, src_mask, trg_mask, params, heads,
                  single_buffer_weights=True):
    """DecoderBlock.forward(x, value, key, src_mask, trg_mask)."""
    n, l, e = x.shape
    d = e // heads
    f = params["ffn"]["w1"].shape[0]
    bf16 = jnp.bfloat16

    eye_h = jnp.eye(heads, dtype=jnp.float32)

    def blockdiag_t(w):
        # Shared per-head (D,D) linear on the trailing head_dim == block-diag
        # (E,E) of W.T applied to the (L, E=H*D) activation.
        # TODO(synk): on v5e (128-wide MXU) prefer (L*H,D)@(D,D) dots when
        # D>=128; block-diag wastes HxD zero-FLOPs but fills the 256-wide
        # v6e/v7x MXU at small D.
        return jnp.kron(eye_h, w.T)

    scale = 1.0 / math.sqrt(e)            # fold softmax 1/sqrt(E) into Wq

    p1 = params["attn_self"]
    wqkv1 = jnp.concatenate(
        [blockdiag_t(p1["wq"]) * scale, blockdiag_t(p1["wk"]),
         blockdiag_t(p1["wv"])], axis=1).astype(bf16)            # (E, 3E)
    wo1 = p1["wo"].T.astype(bf16)
    bo1 = p1["bo"].reshape(1, e)

    p2 = params["attn_cross"]
    wq2 = (blockdiag_t(p2["wq"]) * scale).astype(bf16)
    wk2 = blockdiag_t(p2["wk"]).astype(bf16)
    wv2 = blockdiag_t(p2["wv"]).astype(bf16)
    wo2 = p2["wo"].T.astype(bf16)
    bo2 = p2["bo"].reshape(1, e)

    w1t = params["ffn"]["w1"].T.astype(bf16)      # (E, F)
    w2t = params["ffn"]["w2"].T.astype(bf16)      # (F, E)
    b1 = params["ffn"]["b1"].reshape(1, f)
    b2 = params["ffn"]["b2"].reshape(1, e)

    g0 = params["norm_g"].reshape(1, e);  be0 = params["norm_b"].reshape(1, e)
    g1 = params["norm1_g"].reshape(1, e); be1 = params["norm1_b"].reshape(1, e)
    g2 = params["norm2_g"].reshape(1, e); be2 = params["norm2_b"].reshape(1, e)

    # bf16 activations at the kernel boundary (halves activation HBM traffic);
    # masks travel as bf16 {0,1}, bias is built in-kernel.
    x_bf = x.astype(bf16)
    val_bf = value.astype(bf16)
    key_bf = key.astype(bf16)
    trg_m = (trg_mask != 0).astype(bf16)
    src_m = (src_mask != 0).astype(bf16)

    use_single_buf = single_buffer_weights and hasattr(pl, "Buffered")

    if use_single_buf:
        def full(shape):   # constant index_map -> never re-fetched; 1 buffer
            return pl.BlockSpec(shape, lambda b: (0,) * len(shape),
                                pipeline_mode=pl.Buffered(1))
    else:
        def full(shape):
            return pl.BlockSpec(shape, lambda b: (0,) * len(shape))

    def per_batch(shape):  # one batch element per grid step (double-buffered)
        return pl.BlockSpec(shape, lambda b: (b, 0, 0))

    # --- explicit VMEM budget (weights + per-batch blocks + intermediates) ---
    def nbytes(shape, dtype):
        return math.prod(shape) * jnp.dtype(dtype).itemsize

    weight_bytes = (nbytes((e, 3 * e), bf16) + 5 * nbytes((e, e), bf16)
                    + nbytes((e, f), bf16) + nbytes((f, e), bf16)
                    + 9 * nbytes((1, e), jnp.float32)
                    + nbytes((1, f), jnp.float32))
    weight_bytes *= 1 if use_single_buf else 2
    act_bytes = 2 * (4 * nbytes((1, l, e), bf16) + 2 * nbytes((1, l, l), bf16))
    scratch_bytes = nbytes((l, e), jnp.float32)
    inter_bytes = (nbytes((l, 3 * e), jnp.float32) + nbytes((l, f), jnp.float32)
                   + 4 * nbytes((l, e), jnp.float32)
                   + 2 * nbytes((l, l), jnp.float32))
    vmem_limit = weight_bytes + act_bytes + scratch_bytes + 4 * inter_bytes \
        + (2 << 20)
    vmem_limit = int(min(max(vmem_limit, 16 << 20), 64 << 20))

    kern = functools.partial(_decoder_block_kernel, heads=heads, head_dim=d)
    return pl.pallas_call(
        kern,
        out_shape=jax.ShapeDtypeStruct((n, l, e), bf16),
        grid=(n,),
        in_specs=[
            per_batch((1, l, e)), per_batch((1, l, e)), per_batch((1, l, e)),
            per_batch((1, l, l)), per_batch((1, l, l)),
            full((e, 3 * e)), full((e, e)), full((1, e)), full((1, e)),
            full((1, e)),
            full((e, e)), full((e, e)), full((e, e)), full((e, e)),
            full((1, e)), full((1, e)), full((1, e)),
            full((e, f)), full((1, f)), full((f, e)), full((1, e)),
            full((1, e)), full((1, e)),
        ],
        out_specs=per_batch((1, l, e)),
        scratch_shapes=[pltpu.VMEM((l, e), jnp.float32)],
        compiler_params=pltpu.CompilerParams(
            dimension_semantics=("parallel",),     # batch across TCs (v7x)
            vmem_limit_bytes=vmem_limit),
    )(x_bf, val_bf, key_bf, trg_m, src_m,
      wqkv1, wo1, bo1, g0, be0,
      wq2, wk2, wv2, wo2, bo2, g1, be1,
      w1t, b1, w2t, b2, g2, be2)


# ----------------------------------------------------------------------------
# Pure-JAX f32 reference (mirrors the PyTorch code) for verification
# ----------------------------------------------------------------------------
def _ref_attention(values, keys, query, mask, p, heads):
    n, lq, e = query.shape
    d = e // heads
    v = values.reshape(n, -1, heads, d) @ p["wv"].T
    k = keys.reshape(n, -1, heads, d) @ p["wk"].T
    q = query.reshape(n, lq, heads, d) @ p["wq"].T
    energy = jnp.einsum("nqhd,nkhd->nhqk", q, k)
    energy = jnp.where(mask[:, None] == 0, -1e20, energy)
    attn = jax.nn.softmax(energy / math.sqrt(e), axis=3)
    out = jnp.einsum("nhqk,nkhd->nqhd", attn, v).reshape(n, lq, e)
    return out @ p["wo"].T + p["bo"]


def _ref_ln(x, g, b):
    mu = jnp.mean(x, axis=-1, keepdims=True)
    var = jnp.mean((x - mu) ** 2, axis=-1, keepdims=True)
    return (x - mu) / jnp.sqrt(var + 1e-5) * g + b


def _ref_decoder_block(x, value, key, src_mask, trg_mask, p, heads):
    a1 = _ref_attention(x, x, x, trg_mask, p["attn_self"], heads)
    query = _ref_ln(a1 + x, p["norm_g"], p["norm_b"])
    a2 = _ref_attention(value, key, query, src_mask, p["attn_cross"], heads)
    h = _ref_ln(a2 + query, p["norm1_g"], p["norm1_b"])
    ff = jnp.maximum(h @ p["ffn"]["w1"].T + p["ffn"]["b1"], 0.0) @ p["ffn"]["w2"].T \
        + p["ffn"]["b2"]
    return _ref_ln(ff + h, p["norm2_g"], p["norm2_b"])


# ----------------------------------------------------------------------------
def _init_params(rng, embed, heads, forward_expansion):
    d = embed // heads
    f = forward_expansion * embed
    ks = jax.random.split(rng, 16)

    def lin(k, out_dim, in_dim):
        return jax.random.normal(k, (out_dim, in_dim), jnp.float32) / math.sqrt(in_dim)

    def attn_params(k0, k1, k2, k3, k4):
        return {
            "wq": lin(k0, d, d), "wk": lin(k1, d, d), "wv": lin(k2, d, d),
            "wo": lin(k3, embed, embed),
            "bo": 0.1 * jax.random.normal(k4, (embed,), jnp.float32),
        }

    return {
        "attn_self": attn_params(*ks[0:5]),
        "attn_cross": attn_params(*ks[5:10]),
        "norm_g": 1.0 + 0.1 * jax.random.normal(ks[10], (embed,), jnp.float32),
        "norm_b": 0.1 * jax.random.normal(ks[11], (embed,), jnp.float32),
        "norm1_g": jnp.ones((embed,), jnp.float32),
        "norm1_b": jnp.zeros((embed,), jnp.float32),
        "norm2_g": jnp.ones((embed,), jnp.float32),
        "norm2_b": jnp.zeros((embed,), jnp.float32),
        "ffn": {
            "w1": lin(ks[12], f, embed),
            "b1": 0.1 * jax.random.normal(ks[13], (f,), jnp.float32),
            "w2": lin(ks[14], embed, f),
            "b2": 0.1 * jax.random.normal(ks[15], (embed,), jnp.float32),
        },
    }


if __name__ == "__main__":
    N, L, EMBED, HEADS, FWD_EXP = 2, 8, 32, 4, 4

    root = jax.random.PRNGKey(0)
    kp, kx, kv, kk = jax.random.split(root, 4)

    params = _init_params(kp, EMBED, HEADS, FWD_EXP)
    x = jax.random.normal(kx, (N, L, EMBED), jnp.float32)
    value = jax.random.normal(kv, (N, L, EMBED), jnp.float32)
    key_t = jax.random.normal(kk, (N, L, EMBED), jnp.float32)

    # masks: nonzero == keep (same convention as `mask == 0` masked_fill)
    trg_mask = jnp.broadcast_to(jnp.tril(jnp.ones((L, L), jnp.float32)), (N, L, L))
    src_mask = jnp.ones((N, L, L), jnp.float32)

    try:
        run = jax.jit(functools.partial(decoder_block, heads=HEADS,
                                        single_buffer_weights=True))
        out = jax.block_until_ready(run(x, value, key_t, src_mask, trg_mask, params))
    except Exception:
        # Fallback if single-buffered (pipeline_mode=Buffered(1)) weight specs
        # are not supported by the installed jax/Mosaic version.
        run = jax.jit(functools.partial(decoder_block, heads=HEADS,
                                        single_buffer_weights=False))
        out = jax.block_until_ready(run(x, value, key_t, src_mask, trg_mask, params))

    out_f32 = out.astype(jnp.float32)
    ref = _ref_decoder_block(x, value, key_t, src_mask, trg_mask, params, HEADS)
    assert out.shape == (N, L, EMBED)
    # bf16 boundary activations + bf16 MXU operands (f32 accumulation)
    # -> slightly looser tolerance vs the f32 reference.
    assert jnp.allclose(out_f32, ref, rtol=5e-2, atol=5e-2), (
        f"max abs err {jnp.max(jnp.abs(out_f32 - ref))}")

    print("KERNEL_OK")
</pallas_src>

<mosaic_0001>
module attributes {stable_mosaic.version = 11 : i64} {
  func.func @_decoder_block_kernel(%arg0: i32, %arg1: memref<1x8x32xbf16, #tpu.memory_space<vmem>>, %arg2: memref<1x8x32xbf16, #tpu.memory_space<vmem>>, %arg3: memref<1x8x32xbf16, #tpu.memory_space<vmem>>, %arg4: memref<1x8x8xbf16, #tpu.memory_space<vmem>>, %arg5: memref<1x8x8xbf16, #tpu.memory_space<vmem>>, %arg6: memref<32x96xbf16, #tpu.memory_space<vmem>>, %arg7: memref<32x32xbf16, #tpu.memory_space<vmem>>, %arg8: memref<1x32xf32, #tpu.memory_space<vmem>>, %arg9: memref<1x32xf32, #tpu.memory_space<vmem>>, %arg10: memref<1x32xf32, #tpu.memory_space<vmem>>, %arg11: memref<32x32xbf16, #tpu.memory_space<vmem>>, %arg12: memref<32x32xbf16, #tpu.memory_space<vmem>>, %arg13: memref<32x32xbf16, #tpu.memory_space<vmem>>, %arg14: memref<32x32xbf16, #tpu.memory_space<vmem>>, %arg15: memref<1x32xf32, #tpu.memory_space<vmem>>, %arg16: memref<1x32xf32, #tpu.memory_space<vmem>>, %arg17: memref<1x32xf32, #tpu.memory_space<vmem>>, %arg18: memref<32x128xbf16, #tpu.memory_space<vmem>>, %arg19: memref<1x128xf32, #tpu.memory_space<vmem>>, %arg20: memref<128x32xbf16, #tpu.memory_space<vmem>>, %arg21: memref<1x32xf32, #tpu.memory_space<vmem>>, %arg22: memref<1x32xf32, #tpu.memory_space<vmem>>, %arg23: memref<1x32xf32, #tpu.memory_space<vmem>>, %arg24: memref<1x8x32xbf16, #tpu.memory_space<vmem>>, %arg25: memref<8x32xf32, #tpu.memory_space<vmem>>) attributes {dimension_semantics = [#tpu.dimension_semantics<parallel>], iteration_bounds = array<i64: 2>, scalar_prefetch = 0 : i64, scratch_operands = 1 : i64, tpu.core_type = #tpu.core_type<tc>, window_params = [{transform_indices = @transform_0, window_bounds = array<i64: 1, 8, 32>}, {transform_indices = @transform_1, window_bounds = array<i64: 1, 8, 32>}, {transform_indices = @transform_2, window_bounds = array<i64: 1, 8, 32>}, {transform_indices = @transform_3, window_bounds = array<i64: 1, 8, 8>}, {transform_indices = @transform_4, window_bounds = array<i64: 1, 8, 8>}, {pipeline_mode = #tpu.pipeline_mode<synchronous>, transform_indices = @transform_5, window_bounds = array<i64: 32, 96>}, {pipeline_mode = #tpu.pipeline_mode<synchronous>, transform_indices = @transform_6, window_bounds = array<i64: 32, 32>}, {pipeline_mode = #tpu.pipeline_mode<synchronous>, transform_indices = @transform_7, window_bounds = array<i64: 1, 32>}, {pipeline_mode = #tpu.pipeline_mode<synchronous>, transform_indices = @transform_8, window_bounds = array<i64: 1, 32>}, {pipeline_mode = #tpu.pipeline_mode<synchronous>, transform_indices = @transform_9, window_bounds = array<i64: 1, 32>}, {pipeline_mode = #tpu.pipeline_mode<synchronous>, transform_indices = @transform_10, window_bounds = array<i64: 32, 32>}, {pipeline_mode = #tpu.pipeline_mode<synchronous>, transform_indices = @transform_11, window_bounds = array<i64: 32, 32>}, {pipeline_mode = #tpu.pipeline_mode<synchronous>, transform_indices = @transform_12, window_bounds = array<i64: 32, 32>}, {pipeline_mode = #tpu.pipeline_mode<synchronous>, transform_indices = @transform_13, window_bounds = array<i64: 32, 32>}, {pipeline_mode = #tpu.pipeline_mode<synchronous>, transform_indices = @transform_14, window_bounds = array<i64: 1, 32>}, {pipeline_mode = #tpu.pipeline_mode<synchronous>, transform_indices = @transform_15, window_bounds = array<i64: 1, 32>}, {pipeline_mode = #tpu.pipeline_mode<synchronous>, transform_indices = @transform_16, window_bounds = array<i64: 1, 32>}, {pipeline_mode = #tpu.pipeline_mode<synchronous>, transform_indices = @transform_17, window_bounds = array<i64: 32, 128>}, {pipeline_mode = #tpu.pipeline_mode<synchronous>, transform_indices = @transform_18, window_bounds = array<i64: 1, 128>}, {pipeline_mode = #tpu.pipeline_mode<synchronous>, transform_indices = @transform_19, window_bounds = array<i64: 128, 32>}, {pipeline_mode = #tpu.pipeline_mode<synchronous>, transform_indices = @transform_20, window_bounds = array<i64: 1, 32>}, {pipeline_mode = #tpu.pipeline_mode<synchronous>, transform_indices = @transform_21, window_bounds = array<i64: 1, 32>}, {pipeline_mode = #tpu.pipeline_mode<synchronous>, transform_indices = @transform_22, window_bounds = array<i64: 1, 32>}, {transform_indices = @transform_23, window_bounds = array<i64: 1, 8, 32>}]} {
    %c0 = arith.constant 0 : index
    %c0_0 = arith.constant 0 : index
    %c0_1 = arith.constant 0 : index
    %0 = vector.load %arg1[%c0, %c0_0, %c0_1] : memref<1x8x32xbf16, #tpu.memory_space<vmem>>, vector<1x8x32xbf16>
    %1 = vector.shape_cast %0 : vector<1x8x32xbf16> to vector<8x32xbf16>
    %2 = arith.extf %1 : vector<8x32xbf16> to vector<8x32xf32>
    %c0_2 = arith.constant 0 : index
    %c0_3 = arith.constant 0 : index
    %3 = vector.load %arg6[%c0_2, %c0_3] : memref<32x96xbf16, #tpu.memory_space<vmem>>, vector<32x96xbf16>
    %cst = arith.constant dense<0.000000e+00> : vector<8x96xf32>
    %4 = tpu.matmul %1, %3, %cst {dimension_numbers = #tpu.dot_dimension_numbers<[1], [0], [0], [1], [0, 0, 1, 1], [], []>} : vector<8x32xbf16>, vector<32x96xbf16>, vector<8x96xf32> -> vector<8x96xf32>
    %c0_4 = arith.constant 0 : index
    %c0_5 = arith.constant 0 : index
    %c0_6 = arith.constant 0 : index
    %5 = vector.load %arg4[%c0_4, %c0_5, %c0_6] : memref<1x8x8xbf16, #tpu.memory_space<vmem>>, vector<1x8x8xbf16>
    %6 = vector.shape_cast %5 : vector<1x8x8xbf16> to vector<8x8xbf16>
    %cst_7 = arith.constant 0.000000e+00 : bf16
    %7 = vector.broadcast %cst_7 : bf16 to vector<8x8xbf16>
    %8 = arith.cmpf oeq, %6, %7 : vector<8x8xbf16>
    %cst_8 = arith.constant -1.000000e+20 : f32
    %cst_9 = arith.constant 0.000000e+00 : f32
    %9 = vector.broadcast %cst_8 : f32 to vector<8x8xf32>
    %10 = vector.broadcast %cst_9 : f32 to vector<8x8xf32>
    %11 = arith.select %8, %9, %10 : vector<8x8xi1>, vector<8x8xf32>
    %12 = vector.extract_strided_slice %4 {offsets = [0, 0], sizes = [8, 32], strides = [1, 1]} : vector<8x96xf32> to vector<8x32xf32>
    %13 = vector.extract_strided_slice %4 {offsets = [0, 32], sizes = [8, 32], strides = [1, 1]} : vector<8x96xf32> to vector<8x32xf32>
    %14 = vector.extract_strided_slice %4 {offsets = [0, 64], sizes = [8, 32], strides = [1, 1]} : vector<8x96xf32> to vector<8x32xf32>
    %15 = vector.extract_strided_slice %12 {offsets = [0, 0], sizes = [8, 8], strides = [1, 1]} : vector<8x32xf32> to vector<8x8xf32>
    %16 = arith.truncf %15 : vector<8x8xf32> to vector<8x8xbf16>
    %17 = vector.extract_strided_slice %13 {offsets = [0, 0], sizes = [8, 8], strides = [1, 1]} : vector<8x32xf32> to vector<8x8xf32>
    %18 = arith.truncf %17 : vector<8x8xf32> to vector<8x8xbf16>
    %19 = vector.extract_strided_slice %14 {offsets = [0, 0], sizes = [8, 8], strides = [1, 1]} : vector<8x32xf32> to vector<8x8xf32>
    %20 = arith.truncf %19 : vector<8x8xf32> to vector<8x8xbf16>
    %cst_10 = arith.constant dense<0.000000e+00> : vector<8x8xf32>
    %21 = tpu.matmul %16, %18, %cst_10 {dimension_numbers = #tpu.dot_dimension_numbers<[1], [1], [0], [0], [0, 0, 1, 0], [], []>} : vector<8x8xbf16>, vector<8x8xbf16>, vector<8x8xf32> -> vector<8x8xf32>
    %22 = arith.addf %21, %11 : vector<8x8xf32>
    %cst_11 = arith.constant dense<0xFF800000> : vector<8xf32>
    %23 = vector.multi_reduction <maximumf>, %22, %cst_11 [1] : vector<8x8xf32> to vector<8xf32>
    %24 = vector.shape_cast %23 : vector<8xf32> to vector<8x1xf32>
    %25 = vector.broadcast %24 : vector<8x1xf32> to vector<8x8xf32>
    %26 = arith.subf %22, %25 : vector<8x8xf32>
    %27 = math.exp %26 : vector<8x8xf32>
    %cst_12 = arith.constant dense<0.000000e+00> : vector<8xf32>
    %28 = vector.multi_reduction <add>, %27, %cst_12 [1] : vector<8x8xf32> to vector<8xf32>
    %29 = vector.shape_cast %28 : vector<8xf32> to vector<8x1xf32>
    %30 = tpu.reciprocal %29 {approx = true} : vector<8x1xf32> -> vector<8x1xf32>
    %31 = vector.broadcast %30 : vector<8x1xf32> to vector<8x8xf32>
    %32 = arith.mulf %27, %31 : vector<8x8xf32>
    %33 = arith.truncf %32 : vector<8x8xf32> to vector<8x8xbf16>
    %cst_13 = arith.constant dense<0.000000e+00> : vector<8x8xf32>
    %34 = tpu.matmul %33, %20, %cst_13 {dimension_numbers = #tpu.dot_dimension_numbers<[1], [0], [0], [1], [0, 0, 1, 1], [], []>} : vector<8x8xbf16>, vector<8x8xbf16>, vector<8x8xf32> -> vector<8x8xf32>
    %c0_14 = arith.constant 0 : index
    %c0_15 = arith.constant 0 : index
    %35 = vector.load %arg25[%c0_14, %c0_15] : memref<8x32xf32, #tpu.memory_space<vmem>>, vector<8x8xf32>
    tpu.vector_store %arg25[%c0_14, %c0_15], %34 {strides = array<i32>} : memref<8x32xf32, #tpu.memory_space<vmem>>, vector<8x8xf32>,
    %36 = vector.extract_strided_slice %12 {offsets = [0, 8], sizes = [8, 8], strides = [1, 1]} : vector<8x32xf32> to vector<8x8xf32>
    %37 = arith.truncf %36 : vector<8x8xf32> to vector<8x8xbf16>
    %38 = vector.extract_strided_slice %13 {offsets = [0, 8], sizes = [8, 8], strides = [1, 1]} : vector<8x32xf32> to vector<8x8xf32>
    %39 = arith.truncf %38 : vector<8x8xf32> to vector<8x8xbf16>
    %40 = vector.extract_strided_slice %14 {offsets = [0, 8], sizes = [8, 8], strides = [1, 1]} : vector<8x32xf32> to vector<8x8xf32>
    %41 = arith.truncf %40 : vector<8x8xf32> to vector<8x8xbf16>
    %cst_16 = arith.constant dense<0.000000e+00> : vector<8x8xf32>
    %42 = tpu.matmul %37, %39, %cst_16 {dimension_numbers = #tpu.dot_dimension_numbers<[1], [1], [0], [0], [0, 0, 1, 0], [], []>} : vector<8x8xbf16>, vector<8x8xbf16>, vector<8x8xf32> -> vector<8x8xf32>
    %43 = arith.addf %42, %11 : vector<8x8xf32>
    %cst_17 = arith.constant dense<0xFF800000> : vector<8xf32>
    %44 = vector.multi_reduction <maximumf>, %43, %cst_17 [1] : vector<8x8xf32> to vector<8xf32>
    %45 = vector.shape_cast %44 : vector<8xf32> to vector<8x1xf32>
    %46 = vector.broadcast %45 : vector<8x1xf32> to vector<8x8xf32>
    %47 = arith.subf %43, %46 : vector<8x8xf32>
    %48 = math.exp %47 : vector<8x8xf32>
    %cst_18 = arith.constant dense<0.000000e+00> : vector<8xf32>
    %49 = vector.multi_reduction <add>, %48, %cst_18 [1] : vector<8x8xf32> to vector<8xf32>
    %50 = vector.shape_cast %49 : vector<8xf32> to vector<8x1xf32>
    %51 = tpu.reciprocal %50 {approx = true} : vector<8x1xf32> -> vector<8x1xf32>
    %52 = vector.broadcast %51 : vector<8x1xf32> to vector<8x8xf32>
    %53 = arith.mulf %48, %52 : vector<8x8xf32>
    %54 = arith.truncf %53 : vector<8x8xf32> to vector<8x8xbf16>
    %cst_19 = arith.constant dense<0.000000e+00> : vector<8x8xf32>
    %55 = tpu.matmul %54, %41, %cst_19 {dimension_numbers = #tpu.dot_dimension_numbers<[1], [0], [0], [1], [0, 0, 1, 1], [], []>} : vector<8x8xbf16>, vector<8x8xbf16>, vector<8x8xf32> -> vector<8x8xf32>
    %c0_20 = arith.constant 0 : index
    %c8 = arith.constant 8 : index
    %56 = vector.load %arg25[%c0_20, %c8] : memref<8x32xf32, #tpu.memory_space<vmem>>, vector<8x8xf32>
    tpu.vector_store %arg25[%c0_20, %c8], %55 {strides = array<i32>} : memref<8x32xf32, #tpu.memory_space<vmem>>, vector<8x8xf32>,
    %57 = vector.extract_strided_slice %12 {offsets = [0, 16], sizes = [8, 8], strides = [1, 1]} : vector<8x32xf32> to vector<8x8xf32>
    %58 = arith.truncf %57 : vector<8x8xf32> to vector<8x8xbf16>
    %59 = vector.extract_strided_slice %13 {offsets = [0, 16], sizes = [8, 8], strides = [1, 1]} : vector<8x32xf32> to vector<8x8xf32>
    %60 = arith.truncf %59 : vector<8x8xf32> to vector<8x8xbf16>
    %61 = vector.extract_strided_slice %14 {offsets = [0, 16], sizes = [8, 8], strides = [1, 1]} : vector<8x32xf32> to vector<8x8xf32>
    %62 = arith.truncf %61 : vector<8x8xf32> to vector<8x8xbf16>
    %cst_21 = arith.constant dense<0.000000e+00> : vector<8x8xf32>
    %63 = tpu.matmul %58, %60, %cst_21 {dimension_numbers = #tpu.dot_dimension_numbers<[1], [1], [0], [0], [0, 0, 1, 0], [], []>} : vector<8x8xbf16>, vector<8x8xbf16>, vector<8x8xf32> -> vector<8x8xf32>
    %64 = arith.addf %63, %11 : vector<8x8xf32>
    %cst_22 = arith.constant dense<0xFF800000> : vector<8xf32>
    %65 = vector.multi_reduction <maximumf>, %64, %cst_22 [1] : vector<8x8xf32> to vector<8xf32>
    %66 = vector.shape_cast %65 : vector<8xf32> to vector<8x1xf32>
    %67 = vector.broadcast %66 : vector<8x1xf32> to vector<8x8xf32>
    %68 = arith.subf %64, %67 : vector<8x8xf32>
    %69 = math.exp %68 : vector<8x8xf32>
    %cst_23 = arith.constant dense<0.000000e+00> : vector<8xf32>
    %70 = vector.multi_reduction <add>, %69, %cst_23 [1] : vector<8x8xf32> to vector<8xf32>
    %71 = vector.shape_cast %70 : vector<8xf32> to vector<8x1xf32>
    %72 = tpu.reciprocal %71 {approx = true} : vector<8x1xf32> -> vector<8x1xf32>
    %73 = vector.broadcast %72 : vector<8x1xf32> to vector<8x8xf32>
    %74 = arith.mulf %69, %73 : vector<8x8xf32>
    %75 = arith.truncf %74 : vector<8x8xf32> to vector<8x8xbf16>
    %cst_24 = arith.constant dense<0.000000e+00> : vector<8x8xf32>
    %76 = tpu.matmul %75, %62, %cst_24 {dimension_numbers = #tpu.dot_dimension_numbers<[1], [0], [0], [1], [0, 0, 1, 1], [], []>} : vector<8x8xbf16>, vector<8x8xbf16>, vector<8x8xf32> -> vector<8x8xf32>
    %c0_25 = arith.constant 0 : index
    %c16 = arith.constant 16 : index
    %77 = vector.load %arg25[%c0_25, %c16] : memref<8x32xf32, #tpu.memory_space<vmem>>, vector<8x8xf32>
    tpu.vector_store %arg25[%c0_25, %c16], %76 {strides = array<i32>} : memref<8x32xf32, #tpu.memory_space<vmem>>, vector<8x8xf32>,
    %78 = vector.extract_strided_slice %12 {offsets = [0, 24], sizes = [8, 8], strides = [1, 1]} : vector<8x32xf32> to vector<8x8xf32>
    %79 = arith.truncf %78 : vector<8x8xf32> to vector<8x8xbf16>
    %80 = vector.extract_strided_slice %13 {offsets = [0, 24], sizes = [8, 8], strides = [1, 1]} : vector<8x32xf32> to vector<8x8xf32>
    %81 = arith.truncf %80 : vector<8x8xf32> to vector<8x8xbf16>
    %82 = vector.extract_strided_slice %14 {offsets = [0, 24], sizes = [8, 8], strides = [1, 1]} : vector<8x32xf32> to vector<8x8xf32>
    %83 = arith.truncf %82 : vector<8x8xf32> to vector<8x8xbf16>
    %cst_26 = arith.constant dense<0.000000e+00> : vector<8x8xf32>
    %84 = tpu.matmul %79, %81, %cst_26 {dimension_numbers = #tpu.dot_dimension_numbers<[1], [1], [0], [0], [0, 0, 1, 0], [], []>} : vector<8x8xbf16>, vector<8x8xbf16>, vector<8x8xf32> -> vector<8x8xf32>
    %85 = arith.addf %84, %11 : vector<8x8xf32>
    %cst_27 = arith.constant dense<0xFF800000> : vector<8xf32>
    %86 = vector.multi_reduction <maximumf>, %85, %cst_27 [1] : vector<8x8xf32> to vector<8xf32>
    %87 = vector.shape_cast %86 : vector<8xf32> to vector<8x1xf32>
    %88 = vector.broadcast %87 : vector<8x1xf32> to vector<8x8xf32>
    %89 = arith.subf %85, %88 : vector<8x8xf32>
    %90 = math.exp %89 : vector<8x8xf32>
    %cst_28 = arith.constant dense<0.000000e+00> : vector<8xf32>
    %91 = vector.multi_reduction <add>, %90, %cst_28 [1] : vector<8x8xf32> to vector<8xf32>
    %92 = vector.shape_cast %91 : vector<8xf32> to vector<8x1xf32>
    %93 = tpu.reciprocal %92 {approx = true} : vector<8x1xf32> -> vector<8x1xf32>
    %94 = vector.broadcast %93 : vector<8x1xf32> to vector<8x8xf32>
    %95 = arith.mulf %90, %94 : vector<8x8xf32>
    %96 = arith.truncf %95 : vector<8x8xf32> to vector<8x8xbf16>
    %cst_29 = arith.constant dense<0.000000e+00> : vector<8x8xf32>
    %97 = tpu.matmul %96, %83, %cst_29 {dimension_numbers = #tpu.dot_dimension_numbers<[1], [0], [0], [1], [0, 0, 1, 1], [], []>} : vector<8x8xbf16>, vector<8x8xbf16>, vector<8x8xf32> -> vector<8x8xf32>
    %c0_30 = arith.constant 0 : index
    %c24 = arith.constant 24 : index
    %98 = vector.load %arg25[%c0_30, %c24] : memref<8x32xf32, #tpu.memory_space<vmem>>, vector<8x8xf32>
    tpu.vector_store %arg25[%c0_30, %c24], %97 {strides = array<i32>} : memref<8x32xf32, #tpu.memory_space<vmem>>, vector<8x8xf32>,
    %c0_31 = arith.constant 0 : index
    %c0_32 = arith.constant 0 : index
    %99 = vector.load %arg25[%c0_31, %c0_32] : memref<8x32xf32, #tpu.memory_space<vmem>>, vector<8x32xf32>
    %100 = arith.truncf %99 : vector<8x32xf32> to vector<8x32xbf16>
    %c0_33 = arith.constant 0 : index
    %c0_34 = arith.constant 0 : index
    %101 = vector.load %arg7[%c0_33, %c0_34] : memref<32x32xbf16, #tpu.memory_space<vmem>>, vector<32x32xbf16>
    %cst_35 = arith.constant dense<0.000000e+00> : vector<8x32xf32>
    %102 = tpu.matmul %100, %101, %cst_35 {dimension_numbers = #tpu.dot_dimension_numbers<[1], [0], [0], [1], [0, 0, 1, 1], [], []>} : vector<8x32xbf16>, vector<32x32xbf16>, vector<8x32xf32> -> vector<8x32xf32>
    %c0_36 = arith.constant 0 : index
    %c0_37 = arith.constant 0 : index
    %103 = vector.load %arg8[%c0_36, %c0_37] : memref<1x32xf32, #tpu.memory_space<vmem>>, vector<1x32xf32>
    %104 = vector.broadcast %103 : vector<1x32xf32> to vector<8x32xf32>
    %105 = arith.addf %102, %104 : vector<8x32xf32>
    %106 = arith.addf %105, %2 : vector<8x32xf32>
    %c0_38 = arith.constant 0 : index
    %c0_39 = arith.constant 0 : index
    %107 = vector.load %arg9[%c0_38, %c0_39] : memref<1x32xf32, #tpu.memory_space<vmem>>, vector<1x32xf32>
    %c0_40 = arith.constant 0 : index
    %c0_41 = arith.constant 0 : index
    %108 = vector.load %arg10[%c0_40, %c0_41] : memref<1x32xf32, #tpu.memory_space<vmem>>, vector<1x32xf32>
    %cst_42 = arith.constant dense<0.000000e+00> : vector<8xf32>
    %109 = vector.multi_reduction <add>, %106, %cst_42 [1] : vector<8x32xf32> to vector<8xf32>
    %110 = vector.shape_cast %109 : vector<8xf32> to vector<8x1xf32>
    %cst_43 = arith.constant 3.125000e-02 : f32
    %111 = vector.broadcast %cst_43 : f32 to vector<8x1xf32>
    %112 = arith.mulf %110, %111 : vector<8x1xf32>
    %113 = vector.broadcast %112 : vector<8x1xf32> to vector<8x32xf32>
    %114 = arith.subf %106, %113 : vector<8x32xf32>
    %115 = arith.mulf %114, %114 : vector<8x32xf32>
    %cst_44 = arith.constant dense<0.000000e+00> : vector<8xf32>
    %116 = vector.multi_reduction <add>, %115, %cst_44 [1] : vector<8x32xf32> to vector<8xf32>
    %117 = vector.shape_cast %116 : vector<8xf32> to vector<8x1xf32>
    %cst_45 = arith.constant 3.125000e-02 : f32
    %118 = vector.broadcast %cst_45 : f32 to vector<8x1xf32>
    %119 = arith.mulf %117, %118 : vector<8x1xf32>
    %cst_46 = arith.constant 9.99999974E-6 : f32
    %120 = vector.broadcast %cst_46 : f32 to vector<8x1xf32>
    %121 = arith.addf %119, %120 : vector<8x1xf32>
    %122 = math.rsqrt %121 : vector<8x1xf32>
    %123 = vector.broadcast %122 : vector<8x1xf32> to vector<8x32xf32>
    %124 = arith.mulf %114, %123 : vector<8x32xf32>
    %125 = vector.broadcast %107 : vector<1x32xf32> to vector<8x32xf32>
    %126 = arith.mulf %124, %125 : vector<8x32xf32>
    %127 = vector.broadcast %108 : vector<1x32xf32> to vector<8x32xf32>
    %128 = arith.addf %126, %127 : vector<8x32xf32>
    %129 = arith.truncf %128 : vector<8x32xf32> to vector<8x32xbf16>
    %c0_47 = arith.constant 0 : index
    %c0_48 = arith.constant 0 : index
    %130 = vector.load %arg11[%c0_47, %c0_48] : memref<32x32xbf16, #tpu.memory_space<vmem>>, vector<32x32xbf16>
    %cst_49 = arith.constant dense<0.000000e+00> : vector<8x32xf32>
    %131 = tpu.matmul %129, %130, %cst_49 {dimension_numbers = #tpu.dot_dimension_numbers<[1], [0], [0], [1], [0, 0, 1, 1], [], []>} : vector<8x32xbf16>, vector<32x32xbf16>, vector<8x32xf32> -> vector<8x32xf32>
    %c0_50 = arith.constant 0 : index
    %c0_51 = arith.constant 0 : index
    %c0_52 = arith.constant 0 : index
    %132 = vector.load %arg3[%c0_50, %c0_51, %c0_52] : memref<1x8x32xbf16, #tpu.memory_space<vmem>>, vector<1x8x32xbf16>
    %133 = vector.shape_cast %132 : vector<1x8x32xbf16> to vector<8x32xbf16>
    %c0_53 = arith.constant 0 : index
    %c0_54 = arith.constant 0 : index
    %134 = vector.load %arg12[%c0_53, %c0_54] : memref<32x32xbf16, #tpu.memory_space<vmem>>, vector<32x32xbf16>
    %cst_55 = arith.constant dense<0.000000e+00> : vector<8x32xf32>
    %135 = tpu.matmul %133, %134, %cst_55 {dimension_numbers = #tpu.dot_dimension_numbers<[1], [0], [0], [1], [0, 0, 1, 1], [], []>} : vector<8x32xbf16>, vector<32x32xbf16>, vector<8x32xf32> -> vector<8x32xf32>
    %c0_56 = arith.constant 0 : index
    %c0_57 = arith.constant 0 : index
    %c0_58 = arith.constant 0 : index
    %136 = vector.load %arg2[%c0_56, %c0_57, %c0_58] : memref<1x8x32xbf16, #tpu.memory_space<vmem>>, vector<1x8x32xbf16>
    %137 = vector.shape_cast %136 : vector<1x8x32xbf16> to vector<8x32xbf16>
    %c0_59 = arith.constant 0 : index
    %c0_60 = arith.constant 0 : index
    %138 = vector.load %arg13[%c0_59, %c0_60] : memref<32x32xbf16, #tpu.memory_space<vmem>>, vector<32x32xbf16>
    %cst_61 = arith.constant dense<0.000000e+00> : vector<8x32xf32>
    %139 = tpu.matmul %137, %138, %cst_61 {dimension_numbers = #tpu.dot_dimension_numbers<[1], [0], [0], [1], [0, 0, 1, 1], [], []>} : vector<8x32xbf16>, vector<32x32xbf16>, vector<8x32xf32> -> vector<8x32xf32>
    %c0_62 = arith.constant 0 : index
    %c0_63 = arith.constant 0 : index
    %c0_64 = arith.constant 0 : index
    %140 = vector.load %arg5[%c0_62, %c0_63, %c0_64] : memref<1x8x8xbf16, #tpu.memory_space<vmem>>, vector<1x8x8xbf16>
    %141 = vector.shape_cast %140 : vector<1x8x8xbf16> to vector<8x8xbf16>
    %cst_65 = arith.constant 0.000000e+00 : bf16
    %142 = vector.broadcast %cst_65 : bf16 to vector<8x8xbf16>
    %143 = arith.cmpf oeq, %141, %142 : vector<8x8xbf16>
    %cst_66 = arith.constant -1.000000e+20 : f32
    %cst_67 = arith.constant 0.000000e+00 : f32
    %144 = vector.broadcast %cst_66 : f32 to vector<8x8xf32>
    %145 = vector.broadcast %cst_67 : f32 to vector<8x8xf32>
    %146 = arith.select %143, %144, %145 : vector<8x8xi1>, vector<8x8xf32>
    %147 = vector.extract_strided_slice %131 {offsets = [0, 0], sizes = [8, 8], strides = [1, 1]} : vector<8x32xf32> to vector<8x8xf32>
    %148 = arith.truncf %147 : vector<8x8xf32> to vector<8x8xbf16>
    %149 = vector.extract_strided_slice %135 {offsets = [0, 0], sizes = [8, 8], strides = [1, 1]} : vector<8x32xf32> to vector<8x8xf32>
    %150 = arith.truncf %149 : vector<8x8xf32> to vector<8x8xbf16>
    %151 = vector.extract_strided_slice %139 {offsets = [0, 0], sizes = [8, 8], strides = [1, 1]} : vector<8x32xf32> to vector<8x8xf32>
    %152 = arith.truncf %151 : vector<8x8xf32> to vector<8x8xbf16>
    %cst_68 = arith.constant dense<0.000000e+00> : vector<8x8xf32>
    %153 = tpu.matmul %148, %150, %cst_68 {dimension_numbers = #tpu.dot_dimension_numbers<[1], [1], [0], [0], [0, 0, 1, 0], [], []>} : vector<8x8xbf16>, vector<8x8xbf16>, vector<8x8xf32> -> vector<8x8xf32>
    %154 = arith.addf %153, %146 : vector<8x8xf32>
    %cst_69 = arith.constant dense<0xFF800000> : vector<8xf32>
    %155 = vector.multi_reduction <maximumf>, %154, %cst_69 [1] : vector<8x8xf32> to vector<8xf32>
    %156 = vector.shape_cast %155 : vector<8xf32> to vector<8x1xf32>
    %157 = vector.broadcast %156 : vector<8x1xf32> to vector<8x8xf32>
    %158 = arith.subf %154, %157 : vector<8x8xf32>
    %159 = math.exp %158 : vector<8x8xf32>
    %cst_70 = arith.constant dense<0.000000e+00> : vector<8xf32>
    %160 = vector.multi_reduction <add>, %159, %cst_70 [1] : vector<8x8xf32> to vector<8xf32>
    %161 = vector.shape_cast %160 : vector<8xf32> to vector<8x1xf32>
    %162 = tpu.reciprocal %161 {approx = true} : vector<8x1xf32> -> vector<8x1xf32>
    %163 = vector.broadcast %162 : vector<8x1xf32> to vector<8x8xf32>
    %164 = arith.mulf %159, %163 : vector<8x8xf32>
    %165 = arith.truncf %164 : vector<8x8xf32> to vector<8x8xbf16>
    %cst_71 = arith.constant dense<0.000000e+00> : vector<8x8xf32>
    %166 = tpu.matmul %165, %152, %cst_71 {dimension_numbers = #tpu.dot_dimension_numbers<[1], [0], [0], [1], [0, 0, 1, 1], [], []>} : vector<8x8xbf16>, vector<8x8xbf16>, vector<8x8xf32> -> vector<8x8xf32>
    %c0_72 = arith.constant 0 : index
    %c0_73 = arith.constant 0 : index
    %167 = vector.load %arg25[%c0_72, %c0_73] : memref<8x32xf32, #tpu.memory_space<vmem>>, vector<8x8xf32>
    tpu.vector_store %arg25[%c0_72, %c0_73], %166 {strides = array<i32>} : memref<8x32xf32, #tpu.memory_space<vmem>>, vector<8x8xf32>,
    %168 = vector.extract_strided_slice %131 {offsets = [0, 8], sizes = [8, 8], strides = [1, 1]} : vector<8x32xf32> to vector<8x8xf32>
    %169 = arith.truncf %168 : vector<8x8xf32> to vector<8x8xbf16>
    %170 = vector.extract_strided_slice %135 {offsets = [0, 8], sizes = [8, 8], strides = [1, 1]} : vector<8x32xf32> to vector<8x8xf32>
    %171 = arith.truncf %170 : vector<8x8xf32> to vector<8x8xbf16>
    %172 = vector.extract_strided_slice %139 {offsets = [0, 8], sizes = [8, 8], strides = [1, 1]} : vector<8x32xf32> to vector<8x8xf32>
    %173 = arith.truncf %172 : vector<8x8xf32> to vector<8x8xbf16>
    %cst_74 = arith.constant dense<0.000000e+00> : vector<8x8xf32>
    %174 = tpu.matmul %169, %171, %cst_74 {dimension_numbers = #tpu.dot_dimension_numbers<[1], [1], [0], [0], [0, 0, 1, 0], [], []>} : vector<8x8xbf16>, vector<8x8xbf16>, vector<8x8xf32> -> vector<8x8xf32>
    %175 = arith.addf %174, %146 : vector<8x8xf32>
    %cst_75 = arith.constant dense<0xFF800000> : vector<8xf32>
    %176 = vector.multi_reduction <maximumf>, %175, %cst_75 [1] : vector<8x8xf32> to vector<8xf32>
    %177 = vector.shape_cast %176 : vector<8xf32> to vector<8x1xf32>
    %178 = vector.broadcast %177 : vector<8x1xf32> to vector<8x8xf32>
    %179 = arith.subf %175, %178 : vector<8x8xf32>
    %180 = math.exp %179 : vector<8x8xf32>
    %cst_76 = arith.constant dense<0.000000e+00> : vector<8xf32>
    %181 = vector.multi_reduction <add>, %180, %cst_76 [1] : vector<8x8xf32> to vector<8xf32>
    %182 = vector.shape_cast %181 : vector<8xf32> to vector<8x1xf32>
    %183 = tpu.reciprocal %182 {approx = true} : vector<8x1xf32> -> vector<8x1xf32>
    %184 = vector.broadcast %183 : vector<8x1xf32> to vector<8x8xf32>
    %185 = arith.mulf %180, %184 : vector<8x8xf32>
    %186 = arith.truncf %185 : vector<8x8xf32> to vector<8x8xbf16>
    %cst_77 = arith.constant dense<0.000000e+00> : vector<8x8xf32>
    %187 = tpu.matmul %186, %173, %cst_77 {dimension_numbers = #tpu.dot_dimension_numbers<[1], [0], [0], [1], [0, 0, 1, 1], [], []>} : vector<8x8xbf16>, vector<8x8xbf16>, vector<8x8xf32> -> vector<8x8xf32>
    %c0_78 = arith.constant 0 : index
    %c8_79 = arith.constant 8 : index
    %188 = vector.load %arg25[%c0_78, %c8_79] : memref<8x32xf32, #tpu.memory_space<vmem>>, vector<8x8xf32>
    tpu.vector_store %arg25[%c0_78, %c8_79], %187 {strides = array<i32>} : memref<8x32xf32, #tpu.memory_space<vmem>>, vector<8x8xf32>,
    %189 = vector.extract_strided_slice %131 {offsets = [0, 16], sizes = [8, 8], strides = [1, 1]} : vector<8x32xf32> to vector<8x8xf32>
    %190 = arith.truncf %189 : vector<8x8xf32> to vector<8x8xbf16>
    %191 = vector.extract_strided_slice %135 {offsets = [0, 16], sizes = [8, 8], strides = [1, 1]} : vector<8x32xf32> to vector<8x8xf32>
    %192 = arith.truncf %191 : vector<8x8xf32> to vector<8x8xbf16>
    %193 = vector.extract_strided_slice %139 {offsets = [0, 16], sizes = [8, 8], strides = [1, 1]} : vector<8x32xf32> to vector<8x8xf32>
    %194 = arith.truncf %193 : vector<8x8xf32> to vector<8x8xbf16>
    %cst_80 = arith.constant dense<0.000000e+00> : vector<8x8xf32>
    %195 = tpu.matmul %190, %192, %cst_80 {dimension_numbers = #tpu.dot_dimension_numbers<[1], [1], [0], [0], [0, 0, 1, 0], [], []>} : vector<8x8xbf16>, vector<8x8xbf16>, vector<8x8xf32> -> vector<8x8xf32>
    %196 = arith.addf %195, %146 : vector<8x8xf32>
    %cst_81 = arith.constant dense<0xFF800000> : vector<8xf32>
    %197 = vector.multi_reduction <maximumf>, %196, %cst_81 [1] : vector<8x8xf32> to vector<8xf32>
    %198 = vector.shape_cast %197 : vector<8xf32> to vector<8x1xf32>
    %199 = vector.broadcast %198 : vector<8x1xf32> to vector<8x8xf32>
    %200 = arith.subf %196, %199 : vector<8x8xf32>
    %201 = math.exp %200 : vector<8x8xf32>
    %cst_82 = arith.constant dense<0.000000e+00> : vector<8xf32>
    %202 = vector.multi_reduction <add>, %201, %cst_82 [1] : vector<8x8xf32> to vector<8xf32>
    %203 = vector.shape_cast %202 : vector<8xf32> to vector<8x1xf32>
    %204 = tpu.reciprocal %203 {approx = true} : vector<8x1xf32> -> vector<8x1xf32>
    %205 = vector.broadcast %204 : vector<8x1xf32> to vector<8x8xf32>
    %206 = arith.mulf %201, %205 : vector<8x8xf32>
    %207 = arith.truncf %206 : vector<8x8xf32> to vector<8x8xbf16>
    %cst_83 = arith.constant dense<0.000000e+00> : vector<8x8xf32>
    %208 = tpu.matmul %207, %194, %cst_83 {dimension_numbers = #tpu.dot_dimension_numbers<[1], [0], [0], [1], [0, 0, 1, 1], [], []>} : vector<8x8xbf16>, vector<8x8xbf16>, vector<8x8xf32> -> vector<8x8xf32>
    %c0_84 = arith.constant 0 : index
    %c16_85 = arith.constant 16 : index
    %209 = vector.load %arg25[%c0_84, %c16_85] : memref<8x32xf32, #tpu.memory_space<vmem>>, vector<8x8xf32>
    tpu.vector_store %arg25[%c0_84, %c16_85], %208 {strides = array<i32>} : memref<8x32xf32, #tpu.memory_space<vmem>>, vector<8x8xf32>,
    %210 = vector.extract_strided_slice %131 {offsets = [0, 24], sizes = [8, 8], strides = [1, 1]} : vector<8x32xf32> to vector<8x8xf32>
    %211 = arith.truncf %210 : vector<8x8xf32> to vector<8x8xbf16>
    %212 = vector.extract_strided_slice %135 {offsets = [0, 24], sizes = [8, 8], strides = [1, 1]} : vector<8x32xf32> to vector<8x8xf32>
    %213 = arith.truncf %212 : vector<8x8xf32> to vector<8x8xbf16>
    %214 = vector.extract_strided_slice %139 {offsets = [0, 24], sizes = [8, 8], strides = [1, 1]} : vector<8x32xf32> to vector<8x8xf32>
    %215 = arith.truncf %214 : vector<8x8xf32> to vector<8x8xbf16>
    %cst_86 = arith.constant dense<0.000000e+00> : vector<8x8xf32>
    %216 = tpu.matmul %211, %213, %cst_86 {dimension_numbers = #tpu.dot_dimension_numbers<[1], [1], [0], [0], [0, 0, 1, 0], [], []>} : vector<8x8xbf16>, vector<8x8xbf16>, vector<8x8xf32> -> vector<8x8xf32>
    %217 = arith.addf %216, %146 : vector<8x8xf32>
    %cst_87 = arith.constant dense<0xFF800000> : vector<8xf32>
    %218 = vector.multi_reduction <maximumf>, %217, %cst_87 [1] : vector<8x8xf32> to vector<8xf32>
    %219 = vector.shape_cast %218 : vector<8xf32> to vector<8x1xf32>
    %220 = vector.broadcast %219 : vector<8x1xf32> to vector<8x8xf32>
    %221 = arith.subf %217, %220 : vector<8x8xf32>
    %222 = math.exp %221 : vector<8x8xf32>
    %cst_88 = arith.constant dense<0.000000e+00> : vector<8xf32>
    %223 = vector.multi_reduction <add>, %222, %cst_88 [1] : vector<8x8xf32> to vector<8xf32>
    %224 = vector.shape_cast %223 : vector<8xf32> to vector<8x1xf32>
    %225 = tpu.reciprocal %224 {approx = true} : vector<8x1xf32> -> vector<8x1xf32>
    %226 = vector.broadcast %225 : vector<8x1xf32> to vector<8x8xf32>
    %227 = arith.mulf %222, %226 : vector<8x8xf32>
    %228 = arith.truncf %227 : vector<8x8xf32> to vector<8x8xbf16>
    %cst_89 = arith.constant dense<0.000000e+00> : vector<8x8xf32>
    %229 = tpu.matmul %228, %215, %cst_89 {dimension_numbers = #tpu.dot_dimension_numbers<[1], [0], [0], [1], [0, 0, 1, 1], [], []>} : vector<8x8xbf16>, vector<8x8xbf16>, vector<8x8xf32> -> vector<8x8xf32>
    %c0_90 = arith.constant 0 : index
    %c24_91 = arith.constant 24 : index
    %230 = vector.load %arg25[%c0_90, %c24_91] : memref<8x32xf32, #tpu.memory_space<vmem>>, vector<8x8xf32>
    tpu.vector_store %arg25[%c0_90, %c24_91], %229 {strides = array<i32>} : memref<8x32xf32, #tpu.memory_space<vmem>>, vector<8x8xf32>,
    %c0_92 = arith.constant 0 : index
    %c0_93 = arith.constant 0 : index
    %231 = vector.load %arg25[%c0_92, %c0_93] : memref<8x32xf32, #tpu.memory_space<vmem>>, vector<8x32xf32>
    %232 = arith.truncf %231 : vector<8x32xf32> to vector<8x32xbf16>
    %c0_94 = arith.constant 0 : index
    %c0_95 = arith.constant 0 : index
    %233 = vector.load %arg14[%c0_94, %c0_95] : memref<32x32xbf16, #tpu.memory_space<vmem>>, vector<32x32xbf16>
    %cst_96 = arith.constant dense<0.000000e+00> : vector<8x32xf32>
    %234 = tpu.matmul %232, %233, %cst_96 {dimension_numbers = #tpu.dot_dimension_numbers<[1], [0], [0], [1], [0, 0, 1, 1], [], []>} : vector<8x32xbf16>, vector<32x32xbf16>, vector<8x32xf32> -> vector<8x32xf32>
    %c0_97 = arith.constant 0 : index
    %c0_98 = arith.constant 0 : index
    %235 = vector.load %arg15[%c0_97, %c0_98] : memref<1x32xf32, #tpu.memory_space<vmem>>, vector<1x32xf32>
    %236 = vector.broadcast %235 : vector<1x32xf32> to vector<8x32xf32>
    %237 = arith.addf %234, %236 : vector<8x32xf32>
    %238 = arith.addf %237, %128 : vector<8x32xf32>
    %c0_99 = arith.constant 0 : index
    %c0_100 = arith.constant 0 : index
    %239 = vector.load %arg16[%c0_99, %c0_100] : memref<1x32xf32, #tpu.memory_space<vmem>>, vector<1x32xf32>
    %c0_101 = arith.constant 0 : index
    %c0_102 = arith.constant 0 : index
    %240 = vector.load %arg17[%c0_101, %c0_102] : memref<1x32xf32, #tpu.memory_space<vmem>>, vector<1x32xf32>
    %cst_103 = arith.constant dense<0.000000e+00> : vector<8xf32>
    %241 = vector.multi_reduction <add>, %238, %cst_103 [1] : vector<8x32xf32> to vector<8xf32>
    %242 = vector.shape_cast %241 : vector<8xf32> to vector<8x1xf32>
    %cst_104 = arith.constant 3.125000e-02 : f32
    %243 = vector.broadcast %cst_104 : f32 to vector<8x1xf32>
    %244 = arith.mulf %242, %243 : vector<8x1xf32>
    %245 = vector.broadcast %244 : vector<8x1xf32> to vector<8x32xf32>
    %246 = arith.subf %238, %245 : vector<8x32xf32>
    %247 = arith.mulf %246, %246 : vector<8x32xf32>
    %cst_105 = arith.constant dense<0.000000e+00> : vector<8xf32>
    %248 = vector.multi_reduction <add>, %247, %cst_105 [1] : vector<8x32xf32> to vector<8xf32>
    %249 = vector.shape_cast %248 : vector<8xf32> to vector<8x1xf32>
    %cst_106 = arith.constant 3.125000e-02 : f32
    %250 = vector.broadcast %cst_106 : f32 to vector<8x1xf32>
    %251 = arith.mulf %249, %250 : vector<8x1xf32>
    %cst_107 = arith.constant 9.99999974E-6 : f32
    %252 = vector.broadcast %cst_107 : f32 to vector<8x1xf32>
    %253 = arith.addf %251, %252 : vector<8x1xf32>
    %254 = math.rsqrt %253 : vector<8x1xf32>
    %255 = vector.broadcast %254 : vector<8x1xf32> to vector<8x32xf32>
    %256 = arith.mulf %246, %255 : vector<8x32xf32>
    %257 = vector.broadcast %239 : vector<1x32xf32> to vector<8x32xf32>
    %258 = arith.mulf %256, %257 : vector<8x32xf32>
    %259 = vector.broadcast %240 : vector<1x32xf32> to vector<8x32xf32>
    %260 = arith.addf %258, %259 : vector<8x32xf32>
    %261 = arith.truncf %260 : vector<8x32xf32> to vector<8x32xbf16>
    %c0_108 = arith.constant 0 : index
    %c0_109 = arith.constant 0 : index
    %262 = vector.load %arg18[%c0_108, %c0_109] : memref<32x128xbf16, #tpu.memory_space<vmem>>, vector<32x128xbf16>
    %cst_110 = arith.constant dense<0.000000e+00> : vector<8x128xf32>
    %263 = tpu.matmul %261, %262, %cst_110 {dimension_numbers = #tpu.dot_dimension_numbers<[1], [0], [0], [1], [0, 0, 1, 1], [], []>} : vector<8x32xbf16>, vector<32x128xbf16>, vector<8x128xf32> -> vector<8x128xf32>
    %c0_111 = arith.constant 0 : index
    %c0_112 = arith.constant 0 : index
    %264 = vector.load %arg19[%c0_111, %c0_112] : memref<1x128xf32, #tpu.memory_space<vmem>>, vector<1x128xf32>
    %265 = vector.broadcast %264 : vector<1x128xf32> to vector<8x128xf32>
    %266 = arith.addf %263, %265 : vector<8x128xf32>
    %cst_113 = arith.constant 0.000000e+00 : f32
    %267 = vector.broadcast %cst_113 : f32 to vector<8x128xf32>
    %268 = arith.maximumf %266, %267 : vector<8x128xf32>
    %269 = arith.truncf %268 : vector<8x128xf32> to vector<8x128xbf16>
    %c0_114 = arith.constant 0 : index
    %c0_115 = arith.constant 0 : index
    %270 = vector.load %arg20[%c0_114, %c0_115] : memref<128x32xbf16, #tpu.memory_space<vmem>>, vector<128x32xbf16>
    %cst_116 = arith.constant dense<0.000000e+00> : vector<8x32xf32>
    %271 = tpu.matmul %269, %270, %cst_116 {dimension_numbers = #tpu.dot_dimension_numbers<[1], [0], [0], [1], [0, 0, 1, 1], [], []>} : vector<8x128xbf16>, vector<128x32xbf16>, vector<8x32xf32> -> vector<8x32xf32>
    %c0_117 = arith.constant 0 : index
    %c0_118 = arith.constant 0 : index
    %272 = vector.load %arg21[%c0_117, %c0_118] : memref<1x32xf32, #tpu.memory_space<vmem>>, vector<1x32xf32>
    %273 = vector.broadcast %272 : vector<1x32xf32> to vector<8x32xf32>
    %274 = arith.addf %271, %273 : vector<8x32xf32>
    %275 = arith.addf %274, %260 : vector<8x32xf32>
    %c0_119 = arith.constant 0 : index
    %c0_120 = arith.constant 0 : index
    %276 = vector.load %arg22[%c0_119, %c0_120] : memref<1x32xf32, #tpu.memory_space<vmem>>, vector<1x32xf32>
    %c0_121 = arith.constant 0 : index
    %c0_122 = arith.constant 0 : index
    %277 = vector.load %arg23[%c0_121, %c0_122] : memref<1x32xf32, #tpu.memory_space<vmem>>, vector<1x32xf32>
    %cst_123 = arith.constant dense<0.000000e+00> : vector<8xf32>
    %278 = vector.multi_reduction <add>, %275, %cst_123 [1] : vector<8x32xf32> to vector<8xf32>
    %279 = vector.shape_cast %278 : vector<8xf32> to vector<8x1xf32>
    %cst_124 = arith.constant 3.125000e-02 : f32
    %280 = vector.broadcast %cst_124 : f32 to vector<8x1xf32>
    %281 = arith.mulf %279, %280 : vector<8x1xf32>
    %282 = vector.broadcast %281 : vector<8x1xf32> to vector<8x32xf32>
    %283 = arith.subf %275, %282 : vector<8x32xf32>
    %284 = arith.mulf %283, %283 : vector<8x32xf32>
    %cst_125 = arith.constant dense<0.000000e+00> : vector<8xf32>
    %285 = vector.multi_reduction <add>, %284, %cst_125 [1] : vector<8x32xf32> to vector<8xf32>
    %286 = vector.shape_cast %285 : vector<8xf32> to vector<8x1xf32>
    %cst_126 = arith.constant 3.125000e-02 : f32
    %287 = vector.broadcast %cst_126 : f32 to vector<8x1xf32>
    %288 = arith.mulf %286, %287 : vector<8x1xf32>
    %cst_127 = arith.constant 9.99999974E-6 : f32
    %289 = vector.broadcast %cst_127 : f32 to vector<8x1xf32>
    %290 = arith.addf %288, %289 : vector<8x1xf32>
    %291 = math.rsqrt %290 : vector<8x1xf32>
    %292 = vector.broadcast %291 : vector<8x1xf32> to vector<8x32xf32>
    %293 = arith.mulf %283, %292 : vector<8x32xf32>
    %294 = vector.broadcast %276 : vector<1x32xf32> to vector<8x32xf32>
    %295 = arith.mulf %293, %294 : vector<8x32xf32>
    %296 = vector.broadcast %277 : vector<1x32xf32> to vector<8x32xf32>
    %297 = arith.addf %295, %296 : vector<8x32xf32>
    %298 = arith.truncf %297 : vector<8x32xf32> to vector<8x32xbf16>
    %c0_128 = arith.constant 0 : index
    %c0_129 = arith.constant 0 : index
    %c0_130 = arith.constant 0 : index
    %299 = vector.load %arg24[%c0_128, %c0_129, %c0_130] : memref<1x8x32xbf16, #tpu.memory_space<vmem>>, vector<1x8x32xbf16>
    %300 = vector.shape_cast %299 : vector<1x8x32xbf16> to vector<8x32xbf16>
    %301 = vector.shape_cast %298 : vector<8x32xbf16> to vector<1x8x32xbf16>
    tpu.vector_store %arg24[%c0_128, %c0_129, %c0_130], %301 {strides = array<i32>} : memref<1x8x32xbf16, #tpu.memory_space<vmem>>, vector<1x8x32xbf16>,
    return
  }
  func.func @transform_0(%arg0: i32) -> (i32, i32, i32) {
    %c0_i32 = arith.constant 0 : i32
    %c0_i32_0 = arith.constant 0 : i32
    %c0_i32_1 = arith.constant 0 : i32
    return %arg0, %c0_i32, %c0_i32_0 : i32, i32, i32
  }
  func.func @transform_1(%arg0: i32) -> (i32, i32, i32) {
    %c0_i32 = arith.constant 0 : i32
    %c0_i32_0 = arith.constant 0 : i32
    %c0_i32_1 = arith.constant 0 : i32
    return %arg0, %c0_i32, %c0_i32_0 : i32, i32, i32
  }
  func.func @transform_2(%arg0: i32) -> (i32, i32, i32) {
    %c0_i32 = arith.constant 0 : i32
    %c0_i32_0 = arith.constant 0 : i32
    %c0_i32_1 = arith.constant 0 : i32
    return %arg0, %c0_i32, %c0_i32_0 : i32, i32, i32
  }
  func.func @transform_3(%arg0: i32) -> (i32, i32, i32) {
    %c0_i32 = arith.constant 0 : i32
    %c0_i32_0 = arith.constant 0 : i32
    %c0_i32_1 = arith.constant 0 : i32
    return %arg0, %c0_i32, %c0_i32_0 : i32, i32, i32
  }
  func.func @transform_4(%arg0: i32) -> (i32, i32, i32) {
    %c0_i32 = arith.constant 0 : i32
    %c0_i32_0 = arith.constant 0 : i32
    %c0_i32_1 = arith.constant 0 : i32
    return %arg0, %c0_i32, %c0_i32_0 : i32, i32, i32
  }
  func.func @transform_5(%arg0: i32) -> (i32, i32) {
    %c0_i32 = arith.constant 0 : i32
    %c0_i32_0 = arith.constant 0 : i32
    %c0_i32_1 = arith.constant 0 : i32
    return %c0_i32, %c0_i32_0 : i32, i32
  }
  func.func @transform_6(%arg0: i32) -> (i32, i32) {
    %c0_i32 = arith.constant 0 : i32
    %c0_i32_0 = arith.constant 0 : i32
    %c0_i32_1 = arith.constant 0 : i32
    return %c0_i32, %c0_i32_0 : i32, i32
  }
  func.func @transform_7(%arg0: i32) -> (i32, i32) {
    %c0_i32 = arith.constant 0 : i32
    %c0_i32_0 = arith.constant 0 : i32
    %c0_i32_1 = arith.constant 0 : i32
    return %c0_i32, %c0_i32_0 : i32, i32
  }
  func.func @transform_8(%arg0: i32) -> (i32, i32) {
    %c0_i32 = arith.constant 0 : i32
    %c0_i32_0 = arith.constant 0 : i32
    %c0_i32_1 = arith.constant 0 : i32
    return %c0_i32, %c0_i32_0 : i32, i32
  }
  func.func @transform_9(%arg0: i32) -> (i32, i32) {
    %c0_i32 = arith.constant 0 : i32
    %c0_i32_0 = arith.constant 0 : i32
    %c0_i32_1 = arith.constant 0 : i32
    return %c0_i32, %c0_i32_0 : i32, i32
  }
  func.func @transform_10(%arg0: i32) -> (i32, i32) {
    %c0_i32 = arith.constant 0 : i32
    %c0_i32_0 = arith.constant 0 : i32
    %c0_i32_1 = arith.constant 0 : i32
    return %c0_i32, %c0_i32_0 : i32, i32
  }
  func.func @transform_11(%arg0: i32) -> (i32, i32) {
    %c0_i32 = arith.constant 0 : i32
    %c0_i32_0 = arith.constant 0 : i32
    %c0_i32_1 = arith.constant 0 : i32
    return %c0_i32, %c0_i32_0 : i32, i32
  }
  func.func @transform_12(%arg0: i32) -> (i32, i32) {
    %c0_i32 = arith.constant 0 : i32
    %c0_i32_0 = arith.constant 0 : i32
    %c0_i32_1 = arith.constant 0 : i32
    return %c0_i32, %c0_i32_0 : i32, i32
  }
  func.func @transform_13(%arg0: i32) -> (i32, i32) {
    %c0_i32 = arith.constant 0 : i32
    %c0_i32_0 = arith.constant 0 : i32
    %c0_i32_1 = arith.constant 0 : i32
    return %c0_i32, %c0_i32_0 : i32, i32
  }
  func.func @transform_14(%arg0: i32) -> (i32, i32) {
    %c0_i32 = arith.constant 0 : i32
    %c0_i32_0 = arith.constant 0 : i32
    %c0_i32_1 = arith.constant 0 : i32
    return %c0_i32, %c0_i32_0 : i32, i32
  }
  func.func @transform_15(%arg0: i32) -> (i32, i32) {
    %c0_i32 = arith.constant 0 : i32
    %c0_i32_0 = arith.constant 0 : i32
    %c0_i32_1 = arith.constant 0 : i32
    return %c0_i32, %c0_i32_0 : i32, i32
  }
  func.func @transform_16(%arg0: i32) -> (i32, i32) {
    %c0_i32 = arith.constant 0 : i32
    %c0_i32_0 = arith.constant 0 : i32
    %c0_i32_1 = arith.constant 0 : i32
    return %c0_i32, %c0_i32_0 : i32, i32
  }
  func.func @transform_17(%arg0: i32) -> (i32, i32) {
    %c0_i32 = arith.constant 0 : i32
    %c0_i32_0 = arith.constant 0 : i32
    %c0_i32_1 = arith.constant 0 : i32
    return %c0_i32, %c0_i32_0 : i32, i32
  }
  func.func @transform_18(%arg0: i32) -> (i32, i32) {
    %c0_i32 = arith.constant 0 : i32
    %c0_i32_0 = arith.constant 0 : i32
    %c0_i32_1 = arith.constant 0 : i32
    return %c0_i32, %c0_i32_0 : i32, i32
  }
  func.func @transform_19(%arg0: i32) -> (i32, i32) {
    %c0_i32 = arith.constant 0 : i32
    %c0_i32_0 = arith.constant 0 : i32
    %c0_i32_1 = arith.constant 0 : i32
    return %c0_i32, %c0_i32_0 : i32, i32
  }
  func.func @transform_20(%arg0: i32) -> (i32, i32) {
    %c0_i32 = arith.constant 0 : i32
    %c0_i32_0 = arith.constant 0 : i32
    %c0_i32_1 = arith.constant 0 : i32
    return %c0_i32, %c0_i32_0 : i32, i32
  }
  func.func @transform_21(%arg0: i32) -> (i32, i32) {
    %c0_i32 = arith.constant 0 : i32
    %c0_i32_0 = arith.constant 0 : i32
    %c0_i32_1 = arith.constant 0 : i32
    return %c0_i32, %c0_i32_0 : i32, i32
  }
  func.func @transform_22(%arg0: i32) -> (i32, i32) {
    %c0_i32 = arith.constant 0 : i32
    %c0_i32_0 = arith.constant 0 : i32
    %c0_i32_1 = arith.constant 0 : i32
    return %c0_i32, %c0_i32_0 : i32, i32
  }
  func.func @transform_23(%arg0: i32) -> (i32, i32, i32) {
    %c0_i32 = arith.constant 0 : i32
    %c0_i32_0 = arith.constant 0 : i32
    %c0_i32_1 = arith.constant 0 : i32
    return %arg0, %c0_i32, %c0_i32_0 : i32, i32, i32
  }
}

module attributes {stable_mosaic.version = 11 : i64} {
  func.func @_decoder_block_kernel(%arg0: i32, %arg1: memref<1x8x32xbf16, #tpu.memory_space<vmem>>, %arg2: memref<1x8x32xbf16, #tpu.memory_space<vmem>>, %arg3: memref<1x8x32xbf16, #tpu.memory_space<vmem>>, %arg4: memref<1x8x8xbf16, #tpu.memory_space<vmem>>, %arg5: memref<1x8x8xbf16, #tpu.memory_space<vmem>>, %arg6: memref<32x96xbf16, #tpu.memory_space<vmem>>, %arg7: memref<32x32xbf16, #tpu.memory_space<vmem>>, %arg8: memref<1x32xf32, #tpu.memory_space<vmem>>, %arg9: memref<1x32xf32, #tpu.memory_space<vmem>>, %arg10: memref<1x32xf32, #tpu.memory_space<vmem>>, %arg11: memref<32x32xbf16, #tpu.memory_space<vmem>>, %arg12: memref<32x32xbf16, #tpu.memory_space<vmem>>, %arg13: memref<32x32xbf16, #tpu.memory_space<vmem>>, %arg14: memref<32x32xbf16, #tpu.memory_space<vmem>>, %arg15: memref<1x32xf32, #tpu.memory_space<vmem>>, %arg16: memref<1x32xf32, #tpu.memory_space<vmem>>, %arg17: memref<1x32xf32, #tpu.memory_space<vmem>>, %arg18: memref<32x128xbf16, #tpu.memory_space<vmem>>, %arg19: memref<1x128xf32, #tpu.memory_space<vmem>>, %arg20: memref<128x32xbf16, #tpu.memory_space<vmem>>, %arg21: memref<1x32xf32, #tpu.memory_space<vmem>>, %arg22: memref<1x32xf32, #tpu.memory_space<vmem>>, %arg23: memref<1x32xf32, #tpu.memory_space<vmem>>, %arg24: memref<1x8x32xbf16, #tpu.memory_space<vmem>>, %arg25: memref<8x32xf32, #tpu.memory_space<vmem>>) attributes {dimension_semantics = [#tpu.dimension_semantics<parallel>], iteration_bounds = array<i64: 2>, scalar_prefetch = 0 : i64, scratch_operands = 1 : i64, tpu.core_type = #tpu.core_type<tc>, window_params = [{transform_indices = @transform_0, window_bounds = array<i64: 1, 8, 32>}, {transform_indices = @transform_1, window_bounds = array<i64: 1, 8, 32>}, {transform_indices = @transform_2, window_bounds = array<i64: 1, 8, 32>}, {transform_indices = @transform_3, window_bounds = array<i64: 1, 8, 8>}, {transform_indices = @transform_4, window_bounds = array<i64: 1, 8, 8>}, {pipeline_mode = #tpu.pipeline_mode<synchronous>, transform_indices = @transform_5, window_bounds = array<i64: 32, 96>}, {pipeline_mode = #tpu.pipeline_mode<synchronous>, transform_indices = @transform_6, window_bounds = array<i64: 32, 32>}, {pipeline_mode = #tpu.pipeline_mode<synchronous>, transform_indices = @transform_7, window_bounds = array<i64: 1, 32>}, {pipeline_mode = #tpu.pipeline_mode<synchronous>, transform_indices = @transform_8, window_bounds = array<i64: 1, 32>}, {pipeline_mode = #tpu.pipeline_mode<synchronous>, transform_indices = @transform_9, window_bounds = array<i64: 1, 32>}, {pipeline_mode = #tpu.pipeline_mode<synchronous>, transform_indices = @transform_10, window_bounds = array<i64: 32, 32>}, {pipeline_mode = #tpu.pipeline_mode<synchronous>, transform_indices = @transform_11, window_bounds = array<i64: 32, 32>}, {pipeline_mode = #tpu.pipeline_mode<synchronous>, transform_indices = @transform_12, window_bounds = array<i64: 32, 32>}, {pipeline_mode = #tpu.pipeline_mode<synchronous>, transform_indices = @transform_13, window_bounds = array<i64: 32, 32>}, {pipeline_mode = #tpu.pipeline_mode<synchronous>, transform_indices = @transform_14, window_bounds = array<i64: 1, 32>}, {pipeline_mode = #tpu.pipeline_mode<synchronous>, transform_indices = @transform_15, window_bounds = array<i64: 1, 32>}, {pipeline_mode = #tpu.pipeline_mode<synchronous>, transform_indices = @transform_16, window_bounds = array<i64: 1, 32>}, {pipeline_mode = #tpu.pipeline_mode<synchronous>, transform_indices = @transform_17, window_bounds = array<i64: 32, 128>}, {pipeline_mode = #tpu.pipeline_mode<synchronous>, transform_indices = @transform_18, window_bounds = array<i64: 1, 128>}, {pipeline_mode = #tpu.pipeline_mode<synchronous>, transform_indices = @transform_19, window_bounds = array<i64: 128, 32>}, {pipeline_mode = #tpu.pipeline_mode<synchronous>, transform_indices = @transform_20, window_bounds = array<i64: 1, 32>}, {pipeline_mode = #tpu.pipeline_mode<synchronous>, transform_indices = @transform_21, window_bounds = array<i64: 1, 32>}, {pipeline_mode = #tpu.pipeline_mode<synchronous>, transform_indices = @transform_22, window_bounds = array<i64: 1, 32>}, {transform_indices = @transform_23, window_bounds = array<i64: 1, 8, 32>}]} {
    %c0 = arith.constant 0 : index
    %c0_0 = arith.constant 0 : index
    %c0_1 = arith.constant 0 : index
    %0 = vector.load %arg1[%c0, %c0_0, %c0_1] : memref<1x8x32xbf16, #tpu.memory_space<vmem>>, vector<1x8x32xbf16>
    %1 = vector.shape_cast %0 : vector<1x8x32xbf16> to vector<8x32xbf16>
    %2 = arith.extf %1 : vector<8x32xbf16> to vector<8x32xf32>
    %c0_2 = arith.constant 0 : index
    %c0_3 = arith.constant 0 : index
    %3 = vector.load %arg6[%c0_2, %c0_3] : memref<32x96xbf16, #tpu.memory_space<vmem>>, vector<32x96xbf16>
    %cst = arith.constant dense<0.000000e+00> : vector<8x96xf32>
    %4 = tpu.matmul %1, %3, %cst {dimension_numbers = #tpu.dot_dimension_numbers<[1], [0], [0], [1], [0, 0, 1, 1], [], []>} : vector<8x32xbf16>, vector<32x96xbf16>, vector<8x96xf32> -> vector<8x96xf32>
    %c0_4 = arith.constant 0 : index
    %c0_5 = arith.constant 0 : index
    %c0_6 = arith.constant 0 : index
    %5 = vector.load %arg4[%c0_4, %c0_5, %c0_6] : memref<1x8x8xbf16, #tpu.memory_space<vmem>>, vector<1x8x8xbf16>
    %6 = vector.shape_cast %5 : vector<1x8x8xbf16> to vector<8x8xbf16>
    %cst_7 = arith.constant 0.000000e+00 : bf16
    %7 = vector.broadcast %cst_7 : bf16 to vector<8x8xbf16>
    %8 = arith.cmpf oeq, %6, %7 : vector<8x8xbf16>
    %cst_8 = arith.constant -1.000000e+20 : f32
    %cst_9 = arith.constant 0.000000e+00 : f32
    %9 = vector.broadcast %cst_8 : f32 to vector<8x8xf32>
    %10 = vector.broadcast %cst_9 : f32 to vector<8x8xf32>
    %11 = arith.select %8, %9, %10 : vector<8x8xi1>, vector<8x8xf32>
    %12 = vector.extract_strided_slice %4 {offsets = [0, 0], sizes = [8, 32], strides = [1, 1]} : vector<8x96xf32> to vector<8x32xf32>
    %13 = vector.extract_strided_slice %4 {offsets = [0, 32], sizes = [8, 32], strides = [1, 1]} : vector<8x96xf32> to vector<8x32xf32>
    %14 = vector.extract_strided_slice %4 {offsets = [0, 64], sizes = [8, 32], strides = [1, 1]} : vector<8x96xf32> to vector<8x32xf32>
    %15 = vector.extract_strided_slice %12 {offsets = [0, 0], sizes = [8, 8], strides = [1, 1]} : vector<8x32xf32> to vector<8x8xf32>
    %16 = arith.truncf %15 : vector<8x8xf32> to vector<8x8xbf16>
    %17 = vector.extract_strided_slice %13 {offsets = [0, 0], sizes = [8, 8], strides = [1, 1]} : vector<8x32xf32> to vector<8x8xf32>
    %18 = arith.truncf %17 : vector<8x8xf32> to vector<8x8xbf16>
    %19 = vector.extract_strided_slice %14 {offsets = [0, 0], sizes = [8, 8], strides = [1, 1]} : vector<8x32xf32> to vector<8x8xf32>
    %20 = arith.truncf %19 : vector<8x8xf32> to vector<8x8xbf16>
    %cst_10 = arith.constant dense<0.000000e+00> : vector<8x8xf32>
    %21 = tpu.matmul %16, %18, %cst_10 {dimension_numbers = #tpu.dot_dimension_numbers<[1], [1], [0], [0], [0, 0, 1, 0], [], []>} : vector<8x8xbf16>, vector<8x8xbf16>, vector<8x8xf32> -> vector<8x8xf32>
    %22 = arith.addf %21, %11 : vector<8x8xf32>
    %cst_11 = arith.constant dense<0xFF800000> : vector<8xf32>
    %23 = vector.multi_reduction <maximumf>, %22, %cst_11 [1] : vector<8x8xf32> to vector<8xf32>
    %24 = vector.shape_cast %23 : vector<8xf32> to vector<8x1xf32>
    %25 = vector.broadcast %24 : vector<8x1xf32> to vector<8x8xf32>
    %26 = arith.subf %22, %25 : vector<8x8xf32>
    %27 = math.exp %26 : vector<8x8xf32>
    %cst_12 = arith.constant dense<0.000000e+00> : vector<8xf32>
    %28 = vector.multi_reduction <add>, %27, %cst_12 [1] : vector<8x8xf32> to vector<8xf32>
    %29 = vector.shape_cast %28 : vector<8xf32> to vector<8x1xf32>
    %30 = tpu.reciprocal %29 {approx = true} : vector<8x1xf32> -> vector<8x1xf32>
    %31 = vector.broadcast %30 : vector<8x1xf32> to vector<8x8xf32>
    %32 = arith.mulf %27, %31 : vector<8x8xf32>
    %33 = arith.truncf %32 : vector<8x8xf32> to vector<8x8xbf16>
    %cst_13 = arith.constant dense<0.000000e+00> : vector<8x8xf32>
    %34 = tpu.matmul %33, %20, %cst_13 {dimension_numbers = #tpu.dot_dimension_numbers<[1], [0], [0], [1], [0, 0, 1, 1], [], []>} : vector<8x8xbf16>, vector<8x8xbf16>, vector<8x8xf32> -> vector<8x8xf32>
    %c0_14 = arith.constant 0 : index
    %c0_15 = arith.constant 0 : index
    %35 = vector.load %arg25[%c0_14, %c0_15] : memref<8x32xf32, #tpu.memory_space<vmem>>, vector<8x8xf32>
    tpu.vector_store %arg25[%c0_14, %c0_15], %34 {strides = array<i32>} : memref<8x32xf32, #tpu.memory_space<vmem>>, vector<8x8xf32>,
    %36 = vector.extract_strided_slice %12 {offsets = [0, 8], sizes = [8, 8], strides = [1, 1]} : vector<8x32xf32> to vector<8x8xf32>
    %37 = arith.truncf %36 : vector<8x8xf32> to vector<8x8xbf16>
    %38 = vector.extract_strided_slice %13 {offsets = [0, 8], sizes = [8, 8], strides = [1, 1]} : vector<8x32xf32> to vector<8x8xf32>
    %39 = arith.truncf %38 : vector<8x8xf32> to vector<8x8xbf16>
    %40 = vector.extract_strided_slice %14 {offsets = [0, 8], sizes = [8, 8], strides = [1, 1]} : vector<8x32xf32> to vector<8x8xf32>
    %41 = arith.truncf %40 : vector<8x8xf32> to vector<8x8xbf16>
    %cst_16 = arith.constant dense<0.000000e+00> : vector<8x8xf32>
    %42 = tpu.matmul %37, %39, %cst_16 {dimension_numbers = #tpu.dot_dimension_numbers<[1], [1], [0], [0], [0, 0, 1, 0], [], []>} : vector<8x8xbf16>, vector<8x8xbf16>, vector<8x8xf32> -> vector<8x8xf32>
    %43 = arith.addf %42, %11 : vector<8x8xf32>
    %cst_17 = arith.constant dense<0xFF800000> : vector<8xf32>
    %44 = vector.multi_reduction <maximumf>, %43, %cst_17 [1] : vector<8x8xf32> to vector<8xf32>
    %45 = vector.shape_cast %44 : vector<8xf32> to vector<8x1xf32>
    %46 = vector.broadcast %45 : vector<8x1xf32> to vector<8x8xf32>
    %47 = arith.subf %43, %46 : vector<8x8xf32>
    %48 = math.exp %47 : vector<8x8xf32>
    %cst_18 = arith.constant dense<0.000000e+00> : vector<8xf32>
    %49 = vector.multi_reduction <add>, %48, %cst_18 [1] : vector<8x8xf32> to vector<8xf32>
    %50 = vector.shape_cast %49 : vector<8xf32> to vector<8x1xf32>
    %51 = tpu.reciprocal %50 {approx = true} : vector<8x1xf32> -> vector<8x1xf32>
    %52 = vector.broadcast %51 : vector<8x1xf32> to vector<8x8xf32>
    %53 = arith.mulf %48, %52 : vector<8x8xf32>
    %54 = arith.truncf %53 : vector<8x8xf32> to vector<8x8xbf16>
    %cst_19 = arith.constant dense<0.000000e+00> : vector<8x8xf32>
    %55 = tpu.matmul %54, %41, %cst_19 {dimension_numbers = #tpu.dot_dimension_numbers<[1], [0], [0], [1], [0, 0, 1, 1], [], []>} : vector<8x8xbf16>, vector<8x8xbf16>, vector<8x8xf32> -> vector<8x8xf32>
    %c0_20 = arith.constant 0 : index
    %c8 = arith.constant 8 : index
    %56 = vector.load %arg25[%c0_20, %c8] : memref<8x32xf32, #tpu.memory_space<vmem>>, vector<8x8xf32>
    tpu.vector_store %arg25[%c0_20, %c8], %55 {strides = array<i32>} : memref<8x32xf32, #tpu.memory_space<vmem>>, vector<8x8xf32>,
    %57 = vector.extract_strided_slice %12 {offsets = [0, 16], sizes = [8, 8], strides = [1, 1]} : vector<8x32xf32> to vector<8x8xf32>
    %58 = arith.truncf %57 : vector<8x8xf32> to vector<8x8xbf16>
    %59 = vector.extract_strided_slice %13 {offsets = [0, 16], sizes = [8, 8], strides = [1, 1]} : vector<8x32xf32> to vector<8x8xf32>
    %60 = arith.truncf %59 : vector<8x8xf32> to vector<8x8xbf16>
    %61 = vector.extract_strided_slice %14 {offsets = [0, 16], sizes = [8, 8], strides = [1, 1]} : vector<8x32xf32> to vector<8x8xf32>
    %62 = arith.truncf %61 : vector<8x8xf32> to vector<8x8xbf16>
    %cst_21 = arith.constant dense<0.000000e+00> : vector<8x8xf32>
    %63 = tpu.matmul %58, %60, %cst_21 {dimension_numbers = #tpu.dot_dimension_numbers<[1], [1], [0], [0], [0, 0, 1, 0], [], []>} : vector<8x8xbf16>, vector<8x8xbf16>, vector<8x8xf32> -> vector<8x8xf32>
    %64 = arith.addf %63, %11 : vector<8x8xf32>
    %cst_22 = arith.constant dense<0xFF800000> : vector<8xf32>
    %65 = vector.multi_reduction <maximumf>, %64, %cst_22 [1] : vector<8x8xf32> to vector<8xf32>
    %66 = vector.shape_cast %65 : vector<8xf32> to vector<8x1xf32>
    %67 = vector.broadcast %66 : vector<8x1xf32> to vector<8x8xf32>
    %68 = arith.subf %64, %67 : vector<8x8xf32>
    %69 = math.exp %68 : vector<8x8xf32>
    %cst_23 = arith.constant dense<0.000000e+00> : vector<8xf32>
    %70 = vector.multi_reduction <add>, %69, %cst_23 [1] : vector<8x8xf32> to vector<8xf32>
    %71 = vector.shape_cast %70 : vector<8xf32> to vector<8x1xf32>
    %72 = tpu.reciprocal %71 {approx = true} : vector<8x1xf32> -> vector<8x1xf32>
    %73 = vector.broadcast %72 : vector<8x1xf32> to vector<8x8xf32>
    %74 = arith.mulf %69, %73 : vector<8x8xf32>
    %75 = arith.truncf %74 : vector<8x8xf32> to vector<8x8xbf16>
    %cst_24 = arith.constant dense<0.000000e+00> : vector<8x8xf32>
    %76 = tpu.matmul %75, %62, %cst_24 {dimension_numbers = #tpu.dot_dimension_numbers<[1], [0], [0], [1], [0, 0, 1, 1], [], []>} : vector<8x8xbf16>, vector<8x8xbf16>, vector<8x8xf32> -> vector<8x8xf32>
    %c0_25 = arith.constant 0 : index
    %c16 = arith.constant 16 : index
    %77 = vector.load %arg25[%c0_25, %c16] : memref<8x32xf32, #tpu.memory_space<vmem>>, vector<8x8xf32>
    tpu.vector_store %arg25[%c0_25, %c16], %76 {strides = array<i32>} : memref<8x32xf32, #tpu.memory_space<vmem>>, vector<8x8xf32>,
    %78 = vector.extract_strided_slice %12 {offsets = [0, 24], sizes = [8, 8], strides = [1, 1]} : vector<8x32xf32> to vector<8x8xf32>
    %79 = arith.truncf %78 : vector<8x8xf32> to vector<8x8xbf16>
    %80 = vector.extract_strided_slice %13 {offsets = [0, 24], sizes = [8, 8], strides = [1, 1]} : vector<8x32xf32> to vector<8x8xf32>
    %81 = arith.truncf %80 : vector<8x8xf32> to vector<8x8xbf16>
    %82 = vector.extract_strided_slice %14 {offsets = [0, 24], sizes = [8, 8], strides = [1, 1]} : vector<8x32xf32> to vector<8x8xf32>
    %83 = arith.truncf %82 : vector<8x8xf32> to vector<8x8xbf16>
    %cst_26 = arith.constant dense<0.000000e+00> : vector<8x8xf32>
    %84 = tpu.matmul %79, %81, %cst_26 {dimension_numbers = #tpu.dot_dimension_numbers<[1], [1], [0], [0], [0, 0, 1, 0], [], []>} : vector<8x8xbf16>, vector<8x8xbf16>, vector<8x8xf32> -> vector<8x8xf32>
    %85 = arith.addf %84, %11 : vector<8x8xf32>
    %cst_27 = arith.constant dense<0xFF800000> : vector<8xf32>
    %86 = vector.multi_reduction <maximumf>, %85, %cst_27 [1] : vector<8x8xf32> to vector<8xf32>
    %87 = vector.shape_cast %86 : vector<8xf32> to vector<8x1xf32>
    %88 = vector.broadcast %87 : vector<8x1xf32> to vector<8x8xf32>
    %89 = arith.subf %85, %88 : vector<8x8xf32>
    %90 = math.exp %89 : vector<8x8xf32>
    %cst_28 = arith.constant dense<0.000000e+00> : vector<8xf32>
    %91 = vector.multi_reduction <add>, %90, %cst_28 [1] : vector<8x8xf32> to vector<8xf32>
    %92 = vector.shape_cast %91 : vector<8xf32> to vector<8x1xf32>
    %93 = tpu.reciprocal %92 {approx = true} : vector<8x1xf32> -> vector<8x1xf32>
    %94 = vector.broadcast %93 : vector<8x1xf32> to vector<8x8xf32>
    %95 = arith.mulf %90, %94 : vector<8x8xf32>
    %96 = arith.truncf %95 : vector<8x8xf32> to vector<8x8xbf16>
    %cst_29 = arith.constant dense<0.000000e+00> : vector<8x8xf32>
    %97 = tpu.matmul %96, %83, %cst_29 {dimension_numbers = #tpu.dot_dimension_numbers<[1], [0], [0], [1], [0, 0, 1, 1], [], []>} : vector<8x8xbf16>, vector<8x8xbf16>, vector<8x8xf32> -> vector<8x8xf32>
    %c0_30 = arith.constant 0 : index
    %c24 = arith.constant 24 : index
    %98 = vector.load %arg25[%c0_30, %c24] : memref<8x32xf32, #tpu.memory_space<vmem>>, vector<8x8xf32>
    tpu.vector_store %arg25[%c0_30, %c24], %97 {strides = array<i32>} : memref<8x32xf32, #tpu.memory_space<vmem>>, vector<8x8xf32>,
    %c0_31 = arith.constant 0 : index
    %c0_32 = arith.constant 0 : index
    %99 = vector.load %arg25[%c0_31, %c0_32] : memref<8x32xf32, #tpu.memory_space<vmem>>, vector<8x32xf32>
    %100 = arith.truncf %99 : vector<8x32xf32> to vector<8x32xbf16>
    %c0_33 = arith.constant 0 : index
    %c0_34 = arith.constant 0 : index
    %101 = vector.load %arg7[%c0_33, %c0_34] : memref<32x32xbf16, #tpu.memory_space<vmem>>, vector<32x32xbf16>
    %cst_35 = arith.constant dense<0.000000e+00> : vector<8x32xf32>
    %102 = tpu.matmul %100, %101, %cst_35 {dimension_numbers = #tpu.dot_dimension_numbers<[1], [0], [0], [1], [0, 0, 1, 1], [], []>} : vector<8x32xbf16>, vector<32x32xbf16>, vector<8x32xf32> -> vector<8x32xf32>
    %c0_36 = arith.constant 0 : index
    %c0_37 = arith.constant 0 : index
    %103 = vector.load %arg8[%c0_36, %c0_37] : memref<1x32xf32, #tpu.memory_space<vmem>>, vector<1x32xf32>
    %104 = vector.broadcast %103 : vector<1x32xf32> to vector<8x32xf32>
    %105 = arith.addf %102, %104 : vector<8x32xf32>
    %106 = arith.addf %105, %2 : vector<8x32xf32>
    %c0_38 = arith.constant 0 : index
    %c0_39 = arith.constant 0 : index
    %107 = vector.load %arg9[%c0_38, %c0_39] : memref<1x32xf32, #tpu.memory_space<vmem>>, vector<1x32xf32>
    %c0_40 = arith.constant 0 : index
    %c0_41 = arith.constant 0 : index
    %108 = vector.load %arg10[%c0_40, %c0_41] : memref<1x32xf32, #tpu.memory_space<vmem>>, vector<1x32xf32>
    %cst_42 = arith.constant dense<0.000000e+00> : vector<8xf32>
    %109 = vector.multi_reduction <add>, %106, %cst_42 [1] : vector<8x32xf32> to vector<8xf32>
    %110 = vector.shape_cast %109 : vector<8xf32> to vector<8x1xf32>
    %cst_43 = arith.constant 3.125000e-02 : f32
    %111 = vector.broadcast %cst_43 : f32 to vector<8x1xf32>
    %112 = arith.mulf %110, %111 : vector<8x1xf32>
    %113 = vector.broadcast %112 : vector<8x1xf32> to vector<8x32xf32>
    %114 = arith.subf %106, %113 : vector<8x32xf32>
    %115 = arith.mulf %114, %114 : vector<8x32xf32>
    %cst_44 = arith.constant dense<0.000000e+00> : vector<8xf32>
    %116 = vector.multi_reduction <add>, %115, %cst_44 [1] : vector<8x32xf32> to vector<8xf32>
    %117 = vector.shape_cast %116 : vector<8xf32> to vector<8x1xf32>
    %cst_45 = arith.constant 3.125000e-02 : f32
    %118 = vector.broadcast %cst_45 : f32 to vector<8x1xf32>
    %119 = arith.mulf %117, %118 : vector<8x1xf32>
    %cst_46 = arith.constant 9.99999974E-6 : f32
    %120 = vector.broadcast %cst_46 : f32 to vector<8x1xf32>
    %121 = arith.addf %119, %120 : vector<8x1xf32>
    %122 = math.rsqrt %121 : vector<8x1xf32>
    %123 = vector.broadcast %122 : vector<8x1xf32> to vector<8x32xf32>
    %124 = arith.mulf %114, %123 : vector<8x32xf32>
    %125 = vector.broadcast %107 : vector<1x32xf32> to vector<8x32xf32>
    %126 = arith.mulf %124, %125 : vector<8x32xf32>
    %127 = vector.broadcast %108 : vector<1x32xf32> to vector<8x32xf32>
    %128 = arith.addf %126, %127 : vector<8x32xf32>
    %129 = arith.truncf %128 : vector<8x32xf32> to vector<8x32xbf16>
    %c0_47 = arith.constant 0 : index
    %c0_48 = arith.constant 0 : index
    %130 = vector.load %arg11[%c0_47, %c0_48] : memref<32x32xbf16, #tpu.memory_space<vmem>>, vector<32x32xbf16>
    %cst_49 = arith.constant dense<0.000000e+00> : vector<8x32xf32>
    %131 = tpu.matmul %129, %130, %cst_49 {dimension_numbers = #tpu.dot_dimension_numbers<[1], [0], [0], [1], [0, 0, 1, 1], [], []>} : vector<8x32xbf16>, vector<32x32xbf16>, vector<8x32xf32> -> vector<8x32xf32>
    %c0_50 = arith.constant 0 : index
    %c0_51 = arith.constant 0 : index
    %c0_52 = arith.constant 0 : index
    %132 = vector.load %arg3[%c0_50, %c0_51, %c0_52] : memref<1x8x32xbf16, #tpu.memory_space<vmem>>, vector<1x8x32xbf16>
    %133 = vector.shape_cast %132 : vector<1x8x32xbf16> to vector<8x32xbf16>
    %c0_53 = arith.constant 0 : index
    %c0_54 = arith.constant 0 : index
    %134 = vector.load %arg12[%c0_53, %c0_54] : memref<32x32xbf16, #tpu.memory_space<vmem>>, vector<32x32xbf16>
    %cst_55 = arith.constant dense<0.000000e+00> : vector<8x32xf32>
    %135 = tpu.matmul %133, %134, %cst_55 {dimension_numbers = #tpu.dot_dimension_numbers<[1], [0], [0], [1], [0, 0, 1, 1], [], []>} : vector<8x32xbf16>, vector<32x32xbf16>, vector<8x32xf32> -> vector<8x32xf32>
    %c0_56 = arith.constant 0 : index
    %c0_57 = arith.constant 0 : index
    %c0_58 = arith.constant 0 : index
    %136 = vector.load %arg2[%c0_56, %c0_57, %c0_58] : memref<1x8x32xbf16, #tpu.memory_space<vmem>>, vector<1x8x32xbf16>
    %137 = vector.shape_cast %136 : vector<1x8x32xbf16> to vector<8x32xbf16>
    %c0_59 = arith.constant 0 : index
    %c0_60 = arith.constant 0 : index
    %138 = vector.load %arg13[%c0_59, %c0_60] : memref<32x32xbf16, #tpu.memory_space<vmem>>, vector<32x32xbf16>
    %cst_61 = arith.constant dense<0.000000e+00> : vector<8x32xf32>
    %139 = tpu.matmul %137, %138, %cst_61 {dimension_numbers = #tpu.dot_dimension_numbers<[1], [0], [0], [1], [0, 0, 1, 1], [], []>} : vector<8x32xbf16>, vector<32x32xbf16>, vector<8x32xf32> -> vector<8x32xf32>
    %c0_62 = arith.constant 0 : index
    %c0_63 = arith.constant 0 : index
    %c0_64 = arith.constant 0 : index
    %140 = vector.load %arg5[%c0_62, %c0_63, %c0_64] : memref<1x8x8xbf16, #tpu.memory_space<vmem>>, vector<1x8x8xbf16>
    %141 = vector.shape_cast %140 : vector<1x8x8xbf16> to vector<8x8xbf16>
    %cst_65 = arith.constant 0.000000e+00 : bf16
    %142 = vector.broadcast %cst_65 : bf16 to vector<8x8xbf16>
    %143 = arith.cmpf oeq, %141, %142 : vector<8x8xbf16>
    %cst_66 = arith.constant -1.000000e+20 : f32
    %cst_67 = arith.constant 0.000000e+00 : f32
    %144 = vector.broadcast %cst_66 : f32 to vector<8x8xf32>
    %145 = vector.broadcast %cst_67 : f32 to vector<8x8xf32>
    %146 = arith.select %143, %144, %145 : vector<8x8xi1>, vector<8x8xf32>
    %147 = vector.extract_strided_slice %131 {offsets = [0, 0], sizes = [8, 8], strides = [1, 1]} : vector<8x32xf32> to vector<8x8xf32>
    %148 = arith.truncf %147 : vector<8x8xf32> to vector<8x8xbf16>
    %149 = vector.extract_strided_slice %135 {offsets = [0, 0], sizes = [8, 8], strides = [1, 1]} : vector<8x32xf32> to vector<8x8xf32>
    %150 = arith.truncf %149 : vector<8x8xf32> to vector<8x8xbf16>
    %151 = vector.extract_strided_slice %139 {offsets = [0, 0], sizes = [8, 8], strides = [1, 1]} : vector<8x32xf32> to vector<8x8xf32>
    %152 = arith.truncf %151 : vector<8x8xf32> to vector<8x8xbf16>
    %cst_68 = arith.constant dense<0.000000e+00> : vector<8x8xf32>
    %153 = tpu.matmul %148, %150, %cst_68 {dimension_numbers = #tpu.dot_dimension_numbers<[1], [1], [0], [0], [0, 0, 1, 0], [], []>} : vector<8x8xbf16>, vector<8x8xbf16>, vector<8x8xf32> -> vector<8x8xf32>
    %154 = arith.addf %153, %146 : vector<8x8xf32>
    %cst_69 = arith.constant dense<0xFF800000> : vector<8xf32>
    %155 = vector.multi_reduction <maximumf>, %154, %cst_69 [1] : vector<8x8xf32> to vector<8xf32>
    %156 = vector.shape_cast %155 : vector<8xf32> to vector<8x1xf32>
    %157 = vector.broadcast %156 : vector<8x1xf32> to vector<8x8xf32>
    %158 = arith.subf %154, %157 : vector<8x8xf32>
    %159 = math.exp %158 : vector<8x8xf32>
    %cst_70 = arith.constant dense<0.000000e+00> : vector<8xf32>
    %160 = vector.multi_reduction <add>, %159, %cst_70 [1] : vector<8x8xf32> to vector<8xf32>
    %161 = vector.shape_cast %160 : vector<8xf32> to vector<8x1xf32>
    %162 = tpu.reciprocal %161 {approx = true} : vector<8x1xf32> -> vector<8x1xf32>
    %163 = vector.broadcast %162 : vector<8x1xf32> to vector<8x8xf32>
    %164 = arith.mulf %159, %163 : vector<8x8xf32>
    %165 = arith.truncf %164 : vector<8x8xf32> to vector<8x8xbf16>
    %cst_71 = arith.constant dense<0.000000e+00> : vector<8x8xf32>
    %166 = tpu.matmul %165, %152, %cst_71 {dimension_numbers = #tpu.dot_dimension_numbers<[1], [0], [0], [1], [0, 0, 1, 1], [], []>} : vector<8x8xbf16>, vector<8x8xbf16>, vector<8x8xf32> -> vector<8x8xf32>
    %c0_72 = arith.constant 0 : index
    %c0_73 = arith.constant 0 : index
    %167 = vector.load %arg25[%c0_72, %c0_73] : memref<8x32xf32, #tpu.memory_space<vmem>>, vector<8x8xf32>
    tpu.vector_store %arg25[%c0_72, %c0_73], %166 {strides = array<i32>} : memref<8x32xf32, #tpu.memory_space<vmem>>, vector<8x8xf32>,
    %168 = vector.extract_strided_slice %131 {offsets = [0, 8], sizes = [8, 8], strides = [1, 1]} : vector<8x32xf32> to vector<8x8xf32>
    %169 = arith.truncf %168 : vector<8x8xf32> to vector<8x8xbf16>
    %170 = vector.extract_strided_slice %135 {offsets = [0, 8], sizes = [8, 8], strides = [1, 1]} : vector<8x32xf32> to vector<8x8xf32>
    %171 = arith.truncf %170 : vector<8x8xf32> to vector<8x8xbf16>
    %172 = vector.extract_strided_slice %139 {offsets = [0, 8], sizes = [8, 8], strides = [1, 1]} : vector<8x32xf32> to vector<8x8xf32>
    %173 = arith.truncf %172 : vector<8x8xf32> to vector<8x8xbf16>
    %cst_74 = arith.constant dense<0.000000e+00> : vector<8x8xf32>
    %174 = tpu.matmul %169, %171, %cst_74 {dimension_numbers = #tpu.dot_dimension_numbers<[1], [1], [0], [0], [0, 0, 1, 0], [], []>} : vector<8x8xbf16>, vector<8x8xbf16>, vector<8x8xf32> -> vector<8x8xf32>
    %175 = arith.addf %174, %146 : vector<8x8xf32>
    %cst_75 = arith.constant dense<0xFF800000> : vector<8xf32>
    %176 = vector.multi_reduction <maximumf>, %175, %cst_75 [1] : vector<8x8xf32> to vector<8xf32>
    %177 = vector.shape_cast %176 : vector<8xf32> to vector<8x1xf32>
    %178 = vector.broadcast %177 : vector<8x1xf32> to vector<8x8xf32>
    %179 = arith.subf %175, %178 : vector<8x8xf32>
    %180 = math.exp %179 : vector<8x8xf32>
    %cst_76 = arith.constant dense<0.000000e+00> : vector<8xf32>
    %181 = vector.multi_reduction <add>, %180, %cst_76 [1] : vector<8x8xf32> to vector<8xf32>
    %182 = vector.shape_cast %181 : vector<8xf32> to vector<8x1xf32>
    %183 = tpu.reciprocal %182 {approx = true} : vector<8x1xf32> -> vector<8x1xf32>
    %184 = vector.broadcast %183 : vector<8x1xf32> to vector<8x8xf32>
    %185 = arith.mulf %180, %184 : vector<8x8xf32>
    %186 = arith.truncf %185 : vector<8x8xf32> to vector<8x8xbf16>
    %cst_77 = arith.constant dense<0.000000e+00> : vector<8x8xf32>
    %187 = tpu.matmul %186, %173, %cst_77 {dimension_numbers = #tpu.dot_dimension_numbers<[1], [0], [0], [1], [0, 0, 1, 1], [], []>} : vector<8x8xbf16>, vector<8x8xbf16>, vector<8x8xf32> -> vector<8x8xf32>
    %c0_78 = arith.constant 0 : index
    %c8_79 = arith.constant 8 : index
    %188 = vector.load %arg25[%c0_78, %c8_79] : memref<8x32xf32, #tpu.memory_space<vmem>>, vector<8x8xf32>
    tpu.vector_store %arg25[%c0_78, %c8_79], %187 {strides = array<i32>} : memref<8x32xf32, #tpu.memory_space<vmem>>, vector<8x8xf32>,
    %189 = vector.extract_strided_slice %131 {offsets = [0, 16], sizes = [8, 8], strides = [1, 1]} : vector<8x32xf32> to vector<8x8xf32>
    %190 = arith.truncf %189 : vector<8x8xf32> to vector<8x8xbf16>
    %191 = vector.extract_strided_slice %135 {offsets = [0, 16], sizes = [8, 8], strides = [1, 1]} : vector<8x32xf32> to vector<8x8xf32>
    %192 = arith.truncf %191 : vector<8x8xf32> to vector<8x8xbf16>
    %193 = vector.extract_strided_slice %139 {offsets = [0, 16], sizes = [8, 8], strides = [1, 1]} : vector<8x32xf32> to vector<8x8xf32>
    %194 = arith.truncf %193 : vector<8x8xf32> to vector<8x8xbf16>
    %cst_80 = arith.constant dense<0.000000e+00> : vector<8x8xf32>
    %195 = tpu.matmul %190, %192, %cst_80 {dimension_numbers = #tpu.dot_dimension_numbers<[1], [1], [0], [0], [0, 0, 1, 0], [], []>} : vector<8x8xbf16>, vector<8x8xbf16>, vector<8x8xf32> -> vector<8x8xf32>
    %196 = arith.addf %195, %146 : vector<8x8xf32>
    %cst_81 = arith.constant dense<0xFF800000> : vector<8xf32>
    %197 = vector.multi_reduction <maximumf>, %196, %cst_81 [1] : vector<8x8xf32> to vector<8xf32>
    %198 = vector.shape_cast %197 : vector<8xf32> to vector<8x1xf32>
    %199 = vector.broadcast %198 : vector<8x1xf32> to vector<8x8xf32>
    %200 = arith.subf %196, %199 : vector<8x8xf32>
    %201 = math.exp %200 : vector<8x8xf32>
    %cst_82 = arith.constant dense<0.000000e+00> : vector<8xf32>
    %202 = vector.multi_reduction <add>, %201, %cst_82 [1] : vector<8x8xf32> to vector<8xf32>
    %203 = vector.shape_cast %202 : vector<8xf32> to vector<8x1xf32>
    %204 = tpu.reciprocal %203 {approx = true} : vector<8x1xf32> -> vector<8x1xf32>
    %205 = vector.broadcast %204 : vector<8x1xf32> to vector<8x8xf32>
    %206 = arith.mulf %201, %205 : vector<8x8xf32>
    %207 = arith.truncf %206 : vector<8x8xf32> to vector<8x8xbf16>
    %cst_83 = arith.constant dense<0.000000e+00> : vector<8x8xf32>
    %208 = tpu.matmul %207, %194, %cst_83 {dimension_numbers = #tpu.dot_dimension_numbers<[1], [0], [0], [1], [0, 0, 1, 1], [], []>} : vector<8x8xbf16>, vector<8x8xbf16>, vector<8x8xf32> -> vector<8x8xf32>
    %c0_84 = arith.constant 0 : index
    %c16_85 = arith.constant 16 : index
    %209 = vector.load %arg25[%c0_84, %c16_85] : memref<8x32xf32, #tpu.memory_space<vmem>>, vector<8x8xf32>
    tpu.vector_store %arg25[%c0_84, %c16_85], %208 {strides = array<i32>} : memref<8x32xf32, #tpu.memory_space<vmem>>, vector<8x8xf32>,
    %210 = vector.extract_strided_slice %131 {offsets = [0, 24], sizes = [8, 8], strides = [1, 1]} : vector<8x32xf32> to vector<8x8xf32>
    %211 = arith.truncf %210 : vector<8x8xf32> to vector<8x8xbf16>
    %212 = vector.extract_strided_slice %135 {offsets = [0, 24], sizes = [8, 8], strides = [1, 1]} : vector<8x32xf32> to vector<8x8xf32>
    %213 = arith.truncf %212 : vector<8x8xf32> to vector<8x8xbf16>
    %214 = vector.extract_strided_slice %139 {offsets = [0, 24], sizes = [8, 8], strides = [1, 1]} : vector<8x32xf32> to vector<8x8xf32>
    %215 = arith.truncf %214 : vector<8x8xf32> to vector<8x8xbf16>
    %cst_86 = arith.constant dense<0.000000e+00> : vector<8x8xf32>
    %216 = tpu.matmul %211, %213, %cst_86 {dimension_numbers = #tpu.dot_dimension_numbers<[1], [1], [0], [0], [0, 0, 1, 0], [], []>} : vector<8x8xbf16>, vector<8x8xbf16>, vector<8x8xf32> -> vector<8x8xf32>
    %217 = arith.addf %216, %146 : vector<8x8xf32>
    %cst_87 = arith.constant dense<0xFF800000> : vector<8xf32>
    %218 = vector.multi_reduction <maximumf>, %217, %cst_87 [1] : vector<8x8xf32> to vector<8xf32>
    %219 = vector.shape_cast %218 : vector<8xf32> to vector<8x1xf32>
    %220 = vector.broadcast %219 : vector<8x1xf32> to vector<8x8xf32>
    %221 = arith.subf %217, %220 : vector<8x8xf32>
    %222 = math.exp %221 : vector<8x8xf32>
    %cst_88 = arith.constant dense<0.000000e+00> : vector<8xf32>
    %223 = vector.multi_reduction <add>, %222, %cst_88 [1] : vector<8x8xf32> to vector<8xf32>
    %224 = vector.shape_cast %223 : vector<8xf32> to vector<8x1xf32>
    %225 = tpu.reciprocal %224 {approx = true} : vector<8x1xf32> -> vector<8x1xf32>
    %226 = vector.broadcast %225 : vector<8x1xf32> to vector<8x8xf32>
    %227 = arith.mulf %222, %226 : vector<8x8xf32>
    %228 = arith.truncf %227 : vector<8x8xf32> to vector<8x8xbf16>
    %cst_89 = arith.constant dense<0.000000e+00> : vector<8x8xf32>
    %229 = tpu.matmul %228, %215, %cst_89 {dimension_numbers = #tpu.dot_dimension_numbers<[1], [0], [0], [1], [0, 0, 1, 1], [], []>} : vector<8x8xbf16>, vector<8x8xbf16>, vector<8x8xf32> -> vector<8x8xf32>
    %c0_90 = arith.constant 0 : index
    %c24_91 = arith.constant 24 : index
    %230 = vector.load %arg25[%c0_90, %c24_91] : memref<8x32xf32, #tpu.memory_space<vmem>>, vector<8x8xf32>
    tpu.vector_store %arg25[%c0_90, %c24_91], %229 {strides = array<i32>} : memref<8x32xf32, #tpu.memory_space<vmem>>, vector<8x8xf32>,
    %c0_92 = arith.constant 0 : index
    %c0_93 = arith.constant 0 : index
    %231 = vector.load %arg25[%c0_92, %c0_93] : memref<8x32xf32, #tpu.memory_space<vmem>>, vector<8x32xf32>
    %232 = arith.truncf %231 : vector<8x32xf32> to vector<8x32xbf16>
    %c0_94 = arith.constant 0 : index
    %c0_95 = arith.constant 0 : index
    %233 = vector.load %arg14[%c0_94, %c0_95] : memref<32x32xbf16, #tpu.memory_space<vmem>>, vector<32x32xbf16>
    %cst_96 = arith.constant dense<0.000000e+00> : vector<8x32xf32>
    %234 = tpu.matmul %232, %233, %cst_96 {dimension_numbers = #tpu.dot_dimension_numbers<[1], [0], [0], [1], [0, 0, 1, 1], [], []>} : vector<8x32xbf16>, vector<32x32xbf16>, vector<8x32xf32> -> vector<8x32xf32>
    %c0_97 = arith.constant 0 : index
    %c0_98 = arith.constant 0 : index
    %235 = vector.load %arg15[%c0_97, %c0_98] : memref<1x32xf32, #tpu.memory_space<vmem>>, vector<1x32xf32>
    %236 = vector.broadcast %235 : vector<1x32xf32> to vector<8x32xf32>
    %237 = arith.addf %234, %236 : vector<8x32xf32>
    %238 = arith.addf %237, %128 : vector<8x32xf32>
    %c0_99 = arith.constant 0 : index
    %c0_100 = arith.constant 0 : index
    %239 = vector.load %arg16[%c0_99, %c0_100] : memref<1x32xf32, #tpu.memory_space<vmem>>, vector<1x32xf32>
    %c0_101 = arith.constant 0 : index
    %c0_102 = arith.constant 0 : index
    %240 = vector.load %arg17[%c0_101, %c0_102] : memref<1x32xf32, #tpu.memory_space<vmem>>, vector<1x32xf32>
    %cst_103 = arith.constant dense<0.000000e+00> : vector<8xf32>
    %241 = vector.multi_reduction <add>, %238, %cst_103 [1] : vector<8x32xf32> to vector<8xf32>
    %242 = vector.shape_cast %241 : vector<8xf32> to vector<8x1xf32>
    %cst_104 = arith.constant 3.125000e-02 : f32
    %243 = vector.broadcast %cst_104 : f32 to vector<8x1xf32>
    %244 = arith.mulf %242, %243 : vector<8x1xf32>
    %245 = vector.broadcast %244 : vector<8x1xf32> to vector<8x32xf32>
    %246 = arith.subf %238, %245 : vector<8x32xf32>
    %247 = arith.mulf %246, %246 : vector<8x32xf32>
    %cst_105 = arith.constant dense<0.000000e+00> : vector<8xf32>
    %248 = vector.multi_reduction <add>, %247, %cst_105 [1] : vector<8x32xf32> to vector<8xf32>
    %249 = vector.shape_cast %248 : vector<8xf32> to vector<8x1xf32>
    %cst_106 = arith.constant 3.125000e-02 : f32
    %250 = vector.broadcast %cst_106 : f32 to vector<8x1xf32>
    %251 = arith.mulf %249, %250 : vector<8x1xf32>
    %cst_107 = arith.constant 9.99999974E-6 : f32
    %252 = vector.broadcast %cst_107 : f32 to vector<8x1xf32>
    %253 = arith.addf %251, %252 : vector<8x1xf32>
    %254 = math.rsqrt %253 : vector<8x1xf32>
    %255 = vector.broadcast %254 : vector<8x1xf32> to vector<8x32xf32>
    %256 = arith.mulf %246, %255 : vector<8x32xf32>
    %257 = vector.broadcast %239 : vector<1x32xf32> to vector<8x32xf32>
    %258 = arith.mulf %256, %257 : vector<8x32xf32>
    %259 = vector.broadcast %240 : vector<1x32xf32> to vector<8x32xf32>
    %260 = arith.addf %258, %259 : vector<8x32xf32>
    %261 = arith.truncf %260 : vector<8x32xf32> to vector<8x32xbf16>
    %c0_108 = arith.constant 0 : index
    %c0_109 = arith.constant 0 : index
    %262 = vector.load %arg18[%c0_108, %c0_109] : memref<32x128xbf16, #tpu.memory_space<vmem>>, vector<32x128xbf16>
    %cst_110 = arith.constant dense<0.000000e+00> : vector<8x128xf32>
    %263 = tpu.matmul %261, %262, %cst_110 {dimension_numbers = #tpu.dot_dimension_numbers<[1], [0], [0], [1], [0, 0, 1, 1], [], []>} : vector<8x32xbf16>, vector<32x128xbf16>, vector<8x128xf32> -> vector<8x128xf32>
    %c0_111 = arith.constant 0 : index
    %c0_112 = arith.constant 0 : index
    %264 = vector.load %arg19[%c0_111, %c0_112] : memref<1x128xf32, #tpu.memory_space<vmem>>, vector<1x128xf32>
    %265 = vector.broadcast %264 : vector<1x128xf32> to vector<8x128xf32>
    %266 = arith.addf %263, %265 : vector<8x128xf32>
    %cst_113 = arith.constant 0.000000e+00 : f32
    %267 = vector.broadcast %cst_113 : f32 to vector<8x128xf32>
    %268 = arith.maximumf %266, %267 : vector<8x128xf32>
    %269 = arith.truncf %268 : vector<8x128xf32> to vector<8x128xbf16>
    %c0_114 = arith.constant 0 : index
    %c0_115 = arith.constant 0 : index
    %270 = vector.load %arg20[%c0_114, %c0_115] : memref<128x32xbf16, #tpu.memory_space<vmem>>, vector<128x32xbf16>
    %cst_116 = arith.constant dense<0.000000e+00> : vector<8x32xf32>
    %271 = tpu.matmul %269, %270, %cst_116 {dimension_numbers = #tpu.dot_dimension_numbers<[1], [0], [0], [1], [0, 0, 1, 1], [], []>} : vector<8x128xbf16>, vector<128x32xbf16>, vector<8x32xf32> -> vector<8x32xf32>
    %c0_117 = arith.constant 0 : index
    %c0_118 = arith.constant 0 : index
    %272 = vector.load %arg21[%c0_117, %c0_118] : memref<1x32xf32, #tpu.memory_space<vmem>>, vector<1x32xf32>
    %273 = vector.broadcast %272 : vector<1x32xf32> to vector<8x32xf32>
    %274 = arith.addf %271, %273 : vector<8x32xf32>
    %275 = arith.addf %274, %260 : vector<8x32xf32>
    %c0_119 = arith.constant 0 : index
    %c0_120 = arith.constant 0 : index
    %276 = vector.load %arg22[%c0_119, %c0_120] : memref<1x32xf32, #tpu.memory_space<vmem>>, vector<1x32xf32>
    %c0_121 = arith.constant 0 : index
    %c0_122 = arith.constant 0 : index
    %277 = vector.load %arg23[%c0_121, %c0_122] : memref<1x32xf32, #tpu.memory_space<vmem>>, vector<1x32xf32>
    %cst_123 = arith.constant dense<0.000000e+00> : vector<8xf32>
    %278 = vector.multi_reduction <add>, %275, %cst_123 [1] : vector<8x32xf32> to vector<8xf32>
    %279 = vector.shape_cast %278 : vector<8xf32> to vector<8x1xf32>
    %cst_124 = arith.constant 3.125000e-02 : f32
    %280 = vector.broadcast %cst_124 : f32 to vector<8x1xf32>
    %281 = arith.mulf %279, %280 : vector<8x1xf32>
    %282 = vector.broadcast %281 : vector<8x1xf32> to vector<8x32xf32>
    %283 = arith.subf %275, %282 : vector<8x32xf32>
    %284 = arith.mulf %283, %283 : vector<8x32xf32>
    %cst_125 = arith.constant dense<0.000000e+00> : vector<8xf32>
    %285 = vector.multi_reduction <add>, %284, %cst_125 [1] : vector<8x32xf32> to vector<8xf32>
    %286 = vector.shape_cast %285 : vector<8xf32> to vector<8x1xf32>
    %cst_126 = arith.constant 3.125000e-02 : f32
    %287 = vector.broadcast %cst_126 : f32 to vector<8x1xf32>
    %288 = arith.mulf %286, %287 : vector<8x1xf32>
    %cst_127 = arith.constant 9.99999974E-6 : f32
    %289 = vector.broadcast %cst_127 : f32 to vector<8x1xf32>
    %290 = arith.addf %288, %289 : vector<8x1xf32>
    %291 = math.rsqrt %290 : vector<8x1xf32>
    %292 = vector.broadcast %291 : vector<8x1xf32> to vector<8x32xf32>
    %293 = arith.mulf %283, %292 : vector<8x32xf32>
    %294 = vector.broadcast %276 : vector<1x32xf32> to vector<8x32xf32>
    %295 = arith.mulf %293, %294 : vector<8x32xf32>
    %296 = vector.broadcast %277 : vector<1x32xf32> to vector<8x32xf32>
    %297 = arith.addf %295, %296 : vector<8x32xf32>
    %298 = arith.truncf %297 : vector<8x32xf32> to vector<8x32xbf16>
    %c0_128 = arith.constant 0 : index
    %c0_129 = arith.constant 0 : index
    %c0_130 = arith.constant 0 : index
    %299 = vector.load %arg24[%c0_128, %c0_129, %c0_130] : memref<1x8x32xbf16, #tpu.memory_space<vmem>>, vector<1x8x32xbf16>
    %300 = vector.shape_cast %299 : vector<1x8x32xbf16> to vector<8x32xbf16>
    %301 = vector.shape_cast %298 : vector<8x32xbf16> to vector<1x8x32xbf16>
    tpu.vector_store %arg24[%c0_128, %c0_129, %c0_130], %301 {strides = array<i32>} : memref<1x8x32xbf16, #tpu.memory_space<vmem>>, vector<1x8x32xbf16>,
    return
  }
  func.func @transform_0(%arg0: i32) -> (i32, i32, i32) {
    %c0_i32 = arith.constant 0 : i32
    %c0_i32_0 = arith.constant 0 : i32
    %c0_i32_1 = arith.constant 0 : i32
    return %arg0, %c0_i32, %c0_i32_0 : i32, i32, i32
  }
  func.func @transform_1(%arg0: i32) -> (i32, i32, i32) {
    %c0_i32 = arith.constant 0 : i32
    %c0_i32_0 = arith.constant 0 : i32
    %c0_i32_1 = arith.constant 0 : i32
    return %arg0, %c0_i32, %c0_i32_0 : i32, i32, i32
  }
  func.func @transform_2(%arg0: i32) -> (i32, i32, i32) {
    %c0_i32 = arith.constant 0 : i32
    %c0_i32_0 = arith.constant 0 : i32
    %c0_i32_1 = arith.constant 0 : i32
    return %arg0, %c0_i32, %c0_i32_0 : i32, i32, i32
  }
  func.func @transform_3(%arg0: i32) -> (i32, i32, i32) {
    %c0_i32 = arith.constant 0 : i32
    %c0_i32_0 = arith.constant 0 : i32
    %c0_i32_1 = arith.constant 0 : i32
    return %arg0, %c0_i32, %c0_i32_0 : i32, i32, i32
  }
  func.func @transform_4(%arg0: i32) -> (i32, i32, i32) {
    %c0_i32 = arith.constant 0 : i32
    %c0_i32_0 = arith.constant 0 : i32
    %c0_i32_1 = arith.constant 0 : i32
    return %arg0, %c0_i32, %c0_i32_0 : i32, i32, i32
  }
  func.func @transform_5(%arg0: i32) -> (i32, i32) {
    %c0_i32 = arith.constant 0 : i32
    %c0_i32_0 = arith.constant 0 : i32
    %c0_i32_1 = arith.constant 0 : i32
    return %c0_i32, %c0_i32_0 : i32, i32
  }
  func.func @transform_6(%arg0: i32) -> (i32, i32) {
    %c0_i32 = arith.constant 0 : i32
    %c0_i32_0 = arith.constant 0 : i32
    %c0_i32_1 = arith.constant 0 : i32
    return %c0_i32, %c0_i32_0 : i32, i32
  }
  func.func @transform_7(%arg0: i32) -> (i32, i32) {
    %c0_i32 = arith.constant 0 : i32
    %c0_i32_0 = arith.constant 0 : i32
    %c0_i32_1 = arith.constant 0 : i32
    return %c0_i32, %c0_i32_0 : i32, i32
  }
  func.func @transform_8(%arg0: i32) -> (i32, i32) {
    %c0_i32 = arith.constant 0 : i32
    %c0_i32_0 = arith.constant 0 : i32
    %c0_i32_1 = arith.constant 0 : i32
    return %c0_i32, %c0_i32_0 : i32, i32
  }
  func.func @transform_9(%arg0: i32) -> (i32, i32) {
    %c0_i32 = arith.constant 0 : i32
    %c0_i32_0 = arith.constant 0 : i32
    %c0_i32_1 = arith.constant 0 : i32
    return %c0_i32, %c0_i32_0 : i32, i32
  }
  func.func @transform_10(%arg0: i32) -> (i32, i32) {
    %c0_i32 = arith.constant 0 : i32
    %c0_i32_0 = arith.constant 0 : i32
    %c0_i32_1 = arith.constant 0 : i32
    return %c0_i32, %c0_i32_0 : i32, i32
  }
  func.func @transform_11(%arg0: i32) -> (i32, i32) {
    %c0_i32 = arith.constant 0 : i32
    %c0_i32_0 = arith.constant 0 : i32
    %c0_i32_1 = arith.constant 0 : i32
    return %c0_i32, %c0_i32_0 : i32, i32
  }
  func.func @transform_12(%arg0: i32) -> (i32, i32) {
    %c0_i32 = arith.constant 0 : i32
    %c0_i32_0 = arith.constant 0 : i32
    %c0_i32_1 = arith.constant 0 : i32
    return %c0_i32, %c0_i32_0 : i32, i32
  }
  func.func @transform_13(%arg0: i32) -> (i32, i32) {
    %c0_i32 = arith.constant 0 : i32
    %c0_i32_0 = arith.constant 0 : i32
    %c0_i32_1 = arith.constant 0 : i32
    return %c0_i32, %c0_i32_0 : i32, i32
  }
  func.func @transform_14(%arg0: i32) -> (i32, i32) {
    %c0_i32 = arith.constant 0 : i32
    %c0_i32_0 = arith.constant 0 : i32
    %c0_i32_1 = arith.constant 0 : i32
    return %c0_i32, %c0_i32_0 : i32, i32
  }
  func.func @transform_15(%arg0: i32) -> (i32, i32) {
    %c0_i32 = arith.constant 0 : i32
    %c0_i32_0 = arith.constant 0 : i32
    %c0_i32_1 = arith.constant 0 : i32
    return %c0_i32, %c0_i32_0 : i32, i32
  }
  func.func @transform_16(%arg0: i32) -> (i32, i32) {
    %c0_i32 = arith.constant 0 : i32
    %c0_i32_0 = arith.constant 0 : i32
    %c0_i32_1 = arith.constant 0 : i32
    return %c0_i32, %c0_i32_0 : i32, i32
  }
  func.func @transform_17(%arg0: i32) -> (i32, i32) {
    %c0_i32 = arith.constant 0 : i32
    %c0_i32_0 = arith.constant 0 : i32
    %c0_i32_1 = arith.constant 0 : i32
    return %c0_i32, %c0_i32_0 : i32, i32
  }
  func.func @transform_18(%arg0: i32) -> (i32, i32) {
    %c0_i32 = arith.constant 0 : i32
    %c0_i32_0 = arith.constant 0 : i32
    %c0_i32_1 = arith.constant 0 : i32
    return %c0_i32, %c0_i32_0 : i32, i32
  }
  func.func @transform_19(%arg0: i32) -> (i32, i32) {
    %c0_i32 = arith.constant 0 : i32
    %c0_i32_0 = arith.constant 0 : i32
    %c0_i32_1 = arith.constant 0 : i32
    return %c0_i32, %c0_i32_0 : i32, i32
  }
  func.func @transform_20(%arg0: i32) -> (i32, i32) {
    %c0_i32 = arith.constant 0 : i32
    %c0_i32_0 = arith.constant 0 : i32
    %c0_i32_1 = arith.constant 0 : i32
    return %c0_i32, %c0_i32_0 : i32, i32
  }
  func.func @transform_21(%arg0: i32) -> (i32, i32) {
    %c0_i32 = arith.constant 0 : i32
    %c0_i32_0 = arith.constant 0 : i32
    %c0_i32_1 = arith.constant 0 : i32
    return %c0_i32, %c0_i32_0 : i32, i32
  }
  func.func @transform_22(%arg0: i32) -> (i32, i32) {
    %c0_i32 = arith.constant 0 : i32
    %c0_i32_0 = arith.constant 0 : i32
    %c0_i32_1 = arith.constant 0 : i32
    return %c0_i32, %c0_i32_0 : i32, i32
  }
  func.func @transform_23(%arg0: i32) -> (i32, i32, i32) {
    %c0_i32 = arith.constant 0 : i32
    %c0_i32_0 = arith.constant 0 : i32
    %c0_i32_1 = arith.constant 0 : i32
    return %arg0, %c0_i32, %c0_i32_0 : i32, i32, i32
  }
}

</mosaic_0001>

<llo_original>
// kernel: decoder_block.1
$region0: #{decoder_block.1}
  #allocation0 [shape = 'u32[]', space=smem, size = 0x4, offset = 0x4, fixed_abs, tag = 'smem constant byte address 0x4 - core index']
  #allocation1 [shape = 'u32[72,128]{1,0:T(1,128)}', space=vmem, size = 0x9000, scoped, tag = 'internal scratch']
  #allocation2 [shape = 'f32[8,32]{1,0:T(8,128)}', space=vmem, size = 0x1000, scoped, tag = 'scratch operand']
  %s0 = inlined_call_operand.vmem [shape: bf16[2,8,32], index: 0, kind: input, shape index: {}]
  %s1 = inlined_call_operand.vmem [shape: bf16[2,8,32], index: 1, kind: input, shape index: {}]
  %s2 = inlined_call_operand.vmem [shape: bf16[2,8,32], index: 2, kind: input, shape index: {}]
  %s3 = inlined_call_operand.vmem [shape: bf16[2,8,8], index: 3, kind: input, shape index: {}]
  %s4 = inlined_call_operand.vmem [shape: bf16[2,8,8], index: 4, kind: input, shape index: {}]
  %s5 = inlined_call_operand.vmem [shape: bf16[32,96], index: 5, kind: input, shape index: {}]
  %s6 = inlined_call_operand.vmem [shape: bf16[32,32], index: 6, kind: input, shape index: {}]
  %s7 = inlined_call_operand.vmem [shape: f32[1,32], index: 7, kind: input, shape index: {}]
  %s8 = inlined_call_operand.vmem [shape: f32[1,32], index: 8, kind: input, shape index: {}]
  %s9 = inlined_call_operand.vmem [shape: f32[1,32], index: 9, kind: input, shape index: {}]
  %s10 = inlined_call_operand.vmem [shape: bf16[32,32], index: 10, kind: input, shape index: {}]
  %s11 = inlined_call_operand.vmem [shape: bf16[32,32], index: 11, kind: input, shape index: {}]
  %s12 = inlined_call_operand.vmem [shape: bf16[32,32], index: 12, kind: input, shape index: {}]
  %s13 = inlined_call_operand.vmem [shape: bf16[32,32], index: 13, kind: input, shape index: {}]
  %s14 = inlined_call_operand.vmem [shape: f32[1,32], index: 14, kind: input, shape index: {}]
  %s15 = inlined_call_operand.vmem [shape: f32[1,32], index: 15, kind: input, shape index: {}]
  %s16 = inlined_call_operand.vmem [shape: f32[1,32], index: 16, kind: input, shape index: {}]
  %s17 = inlined_call_operand.vmem [shape: bf16[32,128], index: 17, kind: input, shape index: {}]
  %s18 = inlined_call_operand.vmem [shape: f32[1,128], index: 18, kind: input, shape index: {}]
  %s19 = inlined_call_operand.vmem [shape: bf16[128,32], index: 19, kind: input, shape index: {}]
  %s20 = inlined_call_operand.vmem [shape: f32[1,32], index: 20, kind: input, shape index: {}]
  %s21 = inlined_call_operand.vmem [shape: f32[1,32], index: 21, kind: input, shape index: {}]
  %s22 = inlined_call_operand.vmem [shape: f32[1,32], index: 22, kind: input, shape index: {}]
  %s23 = inlined_call_operand.hbm [shape: bf16[2,8,32], index: 23, kind: output, shape index: {}]
  %s24 = sld [smem:[#allocation0]]
  $region125: #{decoder_block.1} parent=0
    _
  %s26 = ssub.s32 1, %s24
  %s27 = scalar_select 0, %s26, %s24
  $region1: #{decoder_block.1} parent=0
    #allocation3 [shape = 'u8[4096]{0}', space=vmem, size = 0x1000, scoped, tag = 'output window, operand 0']
    #allocation4 [shape = 's32[2]{0}', space=sflag, size = 0x8, scoped, tag = 'scoped memory for decoder_block.1']
    %28 = vsyncpa [#allocation4], 0
    %s29 = scalar_lea.sflag [#allocation4], 1
    %30 = vsyncpa %s29, 0
    loop: start=0, step=1, limit=4
    $region2: #{decoder_block.1} parent=1 // loop_pre_header
      _
    $region3: #{decoder_block.1} parent=1 // loop_header
      %s32 = sphi 0, %s36
      %p33 = scmp.ge.s32.totalorder %s32, 4
      %s42 = sphi 0, %s44
      %s45 = sphi 0, %s42
      %s46 = sphi 0, %s45
      %s62 = sphi 0, %s46
      %s68 = sphi 0, %s70
      %s71 = sphi 0, %s68
      %s72 = sphi 0, %s71
      %s88 = sphi 0, %s72
      %s94 = sphi 0, %s96
      %s97 = sphi 0, %s94
      %s98 = sphi 0, %s97
      %s114 = sphi 0, %s98
      %s120 = sphi 0, %s122
      %s123 = sphi 0, %s120
      %s124 = sphi 0, %s123
      %s140 = sphi 0, %s124
      %s146 = sphi 0, %s148
      %s149 = sphi 0, %s146
      %s150 = sphi 0, %s149
      %s166 = sphi 0, %s150
      %s170 = sphi 0, %s170
      %s172 = sphi 0, %s170
      %s173 = sphi 0, %s172
      %s187 = sphi 0, %s173
      %s191 = sphi 0, %s191
      %s193 = sphi 0, %s191
      %s194 = sphi 0, %s193
      %s208 = sphi 0, %s194
      %s212 = sphi 0, %s212
      %s214 = sphi 0, %s212
      %s215 = sphi 0, %s214
      %s229 = sphi 0, %s215
      %s233 = sphi 0, %s233
      %s235 = sphi 0, %s233
      %s236 = sphi 0, %s235
      %s250 = sphi 0, %s236
      %s254 = sphi 0, %s254
      %s256 = sphi 0, %s254
      %s257 = sphi 0, %s256
      %s271 = sphi 0, %s257
      %s275 = sphi 0, %s275
      %s277 = sphi 0, %s275
      %s278 = sphi 0, %s277
      %s292 = sphi 0, %s278
      %s296 = sphi 0, %s296
      %s298 = sphi 0, %s296
      %s299 = sphi 0, %s298
      %s313 = sphi 0, %s299
      %s317 = sphi 0, %s317
      %s319 = sphi 0, %s317
      %s320 = sphi 0, %s319
      %s334 = sphi 0, %s320
      %s338 = sphi 0, %s338
      %s340 = sphi 0, %s338
      %s341 = sphi 0, %s340
      %s355 = sphi 0, %s341
      %s359 = sphi 0, %s359
      %s361 = sphi 0, %s359
      %s362 = sphi 0, %s361
      %s376 = sphi 0, %s362
      %s380 = sphi 0, %s380
      %s382 = sphi 0, %s380
      %s383 = sphi 0, %s382
      %s397 = sphi 0, %s383
      %s401 = sphi 0, %s401
      %s403 = sphi 0, %s401
      %s404 = sphi 0, %s403
      %s418 = sphi 0, %s404
      %s422 = sphi 0, %s422
      %s424 = sphi 0, %s422
      %s425 = sphi 0, %s424
      %s439 = sphi 0, %s425
      %s443 = sphi 0, %s443
      %s445 = sphi 0, %s443
      %s446 = sphi 0, %s445
      %s460 = sphi 0, %s446
      %s464 = sphi 0, %s464
      %s466 = sphi 0, %s464
      %s467 = sphi 0, %s466
      %s481 = sphi 0, %s467
      %s485 = sphi 0, %s485
      %s487 = sphi 0, %s485
      %s488 = sphi 0, %s487
      %s502 = sphi 0, %s488
      %s506 = sphi 0, %s506
      %s508 = sphi 0, %s506
      %s509 = sphi 0, %s508
      %s523 = sphi 0, %s509
      %s527 = sphi 0, %s527
      %s529 = sphi 0, %s527
      %s530 = sphi 0, %s529
      %s544 = sphi 0, %s530
      %s550 = sphi 0, %s552
      %s553 = sphi 0, %s550
      %s554 = sphi 0, %s553
      %s570 = sphi 0, %s554
    $region4: #{decoder_block.1} parent=1 // loop_header_branch
      %35 = sbr.rel (%p33) target = $region8
    $region5: #{decoder_block.1} parent=1 // loop_body
      %s37 = ssub.s32 %s32, 1
      %s38 = ssub.s32 %s32, 2
      %s39 = sadd.s32 %s32, 1
      %s40 = ssub.s32 %s32, %s39
      %p41 = scmp.eq.s32.totalorder %s40, 0
      %s43 = sadd.s32 %s42, 1
      %s44 = scalar_select %p41, %s42, %s43
      %p47 = pneg %p41
      %p48 = scmp.eq.s32.totalorder %s32, 1
      %p49 = por %p47, %p48
      %p50 = scmp.ne.s32.totalorder %s42, %s45
      %p51 = scmp.eq.s32.totalorder %s32, 0
      %p52 = por %p50, %p51
      %p53 = scmp.ne.s32.totalorder %s42, %s45
      %p54 = scmp.eq.s32.totalorder %s37, 1
      %p55 = por %p53, %p54
      %p56 = scmp.ne.s32.totalorder %s45, %s46
      %p57 = scmp.eq.s32.totalorder %s37, 0
      %p58 = por %p56, %p57
      %p59 = scmp.ne.s32.totalorder %s45, %s46
      %p60 = scmp.eq.s32.totalorder %s38, 1
      %p61 = por %p59, %p60
      %p63 = scmp.ne.s32.totalorder %s46, %s62
      %p64 = scmp.eq.s32.totalorder %s38, 0
      %p65 = por %p63, %p64
      %s66 = ssub.s32 %s32, %s39
      %p67 = scmp.eq.s32.totalorder %s66, 0
      %s69 = sadd.s32 %s68, 1
      %s70 = scalar_select %p67, %s68, %s69
      %p73 = pneg %p67
      %p74 = scmp.eq.s32.totalorder %s32, 1
      %p75 = por %p73, %p74
      %p76 = scmp.ne.s32.totalorder %s68, %s71
      %p77 = scmp.eq.s32.totalorder %s32, 0
      %p78 = por %p76, %p77
      %p79 = scmp.ne.s32.totalorder %s68, %s71
      %p80 = scmp.eq.s32.totalorder %s37, 1
      %p81 = por %p79, %p80
      %p82 = scmp.ne.s32.totalorder %s71, %s72
      %p83 = scmp.eq.s32.totalorder %s37, 0
      %p84 = por %p82, %p83
      %p85 = scmp.ne.s32.totalorder %s71, %s72
      %p86 = scmp.eq.s32.totalorder %s38, 1
      %p87 = por %p85, %p86
      %p89 = scmp.ne.s32.totalorder %s72, %s88
      %p90 = scmp.eq.s32.totalorder %s38, 0
      %p91 = por %p89, %p90
      %s92 = ssub.s32 %s32, %s39
      %p93 = scmp.eq.s32.totalorder %s92, 0
      %s95 = sadd.s32 %s94, 1
      %s96 = scalar_select %p93, %s94, %s95
      %p99 = pneg %p93
      %p100 = scmp.eq.s32.totalorder %s32, 1
      %p101 = por %p99, %p100
      %p102 = scmp.ne.s32.totalorder %s94, %s97
      %p103 = scmp.eq.s32.totalorder %s32, 0
      %p104 = por %p102, %p103
      %p105 = scmp.ne.s32.totalorder %s94, %s97
      %p106 = scmp.eq.s32.totalorder %s37, 1
      %p107 = por %p105, %p106
      %p108 = scmp.ne.s32.totalorder %s97, %s98
      %p109 = scmp.eq.s32.totalorder %s37, 0
      %p110 = por %p108, %p109
      %p111 = scmp.ne.s32.totalorder %s97, %s98
      %p112 = scmp.eq.s32.totalorder %s38, 1
      %p113 = por %p111, %p112
      %p115 = scmp.ne.s32.totalorder %s98, %s114
      %p116 = scmp.eq.s32.totalorder %s38, 0
      %p117 = por %p115, %p116
      %s118 = ssub.s32 %s32, %s39
      %p119 = scmp.eq.s32.totalorder %s118, 0
      %s121 = sadd.s32 %s120, 1
      %s122 = scalar_select %p119, %s120, %s121
      %p125 = pneg %p119
      %p126 = scmp.eq.s32.totalorder %s32, 1
      %p127 = por %p125, %p126
      %p128 = scmp.ne.s32.totalorder %s120, %s123
      %p129 = scmp.eq.s32.totalorder %s32, 0
      %p130 = por %p128, %p129
      %p131 = scmp.ne.s32.totalorder %s120, %s123
      %p132 = scmp.eq.s32.totalorder %s37, 1
      %p133 = por %p131, %p132
      %p134 = scmp.ne.s32.totalorder %s123, %s124
      %p135 = scmp.eq.s32.totalorder %s37, 0
      %p136 = por %p134, %p135
      %p137 = scmp.ne.s32.totalorder %s123, %s124
      %p138 = scmp.eq.s32.totalorder %s38, 1
      %p139 = por %p137, %p138
      %p141 = scmp.ne.s32.totalorder %s124, %s140
      %p142 = scmp.eq.s32.totalorder %s38, 0
      %p143 = por %p141, %p142
      %s144 = ssub.s32 %s32, %s39
      %p145 = scmp.eq.s32.totalorder %s144, 0
      %s147 = sadd.s32 %s146, 1
      %s148 = scalar_select %p145, %s146, %s147
      %p151 = pneg %p145
      %p152 = scmp.eq.s32.totalorder %s32, 1
      %p153 = por %p151, %p152
      %p154 = scmp.ne.s32.totalorder %s146, %s149
      %p155 = scmp.eq.s32.totalorder %s32, 0
      %p156 = por %p154, %p155
      %p157 = scmp.ne.s32.totalorder %s146, %s149
      %p158 = scmp.eq.s32.totalorder %s37, 1
      %p159 = por %p157, %p158
      %p160 = scmp.ne.s32.totalorder %s149, %s150
      %p161 = scmp.eq.s32.totalorder %s37, 0
      %p162 = por %p160, %p161
      %p163 = scmp.ne.s32.totalorder %s149, %s150
      %p164 = scmp.eq.s32.totalorder %s38, 1
      %p165 = por %p163, %p164
      %p167 = scmp.ne.s32.totalorder %s150, %s166
      %p168 = scmp.eq.s32.totalorder %s38, 0
      %p169 = por %p167, %p168
      %s171 = sadd.s32 %s170, 1
      %p174 = scmp.eq.s32.totalorder %s32, 1
      %p175 = scmp.ne.s32.totalorder %s170, %s172
      %p176 = scmp.eq.s32.totalorder %s32, 0
      %p177 = por %p175, %p176
      %p178 = scmp.ne.s32.totalorder %s170, %s172
      %p179 = scmp.eq.s32.totalorder %s37, 1
      %p180 = por %p178, %p179
      %p181 = scmp.ne.s32.totalorder %s172, %s173
      %p182 = scmp.eq.s32.totalorder %s37, 0
      %p183 = por %p181, %p182
      %p184 = scmp.ne.s32.totalorder %s172, %s173
      %p185 = scmp.eq.s32.totalorder %s38, 1
      %p186 = por %p184, %p185
      %p188 = scmp.ne.s32.totalorder %s173, %s187
      %p189 = scmp.eq.s32.totalorder %s38, 0
      %p190 = por %p188, %p189
      %s192 = sadd.s32 %s191, 1
      %p195 = scmp.eq.s32.totalorder %s32, 1
      %p196 = scmp.ne.s32.totalorder %s191, %s193
      %p197 = scmp.eq.s32.totalorder %s32, 0
      %p198 = por %p196, %p197
      %p199 = scmp.ne.s32.totalorder %s191, %s193
      %p200 = scmp.eq.s32.totalorder %s37, 1
      %p201 = por %p199, %p200
      %p202 = scmp.ne.s32.totalorder %s193, %s194
      %p203 = scmp.eq.s32.totalorder %s37, 0
      %p204 = por %p202, %p203
      %p205 = scmp.ne.s32.totalorder %s193, %s194
      %p206 = scmp.eq.s32.totalorder %s38, 1
      %p207 = por %p205, %p206
      %p209 = scmp.ne.s32.totalorder %s194, %s208
      %p210 = scmp.eq.s32.totalorder %s38, 0
      %p211 = por %p209, %p210
      %s213 = sadd.s32 %s212, 1
      %p216 = scmp.eq.s32.totalorder %s32, 1
      %p217 = scmp.ne.s32.totalorder %s212, %s214
      %p218 = scmp.eq.s32.totalorder %s32, 0
      %p219 = por %p217, %p218
      %p220 = scmp.ne.s32.totalorder %s212, %s214
      %p221 = scmp.eq.s32.totalorder %s37, 1
      %p222 = por %p220, %p221
      %p223 = scmp.ne.s32.totalorder %s214, %s215
      %p224 = scmp.eq.s32.totalorder %s37, 0
      %p225 = por %p223, %p224
      %p226 = scmp.ne.s32.totalorder %s214, %s215
      %p227 = scmp.eq.s32.totalorder %s38, 1
      %p228 = por %p226, %p227
      %p230 = scmp.ne.s32.totalorder %s215, %s229
      %p231 = scmp.eq.s32.totalorder %s38, 0
      %p232 = por %p230, %p231
      %s234 = sadd.s32 %s233, 1
      %p237 = scmp.eq.s32.totalorder %s32, 1
      %p238 = scmp.ne.s32.totalorder %s233, %s235
      %p239 = scmp.eq.s32.totalorder %s32, 0
      %p240 = por %p238, %p239
      %p241 = scmp.ne.s32.totalorder %s233, %s235
      %p242 = scmp.eq.s32.totalorder %s37, 1
      %p243 = por %p241, %p242
      %p244 = scmp.ne.s32.totalorder %s235, %s236
      %p245 = scmp.eq.s32.totalorder %s37, 0
      %p246 = por %p244, %p245
      %p247 = scmp.ne.s32.totalorder %s235, %s236
      %p248 = scmp.eq.s32.totalorder %s38, 1
      %p249 = por %p247, %p248
      %p251 = scmp.ne.s32.totalorder %s236, %s250
      %p252 = scmp.eq.s32.totalorder %s38, 0
      %p253 = por %p251, %p252
      %s255 = sadd.s32 %s254, 1
      %p258 = scmp.eq.s32.totalorder %s32, 1
      %p259 = scmp.ne.s32.totalorder %s254, %s256
      %p260 = scmp.eq.s32.totalorder %s32, 0
      %p261 = por %p259, %p260
      %p262 = scmp.ne.s32.totalorder %s254, %s256
      %p263 = scmp.eq.s32.totalorder %s37, 1
      %p264 = por %p262, %p263
      %p265 = scmp.ne.s32.totalorder %s256, %s257
      %p266 = scmp.eq.s32.totalorder %s37, 0
      %p267 = por %p265, %p266
      %p268 = scmp.ne.s32.totalorder %s256, %s257
      %p269 = scmp.eq.s32.totalorder %s38, 1
      %p270 = por %p268, %p269
      %p272 = scmp.ne.s32.totalorder %s257, %s271
      %p273 = scmp.eq.s32.totalorder %s38, 0
      %p274 = por %p272, %p273
      %s276 = sadd.s32 %s275, 1
      %p279 = scmp.eq.s32.totalorder %s32, 1
      %p280 = scmp.ne.s32.totalorder %s275, %s277
      %p281 = scmp.eq.s32.totalorder %s32, 0
      %p282 = por %p280, %p281
      %p283 = scmp.ne.s32.totalorder %s275, %s277
      %p284 = scmp.eq.s32.totalorder %s37, 1
      %p285 = por %p283, %p284
      %p286 = scmp.ne.s32.totalorder %s277, %s278
      %p287 = scmp.eq.s32.totalorder %s37, 0
      %p288 = por %p286, %p287
      %p289 = scmp.ne.s32.totalorder %s277, %s278
      %p290 = scmp.eq.s32.totalorder %s38, 1
      %p291 = por %p289, %p290
      %p293 = scmp.ne.s32.totalorder %s278, %s292
      %p294 = scmp.eq.s32.totalorder %s38, 0
      %p295 = por %p293, %p294
      %s297 = sadd.s32 %s296, 1
      %p300 = scmp.eq.s32.totalorder %s32, 1
      %p301 = scmp.ne.s32.totalorder %s296, %s298
      %p302 = scmp.eq.s32.totalorder %s32, 0
      %p303 = por %p301, %p302
      %p304 = scmp.ne.s32.totalorder %s296, %s298
      %p305 = scmp.eq.s32.totalorder %s37, 1
      %p306 = por %p304, %p305
      %p307 = scmp.ne.s32.totalorder %s298, %s299
      %p308 = scmp.eq.s32.totalorder %s37, 0
      %p309 = por %p307, %p308
      %p310 = scmp.ne.s32.totalorder %s298, %s299
      %p311 = scmp.eq.s32.totalorder %s38, 1
      %p312 = por %p310, %p311
      %p314 = scmp.ne.s32.totalorder %s299, %s313
      %p315 = scmp.eq.s32.totalorder %s38, 0
      %p316 = por %p314, %p315
      %s318 = sadd.s32 %s317, 1
      %p321 = scmp.eq.s32.totalorder %s32, 1
      %p322 = scmp.ne.s32.totalorder %s317, %s319
      %p323 = scmp.eq.s32.totalorder %s32, 0
      %p324 = por %p322, %p323
      %p325 = scmp.ne.s32.totalorder %s317, %s319
      %p326 = scmp.eq.s32.totalorder %s37, 1
      %p327 = por %p325, %p326
      %p328 = scmp.ne.s32.totalorder %s319, %s320
      %p329 = scmp.eq.s32.totalorder %s37, 0
      %p330 = por %p328, %p329
      %p331 = scmp.ne.s32.totalorder %s319, %s320
      %p332 = scmp.eq.s32.totalorder %s38, 1
      %p333 = por %p331, %p332
      %p335 = scmp.ne.s32.totalorder %s320, %s334
      %p336 = scmp.eq.s32.totalorder %s38, 0
      %p337 = por %p335, %p336
      %s339 = sadd.s32 %s338, 1
      %p342 = scmp.eq.s32.totalorder %s32, 1
      %p343 = scmp.ne.s32.totalorder %s338, %s340
      %p344 = scmp.eq.s32.totalorder %s32, 0
      %p345 = por %p343, %p344
      %p346 = scmp.ne.s32.totalorder %s338, %s340
      %p347 = scmp.eq.s32.totalorder %s37, 1
      %p348 = por %p346, %p347
      %p349 = scmp.ne.s32.totalorder %s340, %s341
      %p350 = scmp.eq.s32.totalorder %s37, 0
      %p351 = por %p349, %p350
      %p352 = scmp.ne.s32.totalorder %s340, %s341
      %p353 = scmp.eq.s32.totalorder %s38, 1
      %p354 = por %p352, %p353
      %p356 = scmp.ne.s32.totalorder %s341, %s355
      %p357 = scmp.eq.s32.totalorder %s38, 0
      %p358 = por %p356, %p357
      %s360 = sadd.s32 %s359, 1
      %p363 = scmp.eq.s32.totalorder %s32, 1
      %p364 = scmp.ne.s32.totalorder %s359, %s361
      %p365 = scmp.eq.s32.totalorder %s32, 0
      %p366 = por %p364, %p365
      %p367 = scmp.ne.s32.totalorder %s359, %s361
      %p368 = scmp.eq.s32.totalorder %s37, 1
      %p369 = por %p367, %p368
      %p370 = scmp.ne.s32.totalorder %s361, %s362
      %p371 = scmp.eq.s32.totalorder %s37, 0
      %p372 = por %p370, %p371
      %p373 = scmp.ne.s32.totalorder %s361, %s362
      %p374 = scmp.eq.s32.totalorder %s38, 1
      %p375 = por %p373, %p374
      %p377 = scmp.ne.s32.totalorder %s362, %s376
      %p378 = scmp.eq.s32.totalorder %s38, 0
      %p379 = por %p377, %p378
      %s381 = sadd.s32 %s380, 1
      %p384 = scmp.eq.s32.totalorder %s32, 1
      %p385 = scmp.ne.s32.totalorder %s380, %s382
      %p386 = scmp.eq.s32.totalorder %s32, 0
      %p387 = por %p385, %p386
      %p388 = scmp.ne.s32.totalorder %s380, %s382
      %p389 = scmp.eq.s32.totalorder %s37, 1
      %p390 = por %p388, %p389
      %p391 = scmp.ne.s32.totalorder %s382, %s383
      %p392 = scmp.eq.s32.totalorder %s37, 0
      %p393 = por %p391, %p392
      %p394 = scmp.ne.s32.totalorder %s382, %s383
      %p395 = scmp.eq.s32.totalorder %s38, 1
      %p396 = por %p394, %p395
      %p398 = scmp.ne.s32.totalorder %s383, %s397
      %p399 = scmp.eq.s32.totalorder %s38, 0
      %p400 = por %p398, %p399
      %s402 = sadd.s32 %s401, 1
      %p405 = scmp.eq.s32.totalorder %s32, 1
      %p406 = scmp.ne.s32.totalorder %s401, %s403
      %p407 = scmp.eq.s32.totalorder %s32, 0
      %p408 = por %p406, %p407
      %p409 = scmp.ne.s32.totalorder %s401, %s403
      %p410 = scmp.eq.s32.totalorder %s37, 1
      %p411 = por %p409, %p410
      %p412 = scmp.ne.s32.totalorder %s403, %s404
      %p413 = scmp.eq.s32.totalorder %s37, 0
      %p414 = por %p412, %p413
      %p415 = scmp.ne.s32.totalorder %s403, %s404
      %p416 = scmp.eq.s32.totalorder %s38, 1
      %p417 = por %p415, %p416
      %p419 = scmp.ne.s32.totalorder %s404, %s418
      %p420 = scmp.eq.s32.totalorder %s38, 0
      %p421 = por %p419, %p420
      %s423 = sadd.s32 %s422, 1
      %p426 = scmp.eq.s32.totalorder %s32, 1
      %p427 = scmp.ne.s32.totalorder %s422, %s424
      %p428 = scmp.eq.s32.totalorder %s32, 0
      %p429 = por %p427, %p428
      %p430 = scmp.ne.s32.totalorder %s422, %s424
      %p431 = scmp.eq.s32.totalorder %s37, 1
      %p432 = por %p430, %p431
      %p433 = scmp.ne.s32.totalorder %s424, %s425
      %p434 = scmp.eq.s32.totalorder %s37, 0
      %p435 = por %p433, %p434
      %p436 = scmp.ne.s32.totalorder %s424, %s425
      %p437 = scmp.eq.s32.totalorder %s38, 1
      %p438 = por %p436, %p437
      %p440 = scmp.ne.s32.totalorder %s425, %s439
      %p441 = scmp.eq.s32.totalorder %s38, 0
      %p442 = por %p440, %p441
      %s444 = sadd.s32 %s443, 1
      %p447 = scmp.eq.s32.totalorder %s32, 1
      %p448 = scmp.ne.s32.totalorder %s443, %s445
      %p449 = scmp.eq.s32.totalorder %s32, 0
      %p450 = por %p448, %p449
      %p451 = scmp.ne.s32.totalorder %s443, %s445
      %p452 = scmp.eq.s32.totalorder %s37, 1
      %p453 = por %p451, %p452
      %p454 = scmp.ne.s32.totalorder %s445, %s446
      %p455 = scmp.eq.s32.totalorder %s37, 0
      %p456 = por %p454, %p455
      %p457 = scmp.ne.s32.totalorder %s445, %s446
      %p458 = scmp.eq.s32.totalorder %s38, 1
      %p459 = por %p457, %p458
      %p461 = scmp.ne.s32.totalorder %s446, %s460
      %p462 = scmp.eq.s32.totalorder %s38, 0
      %p463 = por %p461, %p462
      %s465 = sadd.s32 %s464, 1
      %p468 = scmp.eq.s32.totalorder %s32, 1
      %p469 = scmp.ne.s32.totalorder %s464, %s466
      %p470 = scmp.eq.s32.totalorder %s32, 0
      %p471 = por %p469, %p470
      %p472 = scmp.ne.s32.totalorder %s464, %s466
      %p473 = scmp.eq.s32.totalorder %s37, 1
      %p474 = por %p472, %p473
      %p475 = scmp.ne.s32.totalorder %s466, %s467
      %p476 = scmp.eq.s32.totalorder %s37, 0
      %p477 = por %p475, %p476
      %p478 = scmp.ne.s32.totalorder %s466, %s467
      %p479 = scmp.eq.s32.totalorder %s38, 1
      %p480 = por %p478, %p479
      %p482 = scmp.ne.s32.totalorder %s467, %s481
      %p483 = scmp.eq.s32.totalorder %s38, 0
      %p484 = por %p482, %p483
      %s486 = sadd.s32 %s485, 1
      %p489 = scmp.eq.s32.totalorder %s32, 1
      %p490 = scmp.ne.s32.totalorder %s485, %s487
      %p491 = scmp.eq.s32.totalorder %s32, 0
      %p492 = por %p490, %p491
      %p493 = scmp.ne.s32.totalorder %s485, %s487
      %p494 = scmp.eq.s32.totalorder %s37, 1
      %p495 = por %p493, %p494
      %p496 = scmp.ne.s32.totalorder %s487, %s488
      %p497 = scmp.eq.s32.totalorder %s37, 0
      %p498 = por %p496, %p497
      %p499 = scmp.ne.s32.totalorder %s487, %s488
      %p500 = scmp.eq.s32.totalorder %s38, 1
      %p501 = por %p499, %p500
      %p503 = scmp.ne.s32.totalorder %s488, %s502
      %p504 = scmp.eq.s32.totalorder %s38, 0
      %p505 = por %p503, %p504
      %s507 = sadd.s32 %s506, 1
      %p510 = scmp.eq.s32.totalorder %s32, 1
      %p511 = scmp.ne.s32.totalorder %s506, %s508
      %p512 = scmp.eq.s32.totalorder %s32, 0
      %p513 = por %p511, %p512
      %p514 = scmp.ne.s32.totalorder %s506, %s508
      %p515 = scmp.eq.s32.totalorder %s37, 1
      %p516 = por %p514, %p515
      %p517 = scmp.ne.s32.totalorder %s508, %s509
      %p518 = scmp.eq.s32.totalorder %s37, 0
      %p519 = por %p517, %p518
      %p520 = scmp.ne.s32.totalorder %s508, %s509
      %p521 = scmp.eq.s32.totalorder %s38, 1
      %p522 = por %p520, %p521
      %p524 = scmp.ne.s32.totalorder %s509, %s523
      %p525 = scmp.eq.s32.totalorder %s38, 0
      %p526 = por %p524, %p525
      %s528 = sadd.s32 %s527, 1
      %p531 = scmp.eq.s32.totalorder %s32, 1
      %p532 = scmp.ne.s32.totalorder %s527, %s529
      %p533 = scmp.eq.s32.totalorder %s32, 0
      %p534 = por %p532, %p533
      %p535 = scmp.ne.s32.totalorder %s527, %s529
      %p536 = scmp.eq.s32.totalorder %s37, 1
      %p537 = por %p535, %p536
      %p538 = scmp.ne.s32.totalorder %s529, %s530
      %p539 = scmp.eq.s32.totalorder %s37, 0
      %p540 = por %p538, %p539
      %p541 = scmp.ne.s32.totalorder %s529, %s530
      %p542 = scmp.eq.s32.totalorder %s38, 1
      %p543 = por %p541, %p542
      %p545 = scmp.ne.s32.totalorder %s530, %s544
      %p546 = scmp.eq.s32.totalorder %s38, 0
      %p547 = por %p545, %p546
      %s548 = ssub.s32 %s32, %s39
      %p549 = scmp.eq.s32.totalorder %s548, 0
      %s551 = sadd.s32 %s550, 1
      %s552 = scalar_select %p549, %s550, %s551
      %p555 = pneg %p549
      %p556 = scmp.eq.s32.totalorder %s32, 1
      %p557 = por %p555, %p556
      %p558 = scmp.ne.s32.totalorder %s550, %s553
      %p559 = scmp.eq.s32.totalorder %s32, 0
      %p560 = por %p558, %p559
      %p561 = scmp.ne.s32.totalorder %s550, %s553
      %p562 = scmp.eq.s32.totalorder %s37, 1
      %p563 = por %p561, %p562
      %p564 = scmp.ne.s32.totalorder %s553, %s554
      %p565 = scmp.eq.s32.totalorder %s37, 0
      %p566 = por %p564, %p565
      %p567 = scmp.ne.s32.totalorder %s553, %s554
      %p568 = scmp.eq.s32.totalorder %s38, 1
      %p569 = por %p567, %p568
      %p571 = scmp.ne.s32.totalorder %s554, %s570
      %p572 = scmp.eq.s32.totalorder %s38, 0
      %p573 = por %p571, %p572
      %p574 = scmp.le.s32.totalorder 1, %s32
      %p575 = scmp.lt.s32.totalorder %s32, 3
      %p576 = pnand %p574, %p575
      %p577 = pneg %p576
      // Predicated region
      $region9: #{decoder_block.1} parent=5 // pred_check
        _
      $region10: #{decoder_block.1} parent=5 // pred_check_branch
        %579 = sbr.rel (%p576) target = $region12
      $region11: #{decoder_block.1} parent=5 // pred_region
        %s580 = ssub.s32 %s32, 1
        // Predicated region
        $region13: #{decoder_block.1} parent=11 // pred_check
          %p581 = pneg %p183
        $region14: #{decoder_block.1} parent=11 // pred_check_branch
          %583 = sbr.rel (%p581) target = $region16
        $region15: #{decoder_block.1} parent=11 // pred_region
          _
        $region16: #{decoder_block.1} parent=11 // pred_fallthru
          _
        // Predicated region
        $region17: #{decoder_block.1} parent=11 // pred_check
          %p584 = pneg %p204
        $region18: #{decoder_block.1} parent=11 // pred_check_branch
          %586 = sbr.rel (%p584) target = $region20
        $region19: #{decoder_block.1} parent=11 // pred_region
          _
        $region20: #{decoder_block.1} parent=11 // pred_fallthru
          _
        // Predicated region
        $region21: #{decoder_block.1} parent=11 // pred_check
          %p587 = pneg %p225
        $region22: #{decoder_block.1} parent=11 // pred_check_branch
          %589 = sbr.rel (%p587) target = $region24
        $region23: #{decoder_block.1} parent=11 // pred_region
          _
        $region24: #{decoder_block.1} parent=11 // pred_fallthru
          _
        // Predicated region
        $region25: #{decoder_block.1} parent=11 // pred_check
          %p590 = pneg %p246
        $region26: #{decoder_block.1} parent=11 // pred_check_branch
          %592 = sbr.rel (%p590) target = $region28
        $region27: #{decoder_block.1} parent=11 // pred_region
          _
        $region28: #{decoder_block.1} parent=11 // pred_fallthru
          _
        // Predicated region
        $region29: #{decoder_block.1} parent=11 // pred_check
          %p593 = pneg %p267
        $region30: #{decoder_block.1} parent=11 // pred_check_branch
          %595 = sbr.rel (%p593) target = $region32
        $region31: #{decoder_block.1} parent=11 // pred_region
          _
        $region32: #{decoder_block.1} parent=11 // pred_fallthru
          _
        // Predicated region
        $region33: #{decoder_block.1} parent=11 // pred_check
          %p596 = pneg %p288
        $region34: #{decoder_block.1} parent=11 // pred_check_branch
          %598 = sbr.rel (%p596) target = $region36
        $region35: #{decoder_block.1} parent=11 // pred_region
          _
        $region36: #{decoder_block.1} parent=11 // pred_fallthru
          _
        // Predicated region
        $region37: #{decoder_block.1} parent=11 // pred_check
          %p599 = pneg %p309
        $region38: #{decoder_block.1} parent=11 // pred_check_branch
          %601 = sbr.rel (%p599) target = $region40
        $region39: #{decoder_block.1} parent=11 // pred_region
          _
        $region40: #{decoder_block.1} parent=11 // pred_fallthru
          _
        // Predicated region
        $region41: #{decoder_block.1} parent=11 // pred_check
          %p602 = pneg %p330
        $region42: #{decoder_block.1} parent=11 // pred_check_branch
          %604 = sbr.rel (%p602) target = $region44
        $region43: #{decoder_block.1} parent=11 // pred_region
          _
        $region44: #{decoder_block.1} parent=11 // pred_fallthru
          _
        // Predicated region
        $region45: #{decoder_block.1} parent=11 // pred_check
          %p605 = pneg %p351
        $region46: #{decoder_block.1} parent=11 // pred_check_branch
          %607 = sbr.rel (%p605) target = $region48
        $region47: #{decoder_block.1} parent=11 // pred_region
          _
        $region48: #{decoder_block.1} parent=11 // pred_fallthru
          _
        // Predicated region
        $region49: #{decoder_block.1} parent=11 // pred_check
          %p608 = pneg %p372
        $region50: #{decoder_block.1} parent=11 // pred_check_branch
          %610 = sbr.rel (%p608) target = $region52
        $region51: #{decoder_block.1} parent=11 // pred_region
          _
        $region52: #{decoder_block.1} parent=11 // pred_fallthru
          _
        // Predicated region
        $region53: #{decoder_block.1} parent=11 // pred_check
          %p611 = pneg %p393
        $region54: #{decoder_block.1} parent=11 // pred_check_branch
          %613 = sbr.rel (%p611) target = $region56
        $region55: #{decoder_block.1} parent=11 // pred_region
          _
        $region56: #{decoder_block.1} parent=11 // pred_fallthru
          _
        // Predicated region
        $region57: #{decoder_block.1} parent=11 // pred_check
          %p614 = pneg %p414
        $region58: #{decoder_block.1} parent=11 // pred_check_branch
          %616 = sbr.rel (%p614) target = $region60
        $region59: #{decoder_block.1} parent=11 // pred_region
          _
        $region60: #{decoder_block.1} parent=11 // pred_fallthru
          _
        // Predicated region
        $region61: #{decoder_block.1} parent=11 // pred_check
          %p617 = pneg %p435
        $region62: #{decoder_block.1} parent=11 // pred_check_branch
          %619 = sbr.rel (%p617) target = $region64
        $region63: #{decoder_block.1} parent=11 // pred_region
          _
        $region64: #{decoder_block.1} parent=11 // pred_fallthru
          _
        // Predicated region
        $region65: #{decoder_block.1} parent=11 // pred_check
          %p620 = pneg %p456
        $region66: #{decoder_block.1} parent=11 // pred_check_branch
          %622 = sbr.rel (%p620) target = $region68
        $region67: #{decoder_block.1} parent=11 // pred_region
          _
        $region68: #{decoder_block.1} parent=11 // pred_fallthru
          _
        // Predicated region
        $region69: #{decoder_block.1} parent=11 // pred_check
          %p623 = pneg %p477
        $region70: #{decoder_block.1} parent=11 // pred_check_branch
          %625 = sbr.rel (%p623) target = $region72
        $region71: #{decoder_block.1} parent=11 // pred_region
          _
        $region72: #{decoder_block.1} parent=11 // pred_fallthru
          _
        // Predicated region
        $region73: #{decoder_block.1} parent=11 // pred_check
          %p626 = pneg %p498
        $region74: #{decoder_block.1} parent=11 // pred_check_branch
          %628 = sbr.rel (%p626) target = $region76
        $region75: #{decoder_block.1} parent=11 // pred_region
          _
        $region76: #{decoder_block.1} parent=11 // pred_fallthru
          _
        // Predicated region
        $region77: #{decoder_block.1} parent=11 // pred_check
          %p629 = pneg %p519
        $region78: #{decoder_block.1} parent=11 // pred_check_branch
          %631 = sbr.rel (%p629) target = $region80
        $region79: #{decoder_block.1} parent=11 // pred_region
          _
        $region80: #{decoder_block.1} parent=11 // pred_fallthru
          _
        // Predicated region
        $region81: #{decoder_block.1} parent=11 // pred_check
          %p632 = pneg %p540
        $region82: #{decoder_block.1} parent=11 // pred_check_branch
          %634 = sbr.rel (%p632) target = $region84
        $region83: #{decoder_block.1} parent=11 // pred_region
          _
        $region84: #{decoder_block.1} parent=11 // pred_fallthru
          _
      $region12: #{decoder_block.1} parent=5 // pred_fallthru
        _
      %p635 = scmp.lt.s32.totalorder %s32, 2
      // Predicated region
      $region85: #{decoder_block.1} parent=5 // pred_check
        %p636 = pneg %p635
      $region86: #{decoder_block.1} parent=5 // pred_check_branch
        %638 = sbr.rel (%p636) target = $region88
      $region87: #{decoder_block.1} parent=5 // pred_region
        // Predicated region
        $region89: #{decoder_block.1} parent=87 // pred_check
          %p639 = pneg %p52
        $region90: #{decoder_block.1} parent=87 // pred_check_branch
          %641 = sbr.rel (%p639) target = $region92
        $region91: #{decoder_block.1} parent=87 // pred_region
          %p642 = scmp.lt.s32.totalorder %s32, 1
          %s643 = scalar_select %p642, %s32, 1
          %s644 = smul.addr %s643, 4
          %s645 = scalar_lea.vmem %s0, %s644
        $region92: #{decoder_block.1} parent=87 // pred_fallthru
          _
        // Predicated region
        $region93: #{decoder_block.1} parent=87 // pred_check
          %p646 = pneg %p78
        $region94: #{decoder_block.1} parent=87 // pred_check_branch
          %648 = sbr.rel (%p646) target = $region96
        $region95: #{decoder_block.1} parent=87 // pred_region
          %p649 = scmp.lt.s32.totalorder %s32, 1
          %s650 = scalar_select %p649, %s32, 1
          %s651 = smul.addr %s650, 4
          %s652 = scalar_lea.vmem %s1, %s651
        $region96: #{decoder_block.1} parent=87 // pred_fallthru
          _
        // Predicated region
        $region97: #{decoder_block.1} parent=87 // pred_check
          %p653 = pneg %p104
        $region98: #{decoder_block.1} parent=87 // pred_check_branch
          %655 = sbr.rel (%p653) target = $region100
        $region99: #{decoder_block.1} parent=87 // pred_region
          %p656 = scmp.lt.s32.totalorder %s32, 1
          %s657 = scalar_select %p656, %s32, 1
          %s658 = smul.addr %s657, 4
          %s659 = scalar_lea.vmem %s2, %s658
        $region100: #{decoder_block.1} parent=87 // pred_fallthru
          _
        // Predicated region
        $region101: #{decoder_block.1} parent=87 // pred_check
          %p660 = pneg %p130
        $region102: #{decoder_block.1} parent=87 // pred_check_branch
          %662 = sbr.rel (%p660) target = $region104
        $region103: #{decoder_block.1} parent=87 // pred_region
          %p663 = scmp.lt.s32.totalorder %s32, 1
          %s664 = scalar_select %p663, %s32, 1
          %s665 = smul.addr %s664, 4
          %s666 = scalar_lea.vmem %s3, %s665
        $region104: #{decoder_block.1} parent=87 // pred_fallthru
          _
        // Predicated region
        $region105: #{decoder_block.1} parent=87 // pred_check
          %p667 = pneg %p156
        $region106: #{decoder_block.1} parent=87 // pred_check_branch
          %669 = sbr.rel (%p667) target = $region108
        $region107: #{decoder_block.1} parent=87 // pred_region
          %p670 = scmp.lt.s32.totalorder %s32, 1
          %s671 = scalar_select %p670, %s32, 1
          %s672 = smul.addr %s671, 4
          %s673 = scalar_lea.vmem %s4, %s672
        $region108: #{decoder_block.1} parent=87 // pred_fallthru
          _
      $region88: #{decoder_block.1} parent=5 // pred_fallthru
        _
      %p674 = scmp.le.s32.totalorder 1, %s32
      %p675 = scmp.lt.s32.totalorder %s32, 3
      %p676 = pnand %p674, %p675
      %p677 = pneg %p676
      // Predicated region
      $region109: #{decoder_block.1} parent=5 // pred_check
        _
      $region110: #{decoder_block.1} parent=5 // pred_check_branch
        %679 = sbr.rel (%p676) target = $region112
      $region111: #{decoder_block.1} parent=5 // pred_region
        %s680 = ssub.s32 %s32, 1
        %p681 = scmp.lt.s32.totalorder %s37, 1
        %s682 = scalar_select %p681, %s37, 1
        %s683 = smul.addr %s682, 4
        %s684 = scalar_lea.vmem %s0, %s683
        %p685 = pneg %p58
        %p686 = pneg %p55
        %p687 = scmp.lt.s32.totalorder %s37, 1
        %s688 = scalar_select %p687, %s37, 1
        %s689 = smul.addr %s688, 4
        %s690 = scalar_lea.vmem %s1, %s689
        %p691 = pneg %p84
        %p692 = pneg %p81
        %p693 = scmp.lt.s32.totalorder %s37, 1
        %s694 = scalar_select %p693, %s37, 1
        %s695 = smul.addr %s694, 4
        %s696 = scalar_lea.vmem %s2, %s695
        %p697 = pneg %p110
        %p698 = pneg %p107
        %p699 = scmp.lt.s32.totalorder %s37, 1
        %s700 = scalar_select %p699, %s37, 1
        %s701 = smul.addr %s700, 4
        %s702 = scalar_lea.vmem %s3, %s701
        %p703 = pneg %p136
        %p704 = pneg %p133
        %p705 = scmp.lt.s32.totalorder %s37, 1
        %s706 = scalar_select %p705, %s37, 1
        %s707 = smul.addr %s706, 4
        %s708 = scalar_lea.vmem %s4, %s707
        %p709 = pneg %p162
        %p710 = pneg %p159
        %p711 = pneg %p183
        %p712 = pneg %p180
        %p713 = pneg %p204
        %p714 = pneg %p201
        %p715 = pneg %p225
        %p716 = pneg %p222
        %p717 = pneg %p246
        %p718 = pneg %p243
        %p719 = pneg %p267
        %p720 = pneg %p264
        %p721 = pneg %p288
        %p722 = pneg %p285
        %p723 = pneg %p309
        %p724 = pneg %p306
        %p725 = pneg %p330
        %p726 = pneg %p327
        %p727 = pneg %p351
        %p728 = pneg %p348
        %p729 = pneg %p372
        %p730 = pneg %p369
        %p731 = pneg %p393
        %p732 = pneg %p390
        %p733 = pneg %p414
        %p734 = pneg %p411
        %p735 = pneg %p435
        %p736 = pneg %p432
        %p737 = pneg %p456
        %p738 = pneg %p453
        %p739 = pneg %p477
        %p740 = pneg %p474
        %p741 = pneg %p498
        %p742 = pneg %p495
        %p743 = pneg %p519
        %p744 = pneg %p516
        %p745 = pneg %p540
        %p746 = pneg %p537
        %p747 = pneg %p566
        %p748 = pneg %p563
        %s749 = sand.u32 %s553, 1
        %s750 = scalar_lea.sflag [#allocation4], %s749
        %s751 = sand.u32 %s553, 1
        %s752 = smul.addr %s751, 4
        %s753 = scalar_lea.vmem [#allocation3], %s752
        %p754 = scmp.lt.s32.totalorder %s37, 1
        %s755 = scalar_select %p754, %s37, 1
        %s756 = smul.addr %s755, 4
        %s757 = scalar_lea.vmem %s0, %s756
        %p758 = scmp.lt.s32.totalorder %s37, 1
        %s759 = scalar_select %p758, %s37, 1
        %s760 = smul.addr %s759, 4
        %s761 = scalar_lea.vmem %s1, %s760
        %p762 = scmp.lt.s32.totalorder %s37, 1
        %s763 = scalar_select %p762, %s37, 1
        %s764 = smul.addr %s763, 4
        %s765 = scalar_lea.vmem %s2, %s764
        %p766 = scmp.lt.s32.totalorder %s37, 1
        %s767 = scalar_select %p766, %s37, 1
        %s768 = smul.addr %s767, 4
        %s769 = scalar_lea.vmem %s3, %s768
        %p770 = scmp.lt.s32.totalorder %s37, 1
        %s771 = scalar_select %p770, %s37, 1
        %s772 = smul.addr %s771, 4
        %s773 = scalar_lea.vmem %s4, %s772
        %v775 = vld [vmem:[%s757] sm:$0xf]
        %v776 = vunpack.c.l.bf16 %v775
        %v777 = vld [vmem:[%s5] sm:$0xf]
        %v778 = vld [vmem:[%s5 + $0x4] sm:$0xf]
        %v779 = vld [vmem:[%s5 + $0x8] sm:$0xf]
        %v780 = vld [vmem:[%s5 + $0xc] sm:$0xf]
        %v785 = vunpack.c.l.b16 %v777
        %v786 = vunpack.c.l.b16 %v778
        %v787 = vunpack.c.l.b16 %v779
        %v788 = vunpack.c.l.b16 %v780
        %v789 = vpack.c.b16 %v786, %v785
        %v790 = vpack.c.b16 %v788, %v787
        %vm793 = vcmask 261120
        %v795 = vsel %vm793, %v775, 0
        %797 = vmatpush.bf16.msra.mxu0 0
        %798 = vmatpush.bf16.msra.mxu0 0
        %799 = vmatpush.bf16.msra.mxu0 0
        %800 = vmatpush.bf16.msra.mxu0 0
        %801 = vmatpush.bf16.msra.mxu0 0
        %802 = vmatpush.bf16.msra.mxu0 0
        %803 = vmatpush.bf16.msra.mxu0 %v790
        %804 = vmatpush.bf16.msra.mxu0 %v789
        %805 = vmatmul.bf16.gmra.mxu0 %v795
        %v806 = vpop.f32.mrf.mxu0
        %v807 = vadd.f32 0.0, %v806
        %v808 = vpop.f32.mrf.mxu0
        %809 = vdwg.mxu0
        %v810 = vld [vmem:[%s769] sm:$0xf]
        %v811 = vunpack.c.l.bf16 %v810
        %vm812 = vcmp.eq.f32.partialorder %v811, 0.0
        %v813 = vsel %vm812, -1e+20, 0.0
        %v814 = vpack.c.bf16 %v807, %v807
        %816 = vrot.lane.b32.xlu0 %v814, 96
        %v817 = vpop.permute.xlu0 %816
        %vm818 = vcmask 64512
        %v820 = vsel %vm818, %v814, 0
        %v823 = vsel %vm818, %v817, 0
        %825 = vmatpush.bf16.xpose.msra.mxu0 0
        %826 = vmatpush.bf16.xpose.msra.mxu0 0
        %827 = vmatpush.bf16.xpose.msra.mxu0 0
        %828 = vmatpush.bf16.xpose.msra.mxu0 0
        %829 = vmatpush.bf16.xpose.msra.mxu0 0
        %830 = vmatpush.bf16.xpose.msra.mxu0 0
        %831 = vmatpush.bf16.xpose.msra.mxu0 0
        %832 = vmatpush.bf16.xpose.msra.mxu0 %v823
        %833 = vmatmul.bf16.gmra.mxu0 %v820
        %v834 = vpop.f32.mrf.mxu0
        %v835 = vadd.f32 %v813, %v834
        %v836 = vpop.f32.mrf.mxu0
        %837 = vdwg.mxu0
        %v838 = vsel %vm818, %v835, -inf
        %839 = vmax.xlane.f32.xlu0 %v838
        %v840 = vpop.xlane.xlu0 %839
        %v841 = vsub.f32 %v835, %v840
        %v842 = vmul.f32 %v841, 1.442695
        %v843 = vpow.pop %v842
        %v844 = vsel %vm818, %v843, 0.0
        %845 = vadd.xlane.f32.xlu0 %v844
        %v846 = vpop.xlane.xlu0 %845
        %v847 = vrcp.pop %v846
        %v848 = vmul.f32 %v843, %v847
        %v849 = vpack.c.bf16 %v848, %v848
        %850 = vrot.lane.b32.xlu0 %v814, 64
        %v851 = vpop.permute.xlu0 %850
        %v853 = vsel %vm818, %v849, 0
        %vm855 = vcmask 1043456
        %v857 = vsel %vm855, %v851, 0
        %859 = vmatpush.bf16.msra.mxu0 0
        %860 = vmatpush.bf16.msra.mxu0 0
        %861 = vmatpush.bf16.msra.mxu0 0
        %862 = vmatpush.bf16.msra.mxu0 0
        %863 = vmatpush.bf16.msra.mxu0 0
        %864 = vmatpush.bf16.msra.mxu0 0
        %865 = vmatpush.bf16.msra.mxu0 0
        %866 = vmatpush.bf16.msra.mxu0 %v857
        %867 = vmatmul.bf16.gmra.mxu0 %v853
        %v868 = vpop.f32.mrf.mxu0
        %v869 = vadd.f32 0.0, %v868
        %v870 = vpop.f32.mrf.mxu0
        %871 = vdwg.mxu0
        %872 = vst.msk [vmem:[#allocation2] sm:$0xff] %vm818, %v869
        %873 = vrot.lane.b32.xlu0 %v814, 120
        %v874 = vpop.permute.xlu0 %873
        %875 = vrot.lane.b32.xlu0 %v814, 88
        %v876 = vpop.permute.xlu0 %875
        %v878 = vsel %vm818, %v874, 0
        %v881 = vsel %vm818, %v876, 0
        %883 = vmatpush.bf16.xpose.msra.mxu0 0
        %884 = vmatpush.bf16.xpose.msra.mxu0 0
        %885 = vmatpush.bf16.xpose.msra.mxu0 0
        %886 = vmatpush.bf16.xpose.msra.mxu0 0
        %887 = vmatpush.bf16.xpose.msra.mxu0 0
        %888 = vmatpush.bf16.xpose.msra.mxu0 0
        %889 = vmatpush.bf16.xpose.msra.mxu0 0
        %890 = vmatpush.bf16.xpose.msra.mxu0 %v881
        %891 = vmatmul.bf16.gmra.mxu0 %v878
        %v892 = vpop.f32.mrf.mxu0
        %v893 = vadd.f32 %v813, %v892
        %v894 = vpop.f32.mrf.mxu0
        %895 = vdwg.mxu0
        %v896 = vsel %vm818, %v893, -inf
        %897 = vmax.xlane.f32.xlu0 %v896
        %v898 = vpop.xlane.xlu0 %897
        %v899 = vsub.f32 %v893, %v898
        %v900 = vmul.f32 %v899, 1.442695
        %v901 = vpow.pop %v900
        %v902 = vsel %vm818, %v901, 0.0
        %903 = vadd.xlane.f32.xlu0 %v902
        %v904 = vpop.xlane.xlu0 %903
        %v905 = vrcp.pop %v904
        %v906 = vmul.f32 %v901, %v905
        %v907 = vpack.c.bf16 %v906, %v906
        %908 = vrot.lane.b32.xlu0 %v814, 56
        %v909 = vpop.permute.xlu0 %908
        %v911 = vsel %vm818, %v907, 0
        %v914 = vsel %vm855, %v909, 0
        %916 = vmatpush.bf16.msra.mxu0 0
        %917 = vmatpush.bf16.msra.mxu0 0
        %918 = vmatpush.bf16.msra.mxu0 0
        %919 = vmatpush.bf16.msra.mxu0 0
        %920 = vmatpush.bf16.msra.mxu0 0
        %921 = vmatpush.bf16.msra.mxu0 0
        %922 = vmatpush.bf16.msra.mxu0 0
        %923 = vmatpush.bf16.msra.mxu0 %v914
        %924 = vmatmul.bf16.gmra.mxu0 %v911
        %v925 = vpop.f32.mrf.mxu0
        %v926 = vadd.f32 0.0, %v925
        %v927 = vpop.f32.mrf.mxu0
        %928 = vdwg.mxu0
        %930 = vrot.lane.b32.xlu0 %v926, 8
        %v931 = vpop.permute.xlu0 %930
        %vm933 = vcmask 130112
        %934 = vst.msk [vmem:[#allocation2] sm:$0xff] %vm933, %v931
        %935 = vrot.lane.b32.xlu0 %v814, 112
        %v936 = vpop.permute.xlu0 %935
        %937 = vrot.lane.b32.xlu0 %v814, 80
        %v938 = vpop.permute.xlu0 %937
        %v940 = vsel %vm818, %v936, 0
        %v943 = vsel %vm818, %v938, 0
        %945 = vmatpush.bf16.xpose.msra.mxu0 0
        %946 = vmatpush.bf16.xpose.msra.mxu0 0
        %947 = vmatpush.bf16.xpose.msra.mxu0 0
        %948 = vmatpush.bf16.xpose.msra.mxu0 0
        %949 = vmatpush.bf16.xpose.msra.mxu0 0
        %950 = vmatpush.bf16.xpose.msra.mxu0 0
        %951 = vmatpush.bf16.xpose.msra.mxu0 0
        %952 = vmatpush.bf16.xpose.msra.mxu0 %v943
        %953 = vmatmul.bf16.gmra.mxu0 %v940
        %v954 = vpop.f32.mrf.mxu0
        %v955 = vadd.f32 %v813, %v954
        %v956 = vpop.f32.mrf.mxu0
        %957 = vdwg.mxu0
        %v958 = vsel %vm818, %v955, -inf
        %959 = vmax.xlane.f32.xlu0 %v958
        %v960 = vpop.xlane.xlu0 %959
        %v961 = vsub.f32 %v955, %v960
        %v962 = vmul.f32 %v961, 1.442695
        %v963 = vpow.pop %v962
        %v964 = vsel %vm818, %v963, 0.0
        %965 = vadd.xlane.f32.xlu0 %v964
        %v966 = vpop.xlane.xlu0 %965
        %v967 = vrcp.pop %v966
        %v968 = vmul.f32 %v963, %v967
        %v969 = vpack.c.bf16 %v968, %v968
        %970 = vrot.lane.b32.xlu0 %v814, 48
        %v971 = vpop.permute.xlu0 %970
        %v973 = vsel %vm818, %v969, 0
        %v976 = vsel %vm855, %v971, 0
        %978 = vmatpush.bf16.msra.mxu0 0
        %979 = vmatpush.bf16.msra.mxu0 0
        %980 = vmatpush.bf16.msra.mxu0 0
        %981 = vmatpush.bf16.msra.mxu0 0
        %982 = vmatpush.bf16.msra.mxu0 0
        %983 = vmatpush.bf16.msra.mxu0 0
        %984 = vmatpush.bf16.msra.mxu0 0
        %985 = vmatpush.bf16.msra.mxu0 %v976
        %986 = vmatmul.bf16.gmra.mxu0 %v973
        %v987 = vpop.f32.mrf.mxu0
        %v988 = vadd.f32 0.0, %v987
        %v989 = vpop.f32.mrf.mxu0
        %990 = vdwg.mxu0
        %992 = vrot.lane.b32.xlu0 %v988, 16
        %v993 = vpop.permute.xlu0 %992
        %vm995 = vcmask 195712
        %996 = vst.msk [vmem:[#allocation2] sm:$0xff] %vm995, %v993
        %997 = vrot.lane.b32.xlu0 %v814, 104
        %v998 = vpop.permute.xlu0 %997
        %999 = vrot.lane.b32.xlu0 %v814, 72
        %v1000 = vpop.permute.xlu0 %999
        %v1002 = vsel %vm818, %v998, 0
        %v1005 = vsel %vm818, %v1000, 0
        %1007 = vmatpush.bf16.xpose.msra.mxu0 0
        %1008 = vmatpush.bf16.xpose.msra.mxu0 0
        %1009 = vmatpush.bf16.xpose.msra.mxu0 0
        %1010 = vmatpush.bf16.xpose.msra.mxu0 0
        %1011 = vmatpush.bf16.xpose.msra.mxu0 0
        %1012 = vmatpush.bf16.xpose.msra.mxu0 0
        %1013 = vmatpush.bf16.xpose.msra.mxu0 0
        %1014 = vmatpush.bf16.xpose.msra.mxu0 %v1005
        %1015 = vmatmul.bf16.gmra.mxu0 %v1002
        %v1016 = vpop.f32.mrf.mxu0
        %v1017 = vadd.f32 %v813, %v1016
        %v1018 = vpop.f32.mrf.mxu0
        %1019 = vdwg.mxu0
        %v1020 = vsel %vm818, %v1017, -inf
        %1021 = vmax.xlane.f32.xlu0 %v1020
        %v1022 = vpop.xlane.xlu0 %1021
        %v1023 = vsub.f32 %v1017, %v1022
        %v1024 = vmul.f32 %v1023, 1.442695
        %v1025 = vpow.pop %v1024
        %v1026 = vsel %vm818, %v1025, 0.0
        %1027 = vadd.xlane.f32.xlu0 %v1026
        %v1028 = vpop.xlane.xlu0 %1027
        %v1029 = vrcp.pop %v1028
        %v1030 = vmul.f32 %v1025, %v1029
        %v1031 = vpack.c.bf16 %v1030, %v1030
        %1032 = vrot.lane.b32.xlu0 %v814, 40
        %v1033 = vpop.permute.xlu0 %1032
        %v1035 = vsel %vm818, %v1031, 0
        %v1038 = vsel %vm855, %v1033, 0
        %1040 = vmatpush.bf16.msra.mxu0 0
        %1041 = vmatpush.bf16.msra.mxu0 0
        %1042 = vmatpush.bf16.msra.mxu0 0
        %1043 = vmatpush.bf16.msra.mxu0 0
        %1044 = vmatpush.bf16.msra.mxu0 0
        %1045 = vmatpush.bf16.msra.mxu0 0
        %1046 = vmatpush.bf16.msra.mxu0 0
        %1047 = vmatpush.bf16.msra.mxu0 %v1038
        %1048 = vmatmul.bf16.gmra.mxu0 %v1035
        %v1049 = vpop.f32.mrf.mxu0
        %v1050 = vadd.f32 0.0, %v1049
        %v1051 = vpop.f32.mrf.mxu0
        %1052 = vdwg.mxu0
        %1054 = vrot.lane.b32.xlu0 %v1050, 24
        %v1055 = vpop.permute.xlu0 %1054
        %vm1057 = vcmask 261312
        %1058 = vst.msk [vmem:[#allocation2] sm:$0xff] %vm1057, %v1055
        %v1059 = vld [vmem:[#allocation2] sm:$0xff]
        %v1060 = vpack.c.bf16 %v1059, %v1059
        %v1061 = vld [vmem:[%s6] sm:$0xf]
        %v1062 = vld [vmem:[%s6 + $0x4] sm:$0xf]
        %v1063 = vld [vmem:[%s6 + $0x8] sm:$0xf]
        %v1064 = vld [vmem:[%s6 + $0xc] sm:$0xf]
        %v1065 = vld [vmem:[%s7] sm:$0x1]
        %v1067 = vperm.slane %v1065, 0
        %v1073 = vunpack.c.l.b16 %v1061
        %v1074 = vunpack.c.l.b16 %v1062
        %v1075 = vunpack.c.l.b16 %v1063
        %v1076 = vunpack.c.l.b16 %v1064
        %v1077 = vpack.c.b16 %v1074, %v1073
        %v1078 = vpack.c.b16 %v1076, %v1075
        %v1082 = vsel %vm793, %v1060, 0
        %1084 = vmatpush.bf16.msra.mxu0 0
        %1085 = vmatpush.bf16.msra.mxu0 0
        %1086 = vmatpush.bf16.msra.mxu0 0
        %1087 = vmatpush.bf16.msra.mxu0 0
        %1088 = vmatpush.bf16.msra.mxu0 0
        %1089 = vmatpush.bf16.msra.mxu0 0
        %1090 = vmatpush.bf16.msra.mxu0 %v1078
        %1091 = vmatpush.bf16.msra.mxu0 %v1077
        %1092 = vmatmul.bf16.gmra.mxu0 %v1082
        %v1093 = vpop.f32.mrf.mxu0
        %v1094 = vadd.f32 %v1067, %v1093
        %v1095 = vpop.f32.mrf.mxu0
        %1096 = vdwg.mxu0
        %v1097 = vadd.f32 %v1094, %v776
        %v1098 = vld [vmem:[%s8] sm:$0x1]
        %v1099 = vld [vmem:[%s9] sm:$0x1]
        %v1100 = vsel %vm793, %v1097, 0.0
        %1101 = vadd.xlane.f32.xlu0 %v1100
        %v1102 = vpop.xlane.xlu0 %1101
        %v1103 = vmul.f32 %v1102, 0.03125
        %v1104 = vsub.f32 %v1097, %v1103
        %v1105 = vmul.f32 %v1104, %v1104
        %v1106 = vsel %vm793, %v1105, 0.0
        %1107 = vadd.xlane.f32.xlu0 %v1106
        %v1108 = vpop.xlane.xlu0 %1107
        %v1109 = vmul.f32 %v1108, 0.03125
        %v1110 = vadd.f32 %v1109, 1e-05
        %v1111 = vrsqrt.pop %v1110
        %v1112 = vmul.f32 %v1111, %v1110
        %v1113 = vmul.f32 %v1112, %v1111
        %v1114 = vmul.f32 0.5, %v1113
        %v1115 = vsub.f32 1.5, %v1114
        %v1116 = vmul.f32 %v1111, %v1115
        %vm1117 = vweird.f32 %v1110
        %vm1118 = vweird.f32 %v1111
        %vm1119 = vmor %vm1117, %vm1118
        %v1120 = vsel %vm1119, %v1111, %v1116
        %v1121 = vmul.f32 %v1104, %v1120
        %v1123 = vperm.slane %v1098, 0
        %v1125 = vmul.f32 %v1121, %v1123
        %v1127 = vperm.slane %v1099, 0
        %v1129 = vadd.f32 %v1125, %v1127
        %v1130 = vpack.c.bf16 %v1129, %v1129
        %v1131 = vld [vmem:[%s10] sm:$0xf]
        %v1132 = vld [vmem:[%s10 + $0x4] sm:$0xf]
        %v1133 = vld [vmem:[%s10 + $0x8] sm:$0xf]
        %v1134 = vld [vmem:[%s10 + $0xc] sm:$0xf]
        %v1139 = vunpack.c.l.b16 %v1131
        %v1140 = vunpack.c.l.b16 %v1132
        %v1141 = vunpack.c.l.b16 %v1133
        %v1142 = vunpack.c.l.b16 %v1134
        %v1143 = vpack.c.b16 %v1140, %v1139
        %v1144 = vpack.c.b16 %v1142, %v1141
        %v1148 = vsel %vm793, %v1130, 0
        %1150 = vmatpush.bf16.msra.mxu0 0
        %1151 = vmatpush.bf16.msra.mxu0 0
        %1152 = vmatpush.bf16.msra.mxu0 0
        %1153 = vmatpush.bf16.msra.mxu0 0
        %1154 = vmatpush.bf16.msra.mxu0 0
        %1155 = vmatpush.bf16.msra.mxu0 0
        %1156 = vmatpush.bf16.msra.mxu0 %v1144
        %1157 = vmatpush.bf16.msra.mxu0 %v1143
        %1158 = vmatmul.bf16.gmra.mxu0 %v1148
        %v1159 = vpop.f32.mrf.mxu0
        %v1160 = vadd.f32 0.0, %v1159
        %v1161 = vpop.f32.mrf.mxu0
        %1162 = vdwg.mxu0
        %v1163 = vld [vmem:[%s765] sm:$0xf]
        %v1164 = vld [vmem:[%s11] sm:$0xf]
        %v1165 = vld [vmem:[%s11 + $0x4] sm:$0xf]
        %v1166 = vld [vmem:[%s11 + $0x8] sm:$0xf]
        %v1167 = vld [vmem:[%s11 + $0xc] sm:$0xf]
        %v1172 = vunpack.c.l.b16 %v1164
        %v1173 = vunpack.c.l.b16 %v1165
        %v1174 = vunpack.c.l.b16 %v1166
        %v1175 = vunpack.c.l.b16 %v1167
        %v1176 = vpack.c.b16 %v1173, %v1172
        %v1177 = vpack.c.b16 %v1175, %v1174
        %v1181 = vsel %vm793, %v1163, 0
        %1183 = vmatpush.bf16.msra.mxu0 0
        %1184 = vmatpush.bf16.msra.mxu0 0
        %1185 = vmatpush.bf16.msra.mxu0 0
        %1186 = vmatpush.bf16.msra.mxu0 0
        %1187 = vmatpush.bf16.msra.mxu0 0
        %1188 = vmatpush.bf16.msra.mxu0 0
        %1189 = vmatpush.bf16.msra.mxu0 %v1177
        %1190 = vmatpush.bf16.msra.mxu0 %v1176
        %1191 = vmatmul.bf16.gmra.mxu0 %v1181
        %v1192 = vpop.f32.mrf.mxu0
        %v1193 = vadd.f32 0.0, %v1192
        %v1194 = vpop.f32.mrf.mxu0
        %1195 = vdwg.mxu0
        %v1196 = vld [vmem:[%s761] sm:$0xf]
        %v1197 = vld [vmem:[%s12] sm:$0xf]
        %v1198 = vld [vmem:[%s12 + $0x4] sm:$0xf]
        %v1199 = vld [vmem:[%s12 + $0x8] sm:$0xf]
        %v1200 = vld [vmem:[%s12 + $0xc] sm:$0xf]
        %v1205 = vunpack.c.l.b16 %v1197
        %v1206 = vunpack.c.l.b16 %v1198
        %v1207 = vunpack.c.l.b16 %v1199
        %v1208 = vunpack.c.l.b16 %v1200
        %v1209 = vpack.c.b16 %v1206, %v1205
        %v1210 = vpack.c.b16 %v1208, %v1207
        %v1214 = vsel %vm793, %v1196, 0
        %1216 = vmatpush.bf16.msra.mxu0 0
        %1217 = vmatpush.bf16.msra.mxu0 0
        %1218 = vmatpush.bf16.msra.mxu0 0
        %1219 = vmatpush.bf16.msra.mxu0 0
        %1220 = vmatpush.bf16.msra.mxu0 0
        %1221 = vmatpush.bf16.msra.mxu0 0
        %1222 = vmatpush.bf16.msra.mxu0 %v1210
        %1223 = vmatpush.bf16.msra.mxu0 %v1209
        %1224 = vmatmul.bf16.gmra.mxu0 %v1214
        %v1225 = vpop.f32.mrf.mxu0
        %v1226 = vadd.f32 0.0, %v1225
        %v1227 = vpop.f32.mrf.mxu0
        %1228 = vdwg.mxu0
        %v1229 = vld [vmem:[%s773] sm:$0xf]
        %v1230 = vunpack.c.l.bf16 %v1229
        %vm1231 = vcmp.eq.f32.partialorder %v1230, 0.0
        %v1232 = vsel %vm1231, -1e+20, 0.0
        %v1233 = vpack.c.bf16 %v1160, %v1160
        %v1234 = vpack.c.bf16 %v1193, %v1193
        %v1235 = vpack.c.bf16 %v1226, %v1226
        %v1237 = vsel %vm818, %v1233, 0
        %v1240 = vsel %vm818, %v1234, 0
        %1242 = vmatpush.bf16.xpose.msra.mxu0 0
        %1243 = vmatpush.bf16.xpose.msra.mxu0 0
        %1244 = vmatpush.bf16.xpose.msra.mxu0 0
        %1245 = vmatpush.bf16.xpose.msra.mxu0 0
        %1246 = vmatpush.bf16.xpose.msra.mxu0 0
        %1247 = vmatpush.bf16.xpose.msra.mxu0 0
        %1248 = vmatpush.bf16.xpose.msra.mxu0 0
        %1249 = vmatpush.bf16.xpose.msra.mxu0 %v1240
        %1250 = vmatmul.bf16.gmra.mxu0 %v1237
        %v1251 = vpop.f32.mrf.mxu0
        %v1252 = vadd.f32 %v1232, %v1251
        %v1253 = vpop.f32.mrf.mxu0
        %1254 = vdwg.mxu0
        %v1255 = vsel %vm818, %v1252, -inf
        %1256 = vmax.xlane.f32.xlu0 %v1255
        %v1257 = vpop.xlane.xlu0 %1256
        %v1258 = vsub.f32 %v1252, %v1257
        %v1259 = vmul.f32 %v1258, 1.442695
        %v1260 = vpow.pop %v1259
        %v1261 = vsel %vm818, %v1260, 0.0
        %1262 = vadd.xlane.f32.xlu0 %v1261
        %v1263 = vpop.xlane.xlu0 %1262
        %v1264 = vrcp.pop %v1263
        %v1265 = vmul.f32 %v1260, %v1264
        %v1266 = vpack.c.bf16 %v1265, %v1265
        %v1268 = vsel %vm818, %v1266, 0
        %v1271 = vsel %vm855, %v1235, 0
        %1273 = vmatpush.bf16.msra.mxu0 0
        %1274 = vmatpush.bf16.msra.mxu0 0
        %1275 = vmatpush.bf16.msra.mxu0 0
        %1276 = vmatpush.bf16.msra.mxu0 0
        %1277 = vmatpush.bf16.msra.mxu0 0
        %1278 = vmatpush.bf16.msra.mxu0 0
        %1279 = vmatpush.bf16.msra.mxu0 0
        %1280 = vmatpush.bf16.msra.mxu0 %v1271
        %1281 = vmatmul.bf16.gmra.mxu0 %v1268
        %v1282 = vpop.f32.mrf.mxu0
        %v1283 = vadd.f32 0.0, %v1282
        %v1284 = vpop.f32.mrf.mxu0
        %1285 = vdwg.mxu0
        %1286 = vst.msk [vmem:[#allocation2] sm:$0xff] %vm818, %v1283
        %1288 = vrot.lane.b32.xlu0 %v1233, 120
        %v1289 = vpop.permute.xlu0 %1288
        %1291 = vrot.lane.b32.xlu0 %v1234, 120
        %v1292 = vpop.permute.xlu0 %1291
        %v1294 = vsel %vm818, %v1289, 0
        %v1297 = vsel %vm818, %v1292, 0
        %1299 = vmatpush.bf16.xpose.msra.mxu0 0
        %1300 = vmatpush.bf16.xpose.msra.mxu0 0
        %1301 = vmatpush.bf16.xpose.msra.mxu0 0
        %1302 = vmatpush.bf16.xpose.msra.mxu0 0
        %1303 = vmatpush.bf16.xpose.msra.mxu0 0
        %1304 = vmatpush.bf16.xpose.msra.mxu0 0
        %1305 = vmatpush.bf16.xpose.msra.mxu0 0
        %1306 = vmatpush.bf16.xpose.msra.mxu0 %v1297
        %1307 = vmatmul.bf16.gmra.mxu0 %v1294
        %v1308 = vpop.f32.mrf.mxu0
        %v1309 = vadd.f32 %v1232, %v1308
        %v1310 = vpop.f32.mrf.mxu0
        %1311 = vdwg.mxu0
        %v1312 = vsel %vm818, %v1309, -inf
        %1313 = vmax.xlane.f32.xlu0 %v1312
        %v1314 = vpop.xlane.xlu0 %1313
        %v1315 = vsub.f32 %v1309, %v1314
        %v1316 = vmul.f32 %v1315, 1.442695
        %v1317 = vpow.pop %v1316
        %v1318 = vsel %vm818, %v1317, 0.0
        %1319 = vadd.xlane.f32.xlu0 %v1318
        %v1320 = vpop.xlane.xlu0 %1319
        %v1321 = vrcp.pop %v1320
        %v1322 = vmul.f32 %v1317, %v1321
        %v1323 = vpack.c.bf16 %v1322, %v1322
        %1325 = vrot.lane.b32.xlu0 %v1235, 120
        %v1326 = vpop.permute.xlu0 %1325
        %v1328 = vsel %vm818, %v1323, 0
        %v1331 = vsel %vm855, %v1326, 0
        %1333 = vmatpush.bf16.msra.mxu0 0
        %1334 = vmatpush.bf16.msra.mxu0 0
        %1335 = vmatpush.bf16.msra.mxu0 0
        %1336 = vmatpush.bf16.msra.mxu0 0
        %1337 = vmatpush.bf16.msra.mxu0 0
        %1338 = vmatpush.bf16.msra.mxu0 0
        %1339 = vmatpush.bf16.msra.mxu0 0
        %1340 = vmatpush.bf16.msra.mxu0 %v1331
        %1341 = vmatmul.bf16.gmra.mxu0 %v1328
        %v1342 = vpop.f32.mrf.mxu0
        %v1343 = vadd.f32 0.0, %v1342
        %v1344 = vpop.f32.mrf.mxu0
        %1345 = vdwg.mxu0
        %1347 = vrot.lane.b32.xlu0 %v1343, 8
        %v1348 = vpop.permute.xlu0 %1347
        %1350 = vst.msk [vmem:[#allocation2] sm:$0xff] %vm933, %v1348
        %1351 = vrot.lane.b32.xlu0 %v1233, 112
        %v1352 = vpop.permute.xlu0 %1351
        %1353 = vrot.lane.b32.xlu0 %v1234, 112
        %v1354 = vpop.permute.xlu0 %1353
        %v1356 = vsel %vm818, %v1352, 0
        %v1359 = vsel %vm818, %v1354, 0
        %1361 = vmatpush.bf16.xpose.msra.mxu0 0
        %1362 = vmatpush.bf16.xpose.msra.mxu0 0
        %1363 = vmatpush.bf16.xpose.msra.mxu0 0
        %1364 = vmatpush.bf16.xpose.msra.mxu0 0
        %1365 = vmatpush.bf16.xpose.msra.mxu0 0
        %1366 = vmatpush.bf16.xpose.msra.mxu0 0
        %1367 = vmatpush.bf16.xpose.msra.mxu0 0
        %1368 = vmatpush.bf16.xpose.msra.mxu0 %v1359
        %1369 = vmatmul.bf16.gmra.mxu0 %v1356
        %v1370 = vpop.f32.mrf.mxu0
        %v1371 = vadd.f32 %v1232, %v1370
        %v1372 = vpop.f32.mrf.mxu0
        %1373 = vdwg.mxu0
        %v1374 = vsel %vm818, %v1371, -inf
        %1375 = vmax.xlane.f32.xlu0 %v1374
        %v1376 = vpop.xlane.xlu0 %1375
        %v1377 = vsub.f32 %v1371, %v1376
        %v1378 = vmul.f32 %v1377, 1.442695
        %v1379 = vpow.pop %v1378
        %v1380 = vsel %vm818, %v1379, 0.0
        %1381 = vadd.xlane.f32.xlu0 %v1380
        %v1382 = vpop.xlane.xlu0 %1381
        %v1383 = vrcp.pop %v1382
        %v1384 = vmul.f32 %v1379, %v1383
        %v1385 = vpack.c.bf16 %v1384, %v1384
        %1386 = vrot.lane.b32.xlu0 %v1235, 112
        %v1387 = vpop.permute.xlu0 %1386
        %v1389 = vsel %vm818, %v1385, 0
        %v1392 = vsel %vm855, %v1387, 0
        %1394 = vmatpush.bf16.msra.mxu0 0
        %1395 = vmatpush.bf16.msra.mxu0 0
        %1396 = vmatpush.bf16.msra.mxu0 0
        %1397 = vmatpush.bf16.msra.mxu0 0
        %1398 = vmatpush.bf16.msra.mxu0 0
        %1399 = vmatpush.bf16.msra.mxu0 0
        %1400 = vmatpush.bf16.msra.mxu0 0
        %1401 = vmatpush.bf16.msra.mxu0 %v1392
        %1402 = vmatmul.bf16.gmra.mxu0 %v1389
        %v1403 = vpop.f32.mrf.mxu0
        %v1404 = vadd.f32 0.0, %v1403
        %v1405 = vpop.f32.mrf.mxu0
        %1406 = vdwg.mxu0
        %1408 = vrot.lane.b32.xlu0 %v1404, 16
        %v1409 = vpop.permute.xlu0 %1408
        %1411 = vst.msk [vmem:[#allocation2] sm:$0xff] %vm995, %v1409
        %1412 = vrot.lane.b32.xlu0 %v1233, 104
        %v1413 = vpop.permute.xlu0 %1412
        %1414 = vrot.lane.b32.xlu0 %v1234, 104
        %v1415 = vpop.permute.xlu0 %1414
        %v1417 = vsel %vm818, %v1413, 0
        %v1420 = vsel %vm818, %v1415, 0
        %1422 = vmatpush.bf16.xpose.msra.mxu0 0
        %1423 = vmatpush.bf16.xpose.msra.mxu0 0
        %1424 = vmatpush.bf16.xpose.msra.mxu0 0
        %1425 = vmatpush.bf16.xpose.msra.mxu0 0
        %1426 = vmatpush.bf16.xpose.msra.mxu0 0
        %1427 = vmatpush.bf16.xpose.msra.mxu0 0
        %1428 = vmatpush.bf16.xpose.msra.mxu0 0
        %1429 = vmatpush.bf16.xpose.msra.mxu0 %v1420
        %1430 = vmatmul.bf16.gmra.mxu0 %v1417
        %v1431 = vpop.f32.mrf.mxu0
        %v1432 = vadd.f32 %v1232, %v1431
        %v1433 = vpop.f32.mrf.mxu0
        %1434 = vdwg.mxu0
        %v1435 = vsel %vm818, %v1432, -inf
        %1436 = vmax.xlane.f32.xlu0 %v1435
        %v1437 = vpop.xlane.xlu0 %1436
        %v1438 = vsub.f32 %v1432, %v1437
        %v1439 = vmul.f32 %v1438, 1.442695
        %v1440 = vpow.pop %v1439
        %v1441 = vsel %vm818, %v1440, 0.0
        %1442 = vadd.xlane.f32.xlu0 %v1441
        %v1443 = vpop.xlane.xlu0 %1442
        %v1444 = vrcp.pop %v1443
        %v1445 = vmul.f32 %v1440, %v1444
        %v1446 = vpack.c.bf16 %v1445, %v1445
        %1447 = vrot.lane.b32.xlu0 %v1235, 104
        %v1448 = vpop.permute.xlu0 %1447
        %v1450 = vsel %vm818, %v1446, 0
        %v1453 = vsel %vm855, %v1448, 0
        %1455 = vmatpush.bf16.msra.mxu0 0
        %1456 = vmatpush.bf16.msra.mxu0 0
        %1457 = vmatpush.bf16.msra.mxu0 0
        %1458 = vmatpush.bf16.msra.mxu0 0
        %1459 = vmatpush.bf16.msra.mxu0 0
        %1460 = vmatpush.bf16.msra.mxu0 0
        %1461 = vmatpush.bf16.msra.mxu0 0
        %1462 = vmatpush.bf16.msra.mxu0 %v1453
        %1463 = vmatmul.bf16.gmra.mxu0 %v1450
        %v1464 = vpop.f32.mrf.mxu0
        %v1465 = vadd.f32 0.0, %v1464
        %v1466 = vpop.f32.mrf.mxu0
        %1467 = vdwg.mxu0
        %1469 = vrot.lane.b32.xlu0 %v1465, 24
        %v1470 = vpop.permute.xlu0 %1469
        %1472 = vst.msk [vmem:[#allocation2] sm:$0xff] %vm1057, %v1470
        %v1473 = vld [vmem:[#allocation2] sm:$0xff]
        %v1474 = vpack.c.bf16 %v1473, %v1473
        %v1475 = vld [vmem:[%s13] sm:$0xf]
        %v1476 = vld [vmem:[%s13 + $0x4] sm:$0xf]
        %v1477 = vld [vmem:[%s13 + $0x8] sm:$0xf]
        %v1478 = vld [vmem:[%s13 + $0xc] sm:$0xf]
        %v1479 = vld [vmem:[%s14] sm:$0x1]
        %v1481 = vperm.slane %v1479, 0
        %v1487 = vunpack.c.l.b16 %v1475
        %v1488 = vunpack.c.l.b16 %v1476
        %v1489 = vunpack.c.l.b16 %v1477
        %v1490 = vunpack.c.l.b16 %v1478
        %v1491 = vpack.c.b16 %v1488, %v1487
        %v1492 = vpack.c.b16 %v1490, %v1489
        %v1496 = vsel %vm793, %v1474, 0
        %1498 = vmatpush.bf16.msra.mxu0 0
        %1499 = vmatpush.bf16.msra.mxu0 0
        %1500 = vmatpush.bf16.msra.mxu0 0
        %1501 = vmatpush.bf16.msra.mxu0 0
        %1502 = vmatpush.bf16.msra.mxu0 0
        %1503 = vmatpush.bf16.msra.mxu0 0
        %1504 = vmatpush.bf16.msra.mxu0 %v1492
        %1505 = vmatpush.bf16.msra.mxu0 %v1491
        %1506 = vmatmul.bf16.gmra.mxu0 %v1496
        %v1507 = vpop.f32.mrf.mxu0
        %v1508 = vadd.f32 %v1481, %v1507
        %v1509 = vpop.f32.mrf.mxu0
        %1510 = vdwg.mxu0
        %v1511 = vadd.f32 %v1508, %v1129
        %v1512 = vld [vmem:[%s15] sm:$0x1]
        %v1513 = vld [vmem:[%s16] sm:$0x1]
        %v1514 = vsel %vm793, %v1511, 0.0
        %1515 = vadd.xlane.f32.xlu0 %v1514
        %v1516 = vpop.xlane.xlu0 %1515
        %v1517 = vmul.f32 %v1516, 0.03125
        %v1518 = vsub.f32 %v1511, %v1517
        %v1519 = vmul.f32 %v1518, %v1518
        %v1520 = vsel %vm793, %v1519, 0.0
        %1521 = vadd.xlane.f32.xlu0 %v1520
        %v1522 = vpop.xlane.xlu0 %1521
        %v1523 = vmul.f32 %v1522, 0.03125
        %v1524 = vadd.f32 %v1523, 1e-05
        %v1525 = vrsqrt.pop %v1524
        %v1526 = vmul.f32 %v1525, %v1524
        %v1527 = vmul.f32 %v1526, %v1525
        %v1528 = vmul.f32 0.5, %v1527
        %v1529 = vsub.f32 1.5, %v1528
        %v1530 = vmul.f32 %v1525, %v1529
        %vm1531 = vweird.f32 %v1524
        %vm1532 = vweird.f32 %v1525
        %vm1533 = vmor %vm1531, %vm1532
        %v1534 = vsel %vm1533, %v1525, %v1530
        %v1535 = vmul.f32 %v1518, %v1534
        %v1537 = vperm.slane %v1512, 0
        %v1539 = vmul.f32 %v1535, %v1537
        %v1541 = vperm.slane %v1513, 0
        %v1543 = vadd.f32 %v1539, %v1541
        %v1544 = vpack.c.bf16 %v1543, %v1543
        %v1545 = vld [vmem:[%s17] sm:$0xf]
        %v1546 = vld [vmem:[%s17 + $0x4] sm:$0xf]
        %v1547 = vld [vmem:[%s17 + $0x8] sm:$0xf]
        %v1548 = vld [vmem:[%s17 + $0xc] sm:$0xf]
        %v1549 = vld [vmem:[%s18] sm:$0x1]
        %v1551 = vperm.slane %v1549, 0
        %v1557 = vunpack.c.l.b16 %v1545
        %v1558 = vunpack.c.l.b16 %v1546
        %v1559 = vunpack.c.l.b16 %v1547
        %v1560 = vunpack.c.l.b16 %v1548
        %v1561 = vpack.c.b16 %v1558, %v1557
        %v1562 = vpack.c.b16 %v1560, %v1559
        %v1566 = vsel %vm793, %v1544, 0
        %1568 = vmatpush.bf16.msra.mxu0 0
        %1569 = vmatpush.bf16.msra.mxu0 0
        %1570 = vmatpush.bf16.msra.mxu0 0
        %1571 = vmatpush.bf16.msra.mxu0 0
        %1572 = vmatpush.bf16.msra.mxu0 0
        %1573 = vmatpush.bf16.msra.mxu0 0
        %1574 = vmatpush.bf16.msra.mxu0 %v1562
        %1575 = vmatpush.bf16.msra.mxu0 %v1561
        %1576 = vmatmul.bf16.gmra.mxu0 %v1566
        %v1577 = vpop.f32.mrf.mxu0
        %v1578 = vadd.f32 %v1551, %v1577
        %v1579 = vpop.f32.mrf.mxu0
        %1580 = vdwg.mxu0
        %v1581 = vmax.f32 %v1578, 0.0
        %v1582 = vpack.c.bf16 %v1581, %v1581
        %v1583 = vld [vmem:[%s19] sm:$0xf]
        %v1584 = vld [vmem:[%s19 + $0x4] sm:$0xf]
        %v1585 = vld [vmem:[%s19 + $0x8] sm:$0xf]
        %v1586 = vld [vmem:[%s19 + $0xc] sm:$0xf]
        %v1587 = vld [vmem:[%s19 + $0x10] sm:$0xf]
        %v1588 = vld [vmem:[%s19 + $0x14] sm:$0xf]
        %v1589 = vld [vmem:[%s19 + $0x18] sm:$0xf]
        %v1590 = vld [vmem:[%s19 + $0x1c] sm:$0xf]
        %v1591 = vld [vmem:[%s19 + $0x20] sm:$0xf]
        %v1592 = vld [vmem:[%s19 + $0x24] sm:$0xf]
        %v1593 = vld [vmem:[%s19 + $0x28] sm:$0xf]
        %v1594 = vld [vmem:[%s19 + $0x2c] sm:$0xf]
        %v1595 = vld [vmem:[%s19 + $0x30] sm:$0xf]
        %v1596 = vld [vmem:[%s19 + $0x34] sm:$0xf]
        %v1597 = vld [vmem:[%s19 + $0x38] sm:$0xf]
        %v1598 = vld [vmem:[%s19 + $0x3c] sm:$0xf]
        %v1599 = vld [vmem:[%s20] sm:$0x1]
        %v1601 = vperm.slane %v1599, 0
        %v1619 = vunpack.c.l.b16 %v1583
        %v1620 = vunpack.c.l.b16 %v1584
        %v1621 = vunpack.c.l.b16 %v1585
        %v1622 = vunpack.c.l.b16 %v1586
        %v1623 = vunpack.c.l.b16 %v1587
        %v1624 = vunpack.c.l.b16 %v1588
        %v1625 = vunpack.c.l.b16 %v1589
        %v1626 = vunpack.c.l.b16 %v1590
        %v1627 = vunpack.c.l.b16 %v1591
        %v1628 = vunpack.c.l.b16 %v1592
        %v1629 = vunpack.c.l.b16 %v1593
        %v1630 = vunpack.c.l.b16 %v1594
        %v1631 = vunpack.c.l.b16 %v1595
        %v1632 = vunpack.c.l.b16 %v1596
        %v1633 = vunpack.c.l.b16 %v1597
        %v1634 = vunpack.c.l.b16 %v1598
        %v1635 = vpack.c.b16 %v1620, %v1619
        %v1636 = vpack.c.b16 %v1622, %v1621
        %v1637 = vpack.c.b16 %v1624, %v1623
        %v1638 = vpack.c.b16 %v1626, %v1625
        %v1639 = vpack.c.b16 %v1628, %v1627
        %v1640 = vpack.c.b16 %v1630, %v1629
        %v1641 = vpack.c.b16 %v1632, %v1631
        %v1642 = vpack.c.b16 %v1634, %v1633
        %1651 = vmatpush.bf16.msra.mxu0 %v1642
        %1652 = vmatpush.bf16.msra.mxu0 %v1641
        %1653 = vmatpush.bf16.msra.mxu0 %v1640
        %1654 = vmatpush.bf16.msra.mxu0 %v1639
        %1655 = vmatpush.bf16.msra.mxu0 %v1638
        %1656 = vmatpush.bf16.msra.mxu0 %v1637
        %1657 = vmatpush.bf16.msra.mxu0 %v1636
        %1658 = vmatpush.bf16.msra.mxu0 %v1635
        %1659 = vmatmul.bf16.gmra.mxu0 %v1582
        %v1660 = vpop.f32.mrf.mxu0
        %v1661 = vadd.f32 %v1601, %v1660
        %v1662 = vpop.f32.mrf.mxu0
        %1663 = vdwg.mxu0
        %v1664 = vadd.f32 %v1661, %v1543
        %v1665 = vld [vmem:[%s21] sm:$0x1]
        %v1666 = vld [vmem:[%s22] sm:$0x1]
        %v1667 = vsel %vm793, %v1664, 0.0
        %1668 = vadd.xlane.f32.xlu0 %v1667
        %v1669 = vpop.xlane.xlu0 %1668
        %v1670 = vmul.f32 %v1669, 0.03125
        %v1671 = vsub.f32 %v1664, %v1670
        %v1672 = vmul.f32 %v1671, %v1671
        %v1673 = vsel %vm793, %v1672, 0.0
        %1674 = vadd.xlane.f32.xlu0 %v1673
        %v1675 = vpop.xlane.xlu0 %1674
        %v1676 = vmul.f32 %v1675, 0.03125
        %v1677 = vadd.f32 %v1676, 1e-05
        %v1678 = vrsqrt.pop %v1677
        %v1679 = vmul.f32 %v1678, %v1677
        %v1680 = vmul.f32 %v1679, %v1678
        %v1681 = vmul.f32 0.5, %v1680
        %v1682 = vsub.f32 1.5, %v1681
        %v1683 = vmul.f32 %v1678, %v1682
        %vm1684 = vweird.f32 %v1677
        %vm1685 = vweird.f32 %v1678
        %vm1686 = vmor %vm1684, %vm1685
        %v1687 = vsel %vm1686, %v1678, %v1683
        %v1688 = vmul.f32 %v1671, %v1687
        %v1690 = vperm.slane %v1665, 0
        %v1692 = vmul.f32 %v1688, %v1690
        %v1694 = vperm.slane %v1666, 0
        %v1696 = vadd.f32 %v1692, %v1694
        %v1697 = vpack.c.bf16 %v1696, %v1696
        %vm1698 = vcmask 257024
        %1699 = vst.msk [vmem:[%s753] sm:$0xf] %vm1698, %v1697
        %s1700 = sand.u32 %s553, 1
        %s1701 = scalar_lea.sflag [#allocation4], %s1700
        %s1702 = sand.u32 %s553, 1
        %s1703 = smul.addr %s1702, 4
        %s1704 = scalar_lea.vmem [#allocation3], %s1703
        // Predicated region
        $region113: #{decoder_block.1} parent=111 // pred_check
          %p1705 = pneg %p563
        $region114: #{decoder_block.1} parent=111 // pred_check_branch
          %1707 = sbr.rel (%p1705) target = $region116
        $region115: #{decoder_block.1} parent=111 // pred_region
          %1709 = vsyncadd %s1701, 0
          %s1710 = smul.addr %s37, 4
          %s1711 = scalar_lea.hbm %s23, %s1710
          %s1713 = sshll.u32 %s1704, 4
          %s1714 = int_to_ptr.vmem [resolvable:$true] %s1713
          %s1715 = sshll.u32 %s1711, 4
          %s1716 = int_to_ptr.hbm [resolvable:$true] %s1715
          %1718 = dma.vmem_to_hbm [thread:$0]  %s1714, 64, %s1716, %s1701
        $region116: #{decoder_block.1} parent=111 // pred_fallthru
          _
      $region112: #{decoder_block.1} parent=5 // pred_fallthru
        _
      %p1719 = scmp.le.s32.totalorder 2, %s32
      // Predicated region
      $region117: #{decoder_block.1} parent=5 // pred_check
        %p1720 = pneg %p1719
      $region118: #{decoder_block.1} parent=5 // pred_check_branch
        %1722 = sbr.rel (%p1720) target = $region120
      $region119: #{decoder_block.1} parent=5 // pred_region
        %s1723 = ssub.s32 %s32, 2
        // Predicated region
        $region121: #{decoder_block.1} parent=119 // pred_check
          %p1724 = pneg %p569
        $region122: #{decoder_block.1} parent=119 // pred_check_branch
          %1726 = sbr.rel (%p1724) target = $region124
        $region123: #{decoder_block.1} parent=119 // pred_region
          %s1727 = sand.u32 %s554, 1
          %s1728 = scalar_lea.sflag [#allocation4], %s1727
          %s1729 = sand.u32 %s554, 1
          %s1730 = smul.addr %s1729, 4
          %s1731 = scalar_lea.vmem [#allocation3], %s1730
          %1733 = dma.done %s1728, 64
        $region124: #{decoder_block.1} parent=119 // pred_fallthru
          _
      $region120: #{decoder_block.1} parent=5 // pred_fallthru
        _
    $region6: #{decoder_block.1} parent=1 // loop_footer
      %s36 = sadd.s32 1, %s32
    $region7: #{decoder_block.1} parent=1 // loop_footer_branch
      %31 = sbr.rel target = $region3
    $region8: #{decoder_block.1} parent=1 // loop_exit
      _
    %1734 = vsyncpa [#allocation4], 1
    %s1735 = scalar_lea.sflag [#allocation4], 1
    %1736 = vsyncpa %s1735, 1

// kernel: decoder_block.1
$region0: #{decoder_block.1}
  #allocation0 [shape = 'u32[]', space=smem, size = 0x4, offset = 0x4, fixed_abs, tag = 'smem constant byte address 0x4 - core index']
  #allocation1 [shape = 'u32[72,128]{1,0:T(1,128)}', space=vmem, size = 0x9000, scoped, tag = 'internal scratch']
  #allocation2 [shape = 'f32[8,32]{1,0:T(8,128)}', space=vmem, size = 0x1000, scoped, tag = 'scratch operand']
  %s0 = inlined_call_operand.vmem [shape: bf16[2,8,32], index: 0, kind: input, shape index: {}]
  %s1 = inlined_call_operand.vmem [shape: bf16[2,8,32], index: 1, kind: input, shape index: {}]
  %s2 = inlined_call_operand.vmem [shape: bf16[2,8,32], index: 2, kind: input, shape index: {}]
  %s3 = inlined_call_operand.vmem [shape: bf16[2,8,8], index: 3, kind: input, shape index: {}]
  %s4 = inlined_call_operand.vmem [shape: bf16[2,8,8], index: 4, kind: input, shape index: {}]
  %s5 = inlined_call_operand.vmem [shape: bf16[32,96], index: 5, kind: input, shape index: {}]
  %s6 = inlined_call_operand.vmem [shape: bf16[32,32], index: 6, kind: input, shape index: {}]
  %s7 = inlined_call_operand.vmem [shape: f32[1,32], index: 7, kind: input, shape index: {}]
  %s8 = inlined_call_operand.vmem [shape: f32[1,32], index: 8, kind: input, shape index: {}]
  %s9 = inlined_call_operand.vmem [shape: f32[1,32], index: 9, kind: input, shape index: {}]
  %s10 = inlined_call_operand.vmem [shape: bf16[32,32], index: 10, kind: input, shape index: {}]
  %s11 = inlined_call_operand.vmem [shape: bf16[32,32], index: 11, kind: input, shape index: {}]
  %s12 = inlined_call_operand.vmem [shape: bf16[32,32], index: 12, kind: input, shape index: {}]
  %s13 = inlined_call_operand.vmem [shape: bf16[32,32], index: 13, kind: input, shape index: {}]
  %s14 = inlined_call_operand.vmem [shape: f32[1,32], index: 14, kind: input, shape index: {}]
  %s15 = inlined_call_operand.vmem [shape: f32[1,32], index: 15, kind: input, shape index: {}]
  %s16 = inlined_call_operand.vmem [shape: f32[1,32], index: 16, kind: input, shape index: {}]
  %s17 = inlined_call_operand.vmem [shape: bf16[32,128], index: 17, kind: input, shape index: {}]
  %s18 = inlined_call_operand.vmem [shape: f32[1,128], index: 18, kind: input, shape index: {}]
  %s19 = inlined_call_operand.vmem [shape: bf16[128,32], index: 19, kind: input, shape index: {}]
  %s20 = inlined_call_operand.vmem [shape: f32[1,32], index: 20, kind: input, shape index: {}]
  %s21 = inlined_call_operand.vmem [shape: f32[1,32], index: 21, kind: input, shape index: {}]
  %s22 = inlined_call_operand.vmem [shape: f32[1,32], index: 22, kind: input, shape index: {}]
  %s23 = inlined_call_operand.hbm [shape: bf16[2,8,32], index: 23, kind: output, shape index: {}]
  %s24 = sld [smem:[#allocation0]]
  $region125: #{decoder_block.1} parent=0
    _
  %s26 = ssub.s32 1, %s24
  %s27 = scalar_select 0, %s26, %s24
  $region1: #{decoder_block.1} parent=0
    #allocation3 [shape = 'u8[4096]{0}', space=vmem, size = 0x1000, scoped, tag = 'output window, operand 0']
    #allocation4 [shape = 's32[2]{0}', space=sflag, size = 0x8, scoped, tag = 'scoped memory for decoder_block.1']
    %28 = vsyncpa [#allocation4], 0
    %s29 = scalar_lea.sflag [#allocation4], 1
    %30 = vsyncpa %s29, 0
    loop: start=0, step=1, limit=4
    $region2: #{decoder_block.1} parent=1 // loop_pre_header
      _
    $region3: #{decoder_block.1} parent=1 // loop_header
      %s32 = sphi 0, %s36
      %p33 = scmp.ge.s32.totalorder %s32, 4
      %s42 = sphi 0, %s44
      %s45 = sphi 0, %s42
      %s46 = sphi 0, %s45
      %s62 = sphi 0, %s46
      %s68 = sphi 0, %s70
      %s71 = sphi 0, %s68
      %s72 = sphi 0, %s71
      %s88 = sphi 0, %s72
      %s94 = sphi 0, %s96
      %s97 = sphi 0, %s94
      %s98 = sphi 0, %s97
      %s114 = sphi 0, %s98
      %s120 = sphi 0, %s122
      %s123 = sphi 0, %s120
      %s124 = sphi 0, %s123
      %s140 = sphi 0, %s124
      %s146 = sphi 0, %s148
      %s149 = sphi 0, %s146
      %s150 = sphi 0, %s149
      %s166 = sphi 0, %s150
      %s170 = sphi 0, %s170
      %s172 = sphi 0, %s170
      %s173 = sphi 0, %s172
      %s187 = sphi 0, %s173
      %s191 = sphi 0, %s191
      %s193 = sphi 0, %s191
      %s194 = sphi 0, %s193
      %s208 = sphi 0, %s194
      %s212 = sphi 0, %s212
      %s214 = sphi 0, %s212
      %s215 = sphi 0, %s214
      %s229 = sphi 0, %s215
      %s233 = sphi 0, %s233
      %s235 = sphi 0, %s233
      %s236 = sphi 0, %s235
      %s250 = sphi 0, %s236
      %s254 = sphi 0, %s254
      %s256 = sphi 0, %s254
      %s257 = sphi 0, %s256
      %s271 = sphi 0, %s257
      %s275 = sphi 0, %s275
      %s277 = sphi 0, %s275
      %s278 = sphi 0, %s277
      %s292 = sphi 0, %s278
      %s296 = sphi 0, %s296
      %s298 = sphi 0, %s296
      %s299 = sphi 0, %s298
      %s313 = sphi 0, %s299
      %s317 = sphi 0, %s317
      %s319 = sphi 0, %s317
      %s320 = sphi 0, %s319
      %s334 = sphi 0, %s320
      %s338 = sphi 0, %s338
      %s340 = sphi 0, %s338
      %s341 = sphi 0, %s340
      %s355 = sphi 0, %s341
      %s359 = sphi 0, %s359
      %s361 = sphi 0, %s359
      %s362 = sphi 0, %s361
      %s376 = sphi 0, %s362
      %s380 = sphi 0, %s380
      %s382 = sphi 0, %s380
      %s383 = sphi 0, %s382
      %s397 = sphi 0, %s383
      %s401 = sphi 0, %s401
      %s403 = sphi 0, %s401
      %s404 = sphi 0, %s403
      %s418 = sphi 0, %s404
      %s422 = sphi 0, %s422
      %s424 = sphi 0, %s422
      %s425 = sphi 0, %s424
      %s439 = sphi 0, %s425
      %s443 = sphi 0, %s443
      %s445 = sphi 0, %s443
      %s446 = sphi 0, %s445
      %s460 = sphi 0, %s446
      %s464 = sphi 0, %s464
      %s466 = sphi 0, %s464
      %s467 = sphi 0, %s466
      %s481 = sphi 0, %s467
      %s485 = sphi 0, %s485
      %s487 = sphi 0, %s485
      %s488 = sphi 0, %s487
      %s502 = sphi 0, %s488
      %s506 = sphi 0, %s506
      %s508 = sphi 0, %s506
      %s509 = sphi 0, %s508
      %s523 = sphi 0, %s509
      %s527 = sphi 0, %s527
      %s529 = sphi 0, %s527
      %s530 = sphi 0, %s529
      %s544 = sphi 0, %s530
      %s550 = sphi 0, %s552
      %s553 = sphi 0, %s550
      %s554 = sphi 0, %s553
      %s570 = sphi 0, %s554
    $region4: #{decoder_block.1} parent=1 // loop_header_branch
      %35 = sbr.rel (%p33) target = $region8
    $region5: #{decoder_block.1} parent=1 // loop_body
      %s37 = ssub.s32 %s32, 1
      %s38 = ssub.s32 %s32, 2
      %s39 = sadd.s32 %s32, 1
      %s40 = ssub.s32 %s32, %s39
      %p41 = scmp.eq.s32.totalorder %s40, 0
      %s43 = sadd.s32 %s42, 1
      %s44 = scalar_select %p41, %s42, %s43
      %p47 = pneg %p41
      %p48 = scmp.eq.s32.totalorder %s32, 1
      %p49 = por %p47, %p48
      %p50 = scmp.ne.s32.totalorder %s42, %s45
      %p51 = scmp.eq.s32.totalorder %s32, 0
      %p52 = por %p50, %p51
      %p53 = scmp.ne.s32.totalorder %s42, %s45
      %p54 = scmp.eq.s32.totalorder %s37, 1
      %p55 = por %p53, %p54
      %p56 = scmp.ne.s32.totalorder %s45, %s46
      %p57 = scmp.eq.s32.totalorder %s37, 0
      %p58 = por %p56, %p57
      %p59 = scmp.ne.s32.totalorder %s45, %s46
      %p60 = scmp.eq.s32.totalorder %s38, 1
      %p61 = por %p59, %p60
      %p63 = scmp.ne.s32.totalorder %s46, %s62
      %p64 = scmp.eq.s32.totalorder %s38, 0
      %p65 = por %p63, %p64
      %s66 = ssub.s32 %s32, %s39
      %p67 = scmp.eq.s32.totalorder %s66, 0
      %s69 = sadd.s32 %s68, 1
      %s70 = scalar_select %p67, %s68, %s69
      %p73 = pneg %p67
      %p74 = scmp.eq.s32.totalorder %s32, 1
      %p75 = por %p73, %p74
      %p76 = scmp.ne.s32.totalorder %s68, %s71
      %p77 = scmp.eq.s32.totalorder %s32, 0
      %p78 = por %p76, %p77
      %p79 = scmp.ne.s32.totalorder %s68, %s71
      %p80 = scmp.eq.s32.totalorder %s37, 1
      %p81 = por %p79, %p80
      %p82 = scmp.ne.s32.totalorder %s71, %s72
      %p83 = scmp.eq.s32.totalorder %s37, 0
      %p84 = por %p82, %p83
      %p85 = scmp.ne.s32.totalorder %s71, %s72
      %p86 = scmp.eq.s32.totalorder %s38, 1
      %p87 = por %p85, %p86
      %p89 = scmp.ne.s32.totalorder %s72, %s88
      %p90 = scmp.eq.s32.totalorder %s38, 0
      %p91 = por %p89, %p90
      %s92 = ssub.s32 %s32, %s39
      %p93 = scmp.eq.s32.totalorder %s92, 0
      %s95 = sadd.s32 %s94, 1
      %s96 = scalar_select %p93, %s94, %s95
      %p99 = pneg %p93
      %p100 = scmp.eq.s32.totalorder %s32, 1
      %p101 = por %p99, %p100
      %p102 = scmp.ne.s32.totalorder %s94, %s97
      %p103 = scmp.eq.s32.totalorder %s32, 0
      %p104 = por %p102, %p103
      %p105 = scmp.ne.s32.totalorder %s94, %s97
      %p106 = scmp.eq.s32.totalorder %s37, 1
      %p107 = por %p105, %p106
      %p108 = scmp.ne.s32.totalorder %s97, %s98
      %p109 = scmp.eq.s32.totalorder %s37, 0
      %p110 = por %p108, %p109
      %p111 = scmp.ne.s32.totalorder %s97, %s98
      %p112 = scmp.eq.s32.totalorder %s38, 1
      %p113 = por %p111, %p112
      %p115 = scmp.ne.s32.totalorder %s98, %s114
      %p116 = scmp.eq.s32.totalorder %s38, 0
      %p117 = por %p115, %p116
      %s118 = ssub.s32 %s32, %s39
      %p119 = scmp.eq.s32.totalorder %s118, 0
      %s121 = sadd.s32 %s120, 1
      %s122 = scalar_select %p119, %s120, %s121
      %p125 = pneg %p119
      %p126 = scmp.eq.s32.totalorder %s32, 1
      %p127 = por %p125, %p126
      %p128 = scmp.ne.s32.totalorder %s120, %s123
      %p129 = scmp.eq.s32.totalorder %s32, 0
      %p130 = por %p128, %p129
      %p131 = scmp.ne.s32.totalorder %s120, %s123
      %p132 = scmp.eq.s32.totalorder %s37, 1
      %p133 = por %p131, %p132
      %p134 = scmp.ne.s32.totalorder %s123, %s124
      %p135 = scmp.eq.s32.totalorder %s37, 0
      %p136 = por %p134, %p135
      %p137 = scmp.ne.s32.totalorder %s123, %s124
      %p138 = scmp.eq.s32.totalorder %s38, 1
      %p139 = por %p137, %p138
      %p141 = scmp.ne.s32.totalorder %s124, %s140
      %p142 = scmp.eq.s32.totalorder %s38, 0
      %p143 = por %p141, %p142
      %s144 = ssub.s32 %s32, %s39
      %p145 = scmp.eq.s32.totalorder %s144, 0
      %s147 = sadd.s32 %s146, 1
      %s148 = scalar_select %p145, %s146, %s147
      %p151 = pneg %p145
      %p152 = scmp.eq.s32.totalorder %s32, 1
      %p153 = por %p151, %p152
      %p154 = scmp.ne.s32.totalorder %s146, %s149
      %p155 = scmp.eq.s32.totalorder %s32, 0
      %p156 = por %p154, %p155
      %p157 = scmp.ne.s32.totalorder %s146, %s149
      %p158 = scmp.eq.s32.totalorder %s37, 1
      %p159 = por %p157, %p158
      %p160 = scmp.ne.s32.totalorder %s149, %s150
      %p161 = scmp.eq.s32.totalorder %s37, 0
      %p162 = por %p160, %p161
      %p163 = scmp.ne.s32.totalorder %s149, %s150
      %p164 = scmp.eq.s32.totalorder %s38, 1
      %p165 = por %p163, %p164
      %p167 = scmp.ne.s32.totalorder %s150, %s166
      %p168 = scmp.eq.s32.totalorder %s38, 0
      %p169 = por %p167, %p168
      %s171 = sadd.s32 %s170, 1
      %p174 = scmp.eq.s32.totalorder %s32, 1
      %p175 = scmp.ne.s32.totalorder %s170, %s172
      %p176 = scmp.eq.s32.totalorder %s32, 0
      %p177 = por %p175, %p176
      %p178 = scmp.ne.s32.totalorder %s170, %s172
      %p179 = scmp.eq.s32.totalorder %s37, 1
      %p180 = por %p178, %p179
      %p181 = scmp.ne.s32.totalorder %s172, %s173
      %p182 = scmp.eq.s32.totalorder %s37, 0
      %p183 = por %p181, %p182
      %p184 = scmp.ne.s32.totalorder %s172, %s173
      %p185 = scmp.eq.s32.totalorder %s38, 1
      %p186 = por %p184, %p185
      %p188 = scmp.ne.s32.totalorder %s173, %s187
      %p189 = scmp.eq.s32.totalorder %s38, 0
      %p190 = por %p188, %p189
      %s192 = sadd.s32 %s191, 1
      %p195 = scmp.eq.s32.totalorder %s32, 1
      %p196 = scmp.ne.s32.totalorder %s191, %s193
      %p197 = scmp.eq.s32.totalorder %s32, 0
      %p198 = por %p196, %p197
      %p199 = scmp.ne.s32.totalorder %s191, %s193
      %p200 = scmp.eq.s32.totalorder %s37, 1
      %p201 = por %p199, %p200
      %p202 = scmp.ne.s32.totalorder %s193, %s194
      %p203 = scmp.eq.s32.totalorder %s37, 0
      %p204 = por %p202, %p203
      %p205 = scmp.ne.s32.totalorder %s193, %s194
      %p206 = scmp.eq.s32.totalorder %s38, 1
      %p207 = por %p205, %p206
      %p209 = scmp.ne.s32.totalorder %s194, %s208
      %p210 = scmp.eq.s32.totalorder %s38, 0
      %p211 = por %p209, %p210
      %s213 = sadd.s32 %s212, 1
      %p216 = scmp.eq.s32.totalorder %s32, 1
      %p217 = scmp.ne.s32.totalorder %s212, %s214
      %p218 = scmp.eq.s32.totalorder %s32, 0
      %p219 = por %p217, %p218
      %p220 = scmp.ne.s32.totalorder %s212, %s214
      %p221 = scmp.eq.s32.totalorder %s37, 1
      %p222 = por %p220, %p221
      %p223 = scmp.ne.s32.totalorder %s214, %s215
      %p224 = scmp.eq.s32.totalorder %s37, 0
      %p225 = por %p223, %p224
      %p226 = scmp.ne.s32.totalorder %s214, %s215
      %p227 = scmp.eq.s32.totalorder %s38, 1
      %p228 = por %p226, %p227
      %p230 = scmp.ne.s32.totalorder %s215, %s229
      %p231 = scmp.eq.s32.totalorder %s38, 0
      %p232 = por %p230, %p231
      %s234 = sadd.s32 %s233, 1
      %p237 = scmp.eq.s32.totalorder %s32, 1
      %p238 = scmp.ne.s32.totalorder %s233, %s235
      %p239 = scmp.eq.s32.totalorder %s32, 0
      %p240 = por %p238, %p239
      %p241 = scmp.ne.s32.totalorder %s233, %s235
      %p242 = scmp.eq.s32.totalorder %s37, 1
      %p243 = por %p241, %p242
      %p244 = scmp.ne.s32.totalorder %s235, %s236
      %p245 = scmp.eq.s32.totalorder %s37, 0
      %p246 = por %p244, %p245
      %p247 = scmp.ne.s32.totalorder %s235, %s236
      %p248 = scmp.eq.s32.totalorder %s38, 1
      %p249 = por %p247, %p248
      %p251 = scmp.ne.s32.totalorder %s236, %s250
      %p252 = scmp.eq.s32.totalorder %s38, 0
      %p253 = por %p251, %p252
      %s255 = sadd.s32 %s254, 1
      %p258 = scmp.eq.s32.totalorder %s32, 1
      %p259 = scmp.ne.s32.totalorder %s254, %s256
      %p260 = scmp.eq.s32.totalorder %s32, 0
      %p261 = por %p259, %p260
      %p262 = scmp.ne.s32.totalorder %s254, %s256
      %p263 = scmp.eq.s32.totalorder %s37, 1
      %p264 = por %p262, %p263
      %p265 = scmp.ne.s32.totalorder %s256, %s257
      %p266 = scmp.eq.s32.totalorder %s37, 0
      %p267 = por %p265, %p266
      %p268 = scmp.ne.s32.totalorder %s256, %s257
      %p269 = scmp.eq.s32.totalorder %s38, 1
      %p270 = por %p268, %p269
      %p272 = scmp.ne.s32.totalorder %s257, %s271
      %p273 = scmp.eq.s32.totalorder %s38, 0
      %p274 = por %p272, %p273
      %s276 = sadd.s32 %s275, 1
      %p279 = scmp.eq.s32.totalorder %s32, 1
      %p280 = scmp.ne.s32.totalorder %s275, %s277
      %p281 = scmp.eq.s32.totalorder %s32, 0
      %p282 = por %p280, %p281
      %p283 = scmp.ne.s32.totalorder %s275, %s277
      %p284 = scmp.eq.s32.totalorder %s37, 1
      %p285 = por %p283, %p284
      %p286 = scmp.ne.s32.totalorder %s277, %s278
      %p287 = scmp.eq.s32.totalorder %s37, 0
      %p288 = por %p286, %p287
      %p289 = scmp.ne.s32.totalorder %s277, %s278
      %p290 = scmp.eq.s32.totalorder %s38, 1
      %p291 = por %p289, %p290
      %p293 = scmp.ne.s32.totalorder %s278, %s292
      %p294 = scmp.eq.s32.totalorder %s38, 0
      %p295 = por %p293, %p294
      %s297 = sadd.s32 %s296, 1
      %p300 = scmp.eq.s32.totalorder %s32, 1
      %p301 = scmp.ne.s32.totalorder %s296, %s298
      %p302 = scmp.eq.s32.totalorder %s32, 0
      %p303 = por %p301, %p302
      %p304 = scmp.ne.s32.totalorder %s296, %s298
      %p305 = scmp.eq.s32.totalorder %s37, 1
      %p306 = por %p304, %p305
      %p307 = scmp.ne.s32.totalorder %s298, %s299
      %p308 = scmp.eq.s32.totalorder %s37, 0
      %p309 = por %p307, %p308
      %p310 = scmp.ne.s32.totalorder %s298, %s299
      %p311 = scmp.eq.s32.totalorder %s38, 1
      %p312 = por %p310, %p311
      %p314 = scmp.ne.s32.totalorder %s299, %s313
      %p315 = scmp.eq.s32.totalorder %s38, 0
      %p316 = por %p314, %p315
      %s318 = sadd.s32 %s317, 1
      %p321 = scmp.eq.s32.totalorder %s32, 1
      %p322 = scmp.ne.s32.totalorder %s317, %s319
      %p323 = scmp.eq.s32.totalorder %s32, 0
      %p324 = por %p322, %p323
      %p325 = scmp.ne.s32.totalorder %s317, %s319
      %p326 = scmp.eq.s32.totalorder %s37, 1
      %p327 = por %p325, %p326
      %p328 = scmp.ne.s32.totalorder %s319, %s320
      %p329 = scmp.eq.s32.totalorder %s37, 0
      %p330 = por %p328, %p329
      %p331 = scmp.ne.s32.totalorder %s319, %s320
      %p332 = scmp.eq.s32.totalorder %s38, 1
      %p333 = por %p331, %p332
      %p335 = scmp.ne.s32.totalorder %s320, %s334
      %p336 = scmp.eq.s32.totalorder %s38, 0
      %p337 = por %p335, %p336
      %s339 = sadd.s32 %s338, 1
      %p342 = scmp.eq.s32.totalorder %s32, 1
      %p343 = scmp.ne.s32.totalorder %s338, %s340
      %p344 = scmp.eq.s32.totalorder %s32, 0
      %p345 = por %p343, %p344
      %p346 = scmp.ne.s32.totalorder %s338, %s340
      %p347 = scmp.eq.s32.totalorder %s37, 1
      %p348 = por %p346, %p347
      %p349 = scmp.ne.s32.totalorder %s340, %s341
      %p350 = scmp.eq.s32.totalorder %s37, 0
      %p351 = por %p349, %p350
      %p352 = scmp.ne.s32.totalorder %s340, %s341
      %p353 = scmp.eq.s32.totalorder %s38, 1
      %p354 = por %p352, %p353
      %p356 = scmp.ne.s32.totalorder %s341, %s355
      %p357 = scmp.eq.s32.totalorder %s38, 0
      %p358 = por %p356, %p357
      %s360 = sadd.s32 %s359, 1
      %p363 = scmp.eq.s32.totalorder %s32, 1
      %p364 = scmp.ne.s32.totalorder %s359, %s361
      %p365 = scmp.eq.s32.totalorder %s32, 0
      %p366 = por %p364, %p365
      %p367 = scmp.ne.s32.totalorder %s359, %s361
      %p368 = scmp.eq.s32.totalorder %s37, 1
      %p369 = por %p367, %p368
      %p370 = scmp.ne.s32.totalorder %s361, %s362
      %p371 = scmp.eq.s32.totalorder %s37, 0
      %p372 = por %p370, %p371
      %p373 = scmp.ne.s32.totalorder %s361, %s362
      %p374 = scmp.eq.s32.totalorder %s38, 1
      %p375 = por %p373, %p374
      %p377 = scmp.ne.s32.totalorder %s362, %s376
      %p378 = scmp.eq.s32.totalorder %s38, 0
      %p379 = por %p377, %p378
      %s381 = sadd.s32 %s380, 1
      %p384 = scmp.eq.s32.totalorder %s32, 1
      %p385 = scmp.ne.s32.totalorder %s380, %s382
      %p386 = scmp.eq.s32.totalorder %s32, 0
      %p387 = por %p385, %p386
      %p388 = scmp.ne.s32.totalorder %s380, %s382
      %p389 = scmp.eq.s32.totalorder %s37, 1
      %p390 = por %p388, %p389
      %p391 = scmp.ne.s32.totalorder %s382, %s383
      %p392 = scmp.eq.s32.totalorder %s37, 0
      %p393 = por %p391, %p392
      %p394 = scmp.ne.s32.totalorder %s382, %s383
      %p395 = scmp.eq.s32.totalorder %s38, 1
      %p396 = por %p394, %p395
      %p398 = scmp.ne.s32.totalorder %s383, %s397
      %p399 = scmp.eq.s32.totalorder %s38, 0
      %p400 = por %p398, %p399
      %s402 = sadd.s32 %s401, 1
      %p405 = scmp.eq.s32.totalorder %s32, 1
      %p406 = scmp.ne.s32.totalorder %s401, %s403
      %p407 = scmp.eq.s32.totalorder %s32, 0
      %p408 = por %p406, %p407
      %p409 = scmp.ne.s32.totalorder %s401, %s403
      %p410 = scmp.eq.s32.totalorder %s37, 1
      %p411 = por %p409, %p410
      %p412 = scmp.ne.s32.totalorder %s403, %s404
      %p413 = scmp.eq.s32.totalorder %s37, 0
      %p414 = por %p412, %p413
      %p415 = scmp.ne.s32.totalorder %s403, %s404
      %p416 = scmp.eq.s32.totalorder %s38, 1
      %p417 = por %p415, %p416
      %p419 = scmp.ne.s32.totalorder %s404, %s418
      %p420 = scmp.eq.s32.totalorder %s38, 0
      %p421 = por %p419, %p420
      %s423 = sadd.s32 %s422, 1
      %p426 = scmp.eq.s32.totalorder %s32, 1
      %p427 = scmp.ne.s32.totalorder %s422, %s424
      %p428 = scmp.eq.s32.totalorder %s32, 0
      %p429 = por %p427, %p428
      %p430 = scmp.ne.s32.totalorder %s422, %s424
      %p431 = scmp.eq.s32.totalorder %s37, 1
      %p432 = por %p430, %p431
      %p433 = scmp.ne.s32.totalorder %s424, %s425
      %p434 = scmp.eq.s32.totalorder %s37, 0
      %p435 = por %p433, %p434
      %p436 = scmp.ne.s32.totalorder %s424, %s425
      %p437 = scmp.eq.s32.totalorder %s38, 1
      %p438 = por %p436, %p437
      %p440 = scmp.ne.s32.totalorder %s425, %s439
      %p441 = scmp.eq.s32.totalorder %s38, 0
      %p442 = por %p440, %p441
      %s444 = sadd.s32 %s443, 1
      %p447 = scmp.eq.s32.totalorder %s32, 1
      %p448 = scmp.ne.s32.totalorder %s443, %s445
      %p449 = scmp.eq.s32.totalorder %s32, 0
      %p450 = por %p448, %p449
      %p451 = scmp.ne.s32.totalorder %s443, %s445
      %p452 = scmp.eq.s32.totalorder %s37, 1
      %p453 = por %p451, %p452
      %p454 = scmp.ne.s32.totalorder %s445, %s446
      %p455 = scmp.eq.s32.totalorder %s37, 0
      %p456 = por %p454, %p455
      %p457 = scmp.ne.s32.totalorder %s445, %s446
      %p458 = scmp.eq.s32.totalorder %s38, 1
      %p459 = por %p457, %p458
      %p461 = scmp.ne.s32.totalorder %s446, %s460
      %p462 = scmp.eq.s32.totalorder %s38, 0
      %p463 = por %p461, %p462
      %s465 = sadd.s32 %s464, 1
      %p468 = scmp.eq.s32.totalorder %s32, 1
      %p469 = scmp.ne.s32.totalorder %s464, %s466
      %p470 = scmp.eq.s32.totalorder %s32, 0
      %p471 = por %p469, %p470
      %p472 = scmp.ne.s32.totalorder %s464, %s466
      %p473 = scmp.eq.s32.totalorder %s37, 1
      %p474 = por %p472, %p473
      %p475 = scmp.ne.s32.totalorder %s466, %s467
      %p476 = scmp.eq.s32.totalorder %s37, 0
      %p477 = por %p475, %p476
      %p478 = scmp.ne.s32.totalorder %s466, %s467
      %p479 = scmp.eq.s32.totalorder %s38, 1
      %p480 = por %p478, %p479
      %p482 = scmp.ne.s32.totalorder %s467, %s481
      %p483 = scmp.eq.s32.totalorder %s38, 0
      %p484 = por %p482, %p483
      %s486 = sadd.s32 %s485, 1
      %p489 = scmp.eq.s32.totalorder %s32, 1
      %p490 = scmp.ne.s32.totalorder %s485, %s487
      %p491 = scmp.eq.s32.totalorder %s32, 0
      %p492 = por %p490, %p491
      %p493 = scmp.ne.s32.totalorder %s485, %s487
      %p494 = scmp.eq.s32.totalorder %s37, 1
      %p495 = por %p493, %p494
      %p496 = scmp.ne.s32.totalorder %s487, %s488
      %p497 = scmp.eq.s32.totalorder %s37, 0
      %p498 = por %p496, %p497
      %p499 = scmp.ne.s32.totalorder %s487, %s488
      %p500 = scmp.eq.s32.totalorder %s38, 1
      %p501 = por %p499, %p500
      %p503 = scmp.ne.s32.totalorder %s488, %s502
      %p504 = scmp.eq.s32.totalorder %s38, 0
      %p505 = por %p503, %p504
      %s507 = sadd.s32 %s506, 1
      %p510 = scmp.eq.s32.totalorder %s32, 1
      %p511 = scmp.ne.s32.totalorder %s506, %s508
      %p512 = scmp.eq.s32.totalorder %s32, 0
      %p513 = por %p511, %p512
      %p514 = scmp.ne.s32.totalorder %s506, %s508
      %p515 = scmp.eq.s32.totalorder %s37, 1
      %p516 = por %p514, %p515
      %p517 = scmp.ne.s32.totalorder %s508, %s509
      %p518 = scmp.eq.s32.totalorder %s37, 0
      %p519 = por %p517, %p518
      %p520 = scmp.ne.s32.totalorder %s508, %s509
      %p521 = scmp.eq.s32.totalorder %s38, 1
      %p522 = por %p520, %p521
      %p524 = scmp.ne.s32.totalorder %s509, %s523
      %p525 = scmp.eq.s32.totalorder %s38, 0
      %p526 = por %p524, %p525
      %s528 = sadd.s32 %s527, 1
      %p531 = scmp.eq.s32.totalorder %s32, 1
      %p532 = scmp.ne.s32.totalorder %s527, %s529
      %p533 = scmp.eq.s32.totalorder %s32, 0
      %p534 = por %p532, %p533
      %p535 = scmp.ne.s32.totalorder %s527, %s529
      %p536 = scmp.eq.s32.totalorder %s37, 1
      %p537 = por %p535, %p536
      %p538 = scmp.ne.s32.totalorder %s529, %s530
      %p539 = scmp.eq.s32.totalorder %s37, 0
      %p540 = por %p538, %p539
      %p541 = scmp.ne.s32.totalorder %s529, %s530
      %p542 = scmp.eq.s32.totalorder %s38, 1
      %p543 = por %p541, %p542
      %p545 = scmp.ne.s32.totalorder %s530, %s544
      %p546 = scmp.eq.s32.totalorder %s38, 0
      %p547 = por %p545, %p546
      %s548 = ssub.s32 %s32, %s39
      %p549 = scmp.eq.s32.totalorder %s548, 0
      %s551 = sadd.s32 %s550, 1
      %s552 = scalar_select %p549, %s550, %s551
      %p555 = pneg %p549
      %p556 = scmp.eq.s32.totalorder %s32, 1
      %p557 = por %p555, %p556
      %p558 = scmp.ne.s32.totalorder %s550, %s553
      %p559 = scmp.eq.s32.totalorder %s32, 0
      %p560 = por %p558, %p559
      %p561 = scmp.ne.s32.totalorder %s550, %s553
      %p562 = scmp.eq.s32.totalorder %s37, 1
      %p563 = por %p561, %p562
      %p564 = scmp.ne.s32.totalorder %s553, %s554
      %p565 = scmp.eq.s32.totalorder %s37, 0
      %p566 = por %p564, %p565
      %p567 = scmp.ne.s32.totalorder %s553, %s554
      %p568 = scmp.eq.s32.totalorder %s38, 1
      %p569 = por %p567, %p568
      %p571 = scmp.ne.s32.totalorder %s554, %s570
      %p572 = scmp.eq.s32.totalorder %s38, 0
      %p573 = por %p571, %p572
      %p574 = scmp.le.s32.totalorder 1, %s32
      %p575 = scmp.lt.s32.totalorder %s32, 3
      %p576 = pnand %p574, %p575
      %p577 = pneg %p576
      // Predicated region
      $region9: #{decoder_block.1} parent=5 // pred_check
        _
      $region10: #{decoder_block.1} parent=5 // pred_check_branch
        %579 = sbr.rel (%p576) target = $region12
      $region11: #{decoder_block.1} parent=5 // pred_region
        %s580 = ssub.s32 %s32, 1
        // Predicated region
        $region13: #{decoder_block.1} parent=11 // pred_check
          %p581 = pneg %p183
        $region14: #{decoder_block.1} parent=11 // pred_check_branch
          %583 = sbr.rel (%p581) target = $region16
        $region15: #{decoder_block.1} parent=11 // pred_region
          _
        $region16: #{decoder_block.1} parent=11 // pred_fallthru
          _
        // Predicated region
        $region17: #{decoder_block.1} parent=11 // pred_check
          %p584 = pneg %p204
        $region18: #{decoder_block.1} parent=11 // pred_check_branch
          %586 = sbr.rel (%p584) target = $region20
        $region19: #{decoder_block.1} parent=11 // pred_region
          _
        $region20: #{decoder_block.1} parent=11 // pred_fallthru
          _
        // Predicated region
        $region21: #{decoder_block.1} parent=11 // pred_check
          %p587 = pneg %p225
        $region22: #{decoder_block.1} parent=11 // pred_check_branch
          %589 = sbr.rel (%p587) target = $region24
        $region23: #{decoder_block.1} parent=11 // pred_region
          _
        $region24: #{decoder_block.1} parent=11 // pred_fallthru
          _
        // Predicated region
        $region25: #{decoder_block.1} parent=11 // pred_check
          %p590 = pneg %p246
        $region26: #{decoder_block.1} parent=11 // pred_check_branch
          %592 = sbr.rel (%p590) target = $region28
        $region27: #{decoder_block.1} parent=11 // pred_region
          _
        $region28: #{decoder_block.1} parent=11 // pred_fallthru
          _
        // Predicated region
        $region29: #{decoder_block.1} parent=11 // pred_check
          %p593 = pneg %p267
        $region30: #{decoder_block.1} parent=11 // pred_check_branch
          %595 = sbr.rel (%p593) target = $region32
        $region31: #{decoder_block.1} parent=11 // pred_region
          _
        $region32: #{decoder_block.1} parent=11 // pred_fallthru
          _
        // Predicated region
        $region33: #{decoder_block.1} parent=11 // pred_check
          %p596 = pneg %p288
        $region34: #{decoder_block.1} parent=11 // pred_check_branch
          %598 = sbr.rel (%p596) target = $region36
        $region35: #{decoder_block.1} parent=11 // pred_region
          _
        $region36: #{decoder_block.1} parent=11 // pred_fallthru
          _
        // Predicated region
        $region37: #{decoder_block.1} parent=11 // pred_check
          %p599 = pneg %p309
        $region38: #{decoder_block.1} parent=11 // pred_check_branch
          %601 = sbr.rel (%p599) target = $region40
        $region39: #{decoder_block.1} parent=11 // pred_region
          _
        $region40: #{decoder_block.1} parent=11 // pred_fallthru
          _
        // Predicated region
        $region41: #{decoder_block.1} parent=11 // pred_check
          %p602 = pneg %p330
        $region42: #{decoder_block.1} parent=11 // pred_check_branch
          %604 = sbr.rel (%p602) target = $region44
        $region43: #{decoder_block.1} parent=11 // pred_region
          _
        $region44: #{decoder_block.1} parent=11 // pred_fallthru
          _
        // Predicated region
        $region45: #{decoder_block.1} parent=11 // pred_check
          %p605 = pneg %p351
        $region46: #{decoder_block.1} parent=11 // pred_check_branch
          %607 = sbr.rel (%p605) target = $region48
        $region47: #{decoder_block.1} parent=11 // pred_region
          _
        $region48: #{decoder_block.1} parent=11 // pred_fallthru
          _
        // Predicated region
        $region49: #{decoder_block.1} parent=11 // pred_check
          %p608 = pneg %p372
        $region50: #{decoder_block.1} parent=11 // pred_check_branch
          %610 = sbr.rel (%p608) target = $region52
        $region51: #{decoder_block.1} parent=11 // pred_region
          _
        $region52: #{decoder_block.1} parent=11 // pred_fallthru
          _
        // Predicated region
        $region53: #{decoder_block.1} parent=11 // pred_check
          %p611 = pneg %p393
        $region54: #{decoder_block.1} parent=11 // pred_check_branch
          %613 = sbr.rel (%p611) target = $region56
        $region55: #{decoder_block.1} parent=11 // pred_region
          _
        $region56: #{decoder_block.1} parent=11 // pred_fallthru
          _
        // Predicated region
        $region57: #{decoder_block.1} parent=11 // pred_check
          %p614 = pneg %p414
        $region58: #{decoder_block.1} parent=11 // pred_check_branch
          %616 = sbr.rel (%p614) target = $region60
        $region59: #{decoder_block.1} parent=11 // pred_region
          _
        $region60: #{decoder_block.1} parent=11 // pred_fallthru
          _
        // Predicated region
        $region61: #{decoder_block.1} parent=11 // pred_check
          %p617 = pneg %p435
        $region62: #{decoder_block.1} parent=11 // pred_check_branch
          %619 = sbr.rel (%p617) target = $region64
        $region63: #{decoder_block.1} parent=11 // pred_region
          _
        $region64: #{decoder_block.1} parent=11 // pred_fallthru
          _
        // Predicated region
        $region65: #{decoder_block.1} parent=11 // pred_check
          %p620 = pneg %p456
        $region66: #{decoder_block.1} parent=11 // pred_check_branch
          %622 = sbr.rel (%p620) target = $region68
        $region67: #{decoder_block.1} parent=11 // pred_region
          _
        $region68: #{decoder_block.1} parent=11 // pred_fallthru
          _
        // Predicated region
        $region69: #{decoder_block.1} parent=11 // pred_check
          %p623 = pneg %p477
        $region70: #{decoder_block.1} parent=11 // pred_check_branch
          %625 = sbr.rel (%p623) target = $region72
        $region71: #{decoder_block.1} parent=11 // pred_region
          _
        $region72: #{decoder_block.1} parent=11 // pred_fallthru
          _
        // Predicated region
        $region73: #{decoder_block.1} parent=11 // pred_check
          %p626 = pneg %p498
        $region74: #{decoder_block.1} parent=11 // pred_check_branch
          %628 = sbr.rel (%p626) target = $region76
        $region75: #{decoder_block.1} parent=11 // pred_region
          _
        $region76: #{decoder_block.1} parent=11 // pred_fallthru
          _
        // Predicated region
        $region77: #{decoder_block.1} parent=11 // pred_check
          %p629 = pneg %p519
        $region78: #{decoder_block.1} parent=11 // pred_check_branch
          %631 = sbr.rel (%p629) target = $region80
        $region79: #{decoder_block.1} parent=11 // pred_region
          _
        $region80: #{decoder_block.1} parent=11 // pred_fallthru
          _
        // Predicated region
        $region81: #{decoder_block.1} parent=11 // pred_check
          %p632 = pneg %p540
        $region82: #{decoder_block.1} parent=11 // pred_check_branch
          %634 = sbr.rel (%p632) target = $region84
        $region83: #{decoder_block.1} parent=11 // pred_region
          _
        $region84: #{decoder_block.1} parent=11 // pred_fallthru
          _
      $region12: #{decoder_block.1} parent=5 // pred_fallthru
        _
      %p635 = scmp.lt.s32.totalorder %s32, 2
      // Predicated region
      $region85: #{decoder_block.1} parent=5 // pred_check
        %p636 = pneg %p635
      $region86: #{decoder_block.1} parent=5 // pred_check_branch
        %638 = sbr.rel (%p636) target = $region88
      $region87: #{decoder_block.1} parent=5 // pred_region
        // Predicated region
        $region89: #{decoder_block.1} parent=87 // pred_check
          %p639 = pneg %p52
        $region90: #{decoder_block.1} parent=87 // pred_check_branch
          %641 = sbr.rel (%p639) target = $region92
        $region91: #{decoder_block.1} parent=87 // pred_region
          %p642 = scmp.lt.s32.totalorder %s32, 1
          %s643 = scalar_select %p642, %s32, 1
          %s644 = smul.addr %s643, 4
          %s645 = scalar_lea.vmem %s0, %s644
        $region92: #{decoder_block.1} parent=87 // pred_fallthru
          _
        // Predicated region
        $region93: #{decoder_block.1} parent=87 // pred_check
          %p646 = pneg %p78
        $region94: #{decoder_block.1} parent=87 // pred_check_branch
          %648 = sbr.rel (%p646) target = $region96
        $region95: #{decoder_block.1} parent=87 // pred_region
          %p649 = scmp.lt.s32.totalorder %s32, 1
          %s650 = scalar_select %p649, %s32, 1
          %s651 = smul.addr %s650, 4
          %s652 = scalar_lea.vmem %s1, %s651
        $region96: #{decoder_block.1} parent=87 // pred_fallthru
          _
        // Predicated region
        $region97: #{decoder_block.1} parent=87 // pred_check
          %p653 = pneg %p104
        $region98: #{decoder_block.1} parent=87 // pred_check_branch
          %655 = sbr.rel (%p653) target = $region100
        $region99: #{decoder_block.1} parent=87 // pred_region
          %p656 = scmp.lt.s32.totalorder %s32, 1
          %s657 = scalar_select %p656, %s32, 1
          %s658 = smul.addr %s657, 4
          %s659 = scalar_lea.vmem %s2, %s658
        $region100: #{decoder_block.1} parent=87 // pred_fallthru
          _
        // Predicated region
        $region101: #{decoder_block.1} parent=87 // pred_check
          %p660 = pneg %p130
        $region102: #{decoder_block.1} parent=87 // pred_check_branch
          %662 = sbr.rel (%p660) target = $region104
        $region103: #{decoder_block.1} parent=87 // pred_region
          %p663 = scmp.lt.s32.totalorder %s32, 1
          %s664 = scalar_select %p663, %s32, 1
          %s665 = smul.addr %s664, 4
          %s666 = scalar_lea.vmem %s3, %s665
        $region104: #{decoder_block.1} parent=87 // pred_fallthru
          _
        // Predicated region
        $region105: #{decoder_block.1} parent=87 // pred_check
          %p667 = pneg %p156
        $region106: #{decoder_block.1} parent=87 // pred_check_branch
          %669 = sbr.rel (%p667) target = $region108
        $region107: #{decoder_block.1} parent=87 // pred_region
          %p670 = scmp.lt.s32.totalorder %s32, 1
          %s671 = scalar_select %p670, %s32, 1
          %s672 = smul.addr %s671, 4
          %s673 = scalar_lea.vmem %s4, %s672
        $region108: #{decoder_block.1} parent=87 // pred_fallthru
          _
      $region88: #{decoder_block.1} parent=5 // pred_fallthru
        _
      %p674 = scmp.le.s32.totalorder 1, %s32
      %p675 = scmp.lt.s32.totalorder %s32, 3
      %p676 = pnand %p674, %p675
      %p677 = pneg %p676
      // Predicated region
      $region109: #{decoder_block.1} parent=5 // pred_check
        _
      $region110: #{decoder_block.1} parent=5 // pred_check_branch
        %679 = sbr.rel (%p676) target = $region112
      $region111: #{decoder_block.1} parent=5 // pred_region
        %s680 = ssub.s32 %s32, 1
        %p681 = scmp.lt.s32.totalorder %s37, 1
        %s682 = scalar_select %p681, %s37, 1
        %s683 = smul.addr %s682, 4
        %s684 = scalar_lea.vmem %s0, %s683
        %p685 = pneg %p58
        %p686 = pneg %p55
        %p687 = scmp.lt.s32.totalorder %s37, 1
        %s688 = scalar_select %p687, %s37, 1
        %s689 = smul.addr %s688, 4
        %s690 = scalar_lea.vmem %s1, %s689
        %p691 = pneg %p84
        %p692 = pneg %p81
        %p693 = scmp.lt.s32.totalorder %s37, 1
        %s694 = scalar_select %p693, %s37, 1
        %s695 = smul.addr %s694, 4
        %s696 = scalar_lea.vmem %s2, %s695
        %p697 = pneg %p110
        %p698 = pneg %p107
        %p699 = scmp.lt.s32.totalorder %s37, 1
        %s700 = scalar_select %p699, %s37, 1
        %s701 = smul.addr %s700, 4
        %s702 = scalar_lea.vmem %s3, %s701
        %p703 = pneg %p136
        %p704 = pneg %p133
        %p705 = scmp.lt.s32.totalorder %s37, 1
        %s706 = scalar_select %p705, %s37, 1
        %s707 = smul.addr %s706, 4
        %s708 = scalar_lea.vmem %s4, %s707
        %p709 = pneg %p162
        %p710 = pneg %p159
        %p711 = pneg %p183
        %p712 = pneg %p180
        %p713 = pneg %p204
        %p714 = pneg %p201
        %p715 = pneg %p225
        %p716 = pneg %p222
        %p717 = pneg %p246
        %p718 = pneg %p243
        %p719 = pneg %p267
        %p720 = pneg %p264
        %p721 = pneg %p288
        %p722 = pneg %p285
        %p723 = pneg %p309
        %p724 = pneg %p306
        %p725 = pneg %p330
        %p726 = pneg %p327
        %p727 = pneg %p351
        %p728 = pneg %p348
        %p729 = pneg %p372
        %p730 = pneg %p369
        %p731 = pneg %p393
        %p732 = pneg %p390
        %p733 = pneg %p414
        %p734 = pneg %p411
        %p735 = pneg %p435
        %p736 = pneg %p432
        %p737 = pneg %p456
        %p738 = pneg %p453
        %p739 = pneg %p477
        %p740 = pneg %p474
        %p741 = pneg %p498
        %p742 = pneg %p495
        %p743 = pneg %p519
        %p744 = pneg %p516
        %p745 = pneg %p540
        %p746 = pneg %p537
        %p747 = pneg %p566
        %p748 = pneg %p563
        %s749 = sand.u32 %s553, 1
        %s750 = scalar_lea.sflag [#allocation4], %s749
        %s751 = sand.u32 %s553, 1
        %s752 = smul.addr %s751, 4
        %s753 = scalar_lea.vmem [#allocation3], %s752
        %p754 = scmp.lt.s32.totalorder %s37, 1
        %s755 = scalar_select %p754, %s37, 1
        %s756 = smul.addr %s755, 4
        %s757 = scalar_lea.vmem %s0, %s756
        %p758 = scmp.lt.s32.totalorder %s37, 1
        %s759 = scalar_select %p758, %s37, 1
        %s760 = smul.addr %s759, 4
        %s761 = scalar_lea.vmem %s1, %s760
        %p762 = scmp.lt.s32.totalorder %s37, 1
        %s763 = scalar_select %p762, %s37, 1
        %s764 = smul.addr %s763, 4
        %s765 = scalar_lea.vmem %s2, %s764
        %p766 = scmp.lt.s32.totalorder %s37, 1
        %s767 = scalar_select %p766, %s37, 1
        %s768 = smul.addr %s767, 4
        %s769 = scalar_lea.vmem %s3, %s768
        %p770 = scmp.lt.s32.totalorder %s37, 1
        %s771 = scalar_select %p770, %s37, 1
        %s772 = smul.addr %s771, 4
        %s773 = scalar_lea.vmem %s4, %s772
        %v775 = vld [vmem:[%s757] sm:$0xf]
        %v776 = vunpack.c.l.bf16 %v775
        %v777 = vld [vmem:[%s5] sm:$0xf]
        %v778 = vld [vmem:[%s5 + $0x4] sm:$0xf]
        %v779 = vld [vmem:[%s5 + $0x8] sm:$0xf]
        %v780 = vld [vmem:[%s5 + $0xc] sm:$0xf]
        %v785 = vunpack.c.l.b16 %v777
        %v786 = vunpack.c.l.b16 %v778
        %v787 = vunpack.c.l.b16 %v779
        %v788 = vunpack.c.l.b16 %v780
        %v789 = vpack.c.b16 %v786, %v785
        %v790 = vpack.c.b16 %v788, %v787
        %vm793 = vcmask 261120
        %v795 = vsel %vm793, %v775, 0
        %797 = vmatpush.bf16.msra.mxu0 0
        %798 = vmatpush.bf16.msra.mxu0 0
        %799 = vmatpush.bf16.msra.mxu0 0
        %800 = vmatpush.bf16.msra.mxu0 0
        %801 = vmatpush.bf16.msra.mxu0 0
        %802 = vmatpush.bf16.msra.mxu0 0
        %803 = vmatpush.bf16.msra.mxu0 %v790
        %804 = vmatpush.bf16.msra.mxu0 %v789
        %805 = vmatmul.bf16.gmra.mxu0 %v795
        %v806 = vpop.f32.mrf.mxu0
        %v807 = vadd.f32 0.0, %v806
        %v808 = vpop.f32.mrf.mxu0
        %809 = vdwg.mxu0
        %v810 = vld [vmem:[%s769] sm:$0xf]
        %v811 = vunpack.c.l.bf16 %v810
        %vm812 = vcmp.eq.f32.partialorder %v811, 0.0
        %v813 = vsel %vm812, -1e+20, 0.0
        %v814 = vpack.c.bf16 %v807, %v807
        %816 = vrot.lane.b32.xlu0 %v814, 96
        %v817 = vpop.permute.xlu0 %816
        %vm818 = vcmask 64512
        %v820 = vsel %vm818, %v814, 0
        %v823 = vsel %vm818, %v817, 0
        %825 = vmatpush.bf16.xpose.msra.mxu0 0
        %826 = vmatpush.bf16.xpose.msra.mxu0 0
        %827 = vmatpush.bf16.xpose.msra.mxu0 0
        %828 = vmatpush.bf16.xpose.msra.mxu0 0
        %829 = vmatpush.bf16.xpose.msra.mxu0 0
        %830 = vmatpush.bf16.xpose.msra.mxu0 0
        %831 = vmatpush.bf16.xpose.msra.mxu0 0
        %832 = vmatpush.bf16.xpose.msra.mxu0 %v823
        %833 = vmatmul.bf16.gmra.mxu0 %v820
        %v834 = vpop.f32.mrf.mxu0
        %v835 = vadd.f32 %v813, %v834
        %v836 = vpop.f32.mrf.mxu0
        %837 = vdwg.mxu0
        %v838 = vsel %vm818, %v835, -inf
        %839 = vmax.xlane.f32.xlu0 %v838
        %v840 = vpop.xlane.xlu0 %839
        %v841 = vsub.f32 %v835, %v840
        %v842 = vmul.f32 %v841, 1.442695
        %v843 = vpow.pop %v842
        %v844 = vsel %vm818, %v843, 0.0
        %845 = vadd.xlane.f32.xlu0 %v844
        %v846 = vpop.xlane.xlu0 %845
        %v847 = vrcp.pop %v846
        %v848 = vmul.f32 %v843, %v847
        %v849 = vpack.c.bf16 %v848, %v848
        %850 = vrot.lane.b32.xlu0 %v814, 64
        %v851 = vpop.permute.xlu0 %850
        %v853 = vsel %vm818, %v849, 0
        %vm855 = vcmask 1043456
        %v857 = vsel %vm855, %v851, 0
        %859 = vmatpush.bf16.msra.mxu0 0
        %860 = vmatpush.bf16.msra.mxu0 0
        %861 = vmatpush.bf16.msra.mxu0 0
        %862 = vmatpush.bf16.msra.mxu0 0
        %863 = vmatpush.bf16.msra.mxu0 0
        %864 = vmatpush.bf16.msra.mxu0 0
        %865 = vmatpush.bf16.msra.mxu0 0
        %866 = vmatpush.bf16.msra.mxu0 %v857
        %867 = vmatmul.bf16.gmra.mxu0 %v853
        %v868 = vpop.f32.mrf.mxu0
        %v869 = vadd.f32 0.0, %v868
        %v870 = vpop.f32.mrf.mxu0
        %871 = vdwg.mxu0
        %872 = vst.msk [vmem:[#allocation2] sm:$0xff] %vm818, %v869
        %873 = vrot.lane.b32.xlu0 %v814, 120
        %v874 = vpop.permute.xlu0 %873
        %875 = vrot.lane.b32.xlu0 %v814, 88
        %v876 = vpop.permute.xlu0 %875
        %v878 = vsel %vm818, %v874, 0
        %v881 = vsel %vm818, %v876, 0
        %883 = vmatpush.bf16.xpose.msra.mxu0 0
        %884 = vmatpush.bf16.xpose.msra.mxu0 0
        %885 = vmatpush.bf16.xpose.msra.mxu0 0
        %886 = vmatpush.bf16.xpose.msra.mxu0 0
        %887 = vmatpush.bf16.xpose.msra.mxu0 0
        %888 = vmatpush.bf16.xpose.msra.mxu0 0
        %889 = vmatpush.bf16.xpose.msra.mxu0 0
        %890 = vmatpush.bf16.xpose.msra.mxu0 %v881
        %891 = vmatmul.bf16.gmra.mxu0 %v878
        %v892 = vpop.f32.mrf.mxu0
        %v893 = vadd.f32 %v813, %v892
        %v894 = vpop.f32.mrf.mxu0
        %895 = vdwg.mxu0
        %v896 = vsel %vm818, %v893, -inf
        %897 = vmax.xlane.f32.xlu0 %v896
        %v898 = vpop.xlane.xlu0 %897
        %v899 = vsub.f32 %v893, %v898
        %v900 = vmul.f32 %v899, 1.442695
        %v901 = vpow.pop %v900
        %v902 = vsel %vm818, %v901, 0.0
        %903 = vadd.xlane.f32.xlu0 %v902
        %v904 = vpop.xlane.xlu0 %903
        %v905 = vrcp.pop %v904
        %v906 = vmul.f32 %v901, %v905
        %v907 = vpack.c.bf16 %v906, %v906
        %908 = vrot.lane.b32.xlu0 %v814, 56
        %v909 = vpop.permute.xlu0 %908
        %v911 = vsel %vm818, %v907, 0
        %v914 = vsel %vm855, %v909, 0
        %916 = vmatpush.bf16.msra.mxu0 0
        %917 = vmatpush.bf16.msra.mxu0 0
        %918 = vmatpush.bf16.msra.mxu0 0
        %919 = vmatpush.bf16.msra.mxu0 0
        %920 = vmatpush.bf16.msra.mxu0 0
        %921 = vmatpush.bf16.msra.mxu0 0
        %922 = vmatpush.bf16.msra.mxu0 0
        %923 = vmatpush.bf16.msra.mxu0 %v914
        %924 = vmatmul.bf16.gmra.mxu0 %v911
        %v925 = vpop.f32.mrf.mxu0
        %v926 = vadd.f32 0.0, %v925
        %v927 = vpop.f32.mrf.mxu0
        %928 = vdwg.mxu0
        %930 = vrot.lane.b32.xlu0 %v926, 8
        %v931 = vpop.permute.xlu0 %930
        %vm933 = vcmask 130112
        %934 = vst.msk [vmem:[#allocation2] sm:$0xff] %vm933, %v931
        %935 = vrot.lane.b32.xlu0 %v814, 112
        %v936 = vpop.permute.xlu0 %935
        %937 = vrot.lane.b32.xlu0 %v814, 80
        %v938 = vpop.permute.xlu0 %937
        %v940 = vsel %vm818, %v936, 0
        %v943 = vsel %vm818, %v938, 0
        %945 = vmatpush.bf16.xpose.msra.mxu0 0
        %946 = vmatpush.bf16.xpose.msra.mxu0 0
        %947 = vmatpush.bf16.xpose.msra.mxu0 0
        %948 = vmatpush.bf16.xpose.msra.mxu0 0
        %949 = vmatpush.bf16.xpose.msra.mxu0 0
        %950 = vmatpush.bf16.xpose.msra.mxu0 0
        %951 = vmatpush.bf16.xpose.msra.mxu0 0
        %952 = vmatpush.bf16.xpose.msra.mxu0 %v943
        %953 = vmatmul.bf16.gmra.mxu0 %v940
        %v954 = vpop.f32.mrf.mxu0
        %v955 = vadd.f32 %v813, %v954
        %v956 = vpop.f32.mrf.mxu0
        %957 = vdwg.mxu0
        %v958 = vsel %vm818, %v955, -inf
        %959 = vmax.xlane.f32.xlu0 %v958
        %v960 = vpop.xlane.xlu0 %959
        %v961 = vsub.f32 %v955, %v960
        %v962 = vmul.f32 %v961, 1.442695
        %v963 = vpow.pop %v962
        %v964 = vsel %vm818, %v963, 0.0
        %965 = vadd.xlane.f32.xlu0 %v964
        %v966 = vpop.xlane.xlu0 %965
        %v967 = vrcp.pop %v966
        %v968 = vmul.f32 %v963, %v967
        %v969 = vpack.c.bf16 %v968, %v968
        %970 = vrot.lane.b32.xlu0 %v814, 48
        %v971 = vpop.permute.xlu0 %970
        %v973 = vsel %vm818, %v969, 0
        %v976 = vsel %vm855, %v971, 0
        %978 = vmatpush.bf16.msra.mxu0 0
        %979 = vmatpush.bf16.msra.mxu0 0
        %980 = vmatpush.bf16.msra.mxu0 0
        %981 = vmatpush.bf16.msra.mxu0 0
        %982 = vmatpush.bf16.msra.mxu0 0
        %983 = vmatpush.bf16.msra.mxu0 0
        %984 = vmatpush.bf16.msra.mxu0 0
        %985 = vmatpush.bf16.msra.mxu0 %v976
        %986 = vmatmul.bf16.gmra.mxu0 %v973
        %v987 = vpop.f32.mrf.mxu0
        %v988 = vadd.f32 0.0, %v987
        %v989 = vpop.f32.mrf.mxu0
        %990 = vdwg.mxu0
        %992 = vrot.lane.b32.xlu0 %v988, 16
        %v993 = vpop.permute.xlu0 %992
        %vm995 = vcmask 195712
        %996 = vst.msk [vmem:[#allocation2] sm:$0xff] %vm995, %v993
        %997 = vrot.lane.b32.xlu0 %v814, 104
        %v998 = vpop.permute.xlu0 %997
        %999 = vrot.lane.b32.xlu0 %v814, 72
        %v1000 = vpop.permute.xlu0 %999
        %v1002 = vsel %vm818, %v998, 0
        %v1005 = vsel %vm818, %v1000, 0
        %1007 = vmatpush.bf16.xpose.msra.mxu0 0
        %1008 = vmatpush.bf16.xpose.msra.mxu0 0
        %1009 = vmatpush.bf16.xpose.msra.mxu0 0
        %1010 = vmatpush.bf16.xpose.msra.mxu0 0
        %1011 = vmatpush.bf16.xpose.msra.mxu0 0
        %1012 = vmatpush.bf16.xpose.msra.mxu0 0
        %1013 = vmatpush.bf16.xpose.msra.mxu0 0
        %1014 = vmatpush.bf16.xpose.msra.mxu0 %v1005
        %1015 = vmatmul.bf16.gmra.mxu0 %v1002
        %v1016 = vpop.f32.mrf.mxu0
        %v1017 = vadd.f32 %v813, %v1016
        %v1018 = vpop.f32.mrf.mxu0
        %1019 = vdwg.mxu0
        %v1020 = vsel %vm818, %v1017, -inf
        %1021 = vmax.xlane.f32.xlu0 %v1020
        %v1022 = vpop.xlane.xlu0 %1021
        %v1023 = vsub.f32 %v1017, %v1022
        %v1024 = vmul.f32 %v1023, 1.442695
        %v1025 = vpow.pop %v1024
        %v1026 = vsel %vm818, %v1025, 0.0
        %1027 = vadd.xlane.f32.xlu0 %v1026
        %v1028 = vpop.xlane.xlu0 %1027
        %v1029 = vrcp.pop %v1028
        %v1030 = vmul.f32 %v1025, %v1029
        %v1031 = vpack.c.bf16 %v1030, %v1030
        %1032 = vrot.lane.b32.xlu0 %v814, 40
        %v1033 = vpop.permute.xlu0 %1032
        %v1035 = vsel %vm818, %v1031, 0
        %v1038 = vsel %vm855, %v1033, 0
        %1040 = vmatpush.bf16.msra.mxu0 0
        %1041 = vmatpush.bf16.msra.mxu0 0
        %1042 = vmatpush.bf16.msra.mxu0 0
        %1043 = vmatpush.bf16.msra.mxu0 0
        %1044 = vmatpush.bf16.msra.mxu0 0
        %1045 = vmatpush.bf16.msra.mxu0 0
        %1046 = vmatpush.bf16.msra.mxu0 0
        %1047 = vmatpush.bf16.msra.mxu0 %v1038
        %1048 = vmatmul.bf16.gmra.mxu0 %v1035
        %v1049 = vpop.f32.mrf.mxu0
        %v1050 = vadd.f32 0.0, %v1049
        %v1051 = vpop.f32.mrf.mxu0
        %1052 = vdwg.mxu0
        %1054 = vrot.lane.b32.xlu0 %v1050, 24
        %v1055 = vpop.permute.xlu0 %1054
        %vm1057 = vcmask 261312
        %1058 = vst.msk [vmem:[#allocation2] sm:$0xff] %vm1057, %v1055
        %v1059 = vld [vmem:[#allocation2] sm:$0xff]
        %v1060 = vpack.c.bf16 %v1059, %v1059
        %v1061 = vld [vmem:[%s6] sm:$0xf]
        %v1062 = vld [vmem:[%s6 + $0x4] sm:$0xf]
        %v1063 = vld [vmem:[%s6 + $0x8] sm:$0xf]
        %v1064 = vld [vmem:[%s6 + $0xc] sm:$0xf]
        %v1065 = vld [vmem:[%s7] sm:$0x1]
        %v1067 = vperm.slane %v1065, 0
        %v1073 = vunpack.c.l.b16 %v1061
        %v1074 = vunpack.c.l.b16 %v1062
        %v1075 = vunpack.c.l.b16 %v1063
        %v1076 = vunpack.c.l.b16 %v1064
        %v1077 = vpack.c.b16 %v1074, %v1073
        %v1078 = vpack.c.b16 %v1076, %v1075
        %v1082 = vsel %vm793, %v1060, 0
        %1084 = vmatpush.bf16.msra.mxu0 0
        %1085 = vmatpush.bf16.msra.mxu0 0
        %1086 = vmatpush.bf16.msra.mxu0 0
        %1087 = vmatpush.bf16.msra.mxu0 0
        %1088 = vmatpush.bf16.msra.mxu0 0
        %1089 = vmatpush.bf16.msra.mxu0 0
        %1090 = vmatpush.bf16.msra.mxu0 %v1078
        %1091 = vmatpush.bf16.msra.mxu0 %v1077
        %1092 = vmatmul.bf16.gmra.mxu0 %v1082
        %v1093 = vpop.f32.mrf.mxu0
        %v1094 = vadd.f32 %v1067, %v1093
        %v1095 = vpop.f32.mrf.mxu0
        %1096 = vdwg.mxu0
        %v1097 = vadd.f32 %v1094, %v776
        %v1098 = vld [vmem:[%s8] sm:$0x1]
        %v1099 = vld [vmem:[%s9] sm:$0x1]
        %v1100 = vsel %vm793, %v1097, 0.0
        %1101 = vadd.xlane.f32.xlu0 %v1100
        %v1102 = vpop.xlane.xlu0 %1101
        %v1103 = vmul.f32 %v1102, 0.03125
        %v1104 = vsub.f32 %v1097, %v1103
        %v1105 = vmul.f32 %v1104, %v1104
        %v1106 = vsel %vm793, %v1105, 0.0
        %1107 = vadd.xlane.f32.xlu0 %v1106
        %v1108 = vpop.xlane.xlu0 %1107
        %v1109 = vmul.f32 %v1108, 0.03125
        %v1110 = vadd.f32 %v1109, 1e-05
        %v1111 = vrsqrt.pop %v1110
        %v1112 = vmul.f32 %v1111, %v1110
        %v1113 = vmul.f32 %v1112, %v1111
        %v1114 = vmul.f32 0.5, %v1113
        %v1115 = vsub.f32 1.5, %v1114
        %v1116 = vmul.f32 %v1111, %v1115
        %vm1117 = vweird.f32 %v1110
        %vm1118 = vweird.f32 %v1111
        %vm1119 = vmor %vm1117, %vm1118
        %v1120 = vsel %vm1119, %v1111, %v1116
        %v1121 = vmul.f32 %v1104, %v1120
        %v1123 = vperm.slane %v1098, 0
        %v1125 = vmul.f32 %v1121, %v1123
        %v1127 = vperm.slane %v1099, 0
        %v1129 = vadd.f32 %v1125, %v1127
        %v1130 = vpack.c.bf16 %v1129, %v1129
        %v1131 = vld [vmem:[%s10] sm:$0xf]
        %v1132 = vld [vmem:[%s10 + $0x4] sm:$0xf]
        %v1133 = vld [vmem:[%s10 + $0x8] sm:$0xf]
        %v1134 = vld [vmem:[%s10 + $0xc] sm:$0xf]
        %v1139 = vunpack.c.l.b16 %v1131
        %v1140 = vunpack.c.l.b16 %v1132
        %v1141 = vunpack.c.l.b16 %v1133
        %v1142 = vunpack.c.l.b16 %v1134
        %v1143 = vpack.c.b16 %v1140, %v1139
        %v1144 = vpack.c.b16 %v1142, %v1141
        %v1148 = vsel %vm793, %v1130, 0
        %1150 = vmatpush.bf16.msra.mxu0 0
        %1151 = vmatpush.bf16.msra.mxu0 0
        %1152 = vmatpush.bf16.msra.mxu0 0
        %1153 = vmatpush.bf16.msra.mxu0 0
        %1154 = vmatpush.bf16.msra.mxu0 0
        %1155 = vmatpush.bf16.msra.mxu0 0
        %1156 = vmatpush.bf16.msra.mxu0 %v1144
        %1157 = vmatpush.bf16.msra.mxu0 %v1143
        %1158 = vmatmul.bf16.gmra.mxu0 %v1148
        %v1159 = vpop.f32.mrf.mxu0
        %v1160 = vadd.f32 0.0, %v1159
        %v1161 = vpop.f32.mrf.mxu0
        %1162 = vdwg.mxu0
        %v1163 = vld [vmem:[%s765] sm:$0xf]
        %v1164 = vld [vmem:[%s11] sm:$0xf]
        %v1165 = vld [vmem:[%s11 + $0x4] sm:$0xf]
        %v1166 = vld [vmem:[%s11 + $0x8] sm:$0xf]
        %v1167 = vld [vmem:[%s11 + $0xc] sm:$0xf]
        %v1172 = vunpack.c.l.b16 %v1164
        %v1173 = vunpack.c.l.b16 %v1165
        %v1174 = vunpack.c.l.b16 %v1166
        %v1175 = vunpack.c.l.b16 %v1167
        %v1176 = vpack.c.b16 %v1173, %v1172
        %v1177 = vpack.c.b16 %v1175, %v1174
        %v1181 = vsel %vm793, %v1163, 0
        %1183 = vmatpush.bf16.msra.mxu0 0
        %1184 = vmatpush.bf16.msra.mxu0 0
        %1185 = vmatpush.bf16.msra.mxu0 0
        %1186 = vmatpush.bf16.msra.mxu0 0
        %1187 = vmatpush.bf16.msra.mxu0 0
        %1188 = vmatpush.bf16.msra.mxu0 0
        %1189 = vmatpush.bf16.msra.mxu0 %v1177
        %1190 = vmatpush.bf16.msra.mxu0 %v1176
        %1191 = vmatmul.bf16.gmra.mxu0 %v1181
        %v1192 = vpop.f32.mrf.mxu0
        %v1193 = vadd.f32 0.0, %v1192
        %v1194 = vpop.f32.mrf.mxu0
        %1195 = vdwg.mxu0
        %v1196 = vld [vmem:[%s761] sm:$0xf]
        %v1197 = vld [vmem:[%s12] sm:$0xf]
        %v1198 = vld [vmem:[%s12 + $0x4] sm:$0xf]
        %v1199 = vld [vmem:[%s12 + $0x8] sm:$0xf]
        %v1200 = vld [vmem:[%s12 + $0xc] sm:$0xf]
        %v1205 = vunpack.c.l.b16 %v1197
        %v1206 = vunpack.c.l.b16 %v1198
        %v1207 = vunpack.c.l.b16 %v1199
        %v1208 = vunpack.c.l.b16 %v1200
        %v1209 = vpack.c.b16 %v1206, %v1205
        %v1210 = vpack.c.b16 %v1208, %v1207
        %v1214 = vsel %vm793, %v1196, 0
        %1216 = vmatpush.bf16.msra.mxu0 0
        %1217 = vmatpush.bf16.msra.mxu0 0
        %1218 = vmatpush.bf16.msra.mxu0 0
        %1219 = vmatpush.bf16.msra.mxu0 0
        %1220 = vmatpush.bf16.msra.mxu0 0
        %1221 = vmatpush.bf16.msra.mxu0 0
        %1222 = vmatpush.bf16.msra.mxu0 %v1210
        %1223 = vmatpush.bf16.msra.mxu0 %v1209
        %1224 = vmatmul.bf16.gmra.mxu0 %v1214
        %v1225 = vpop.f32.mrf.mxu0
        %v1226 = vadd.f32 0.0, %v1225
        %v1227 = vpop.f32.mrf.mxu0
        %1228 = vdwg.mxu0
        %v1229 = vld [vmem:[%s773] sm:$0xf]
        %v1230 = vunpack.c.l.bf16 %v1229
        %vm1231 = vcmp.eq.f32.partialorder %v1230, 0.0
        %v1232 = vsel %vm1231, -1e+20, 0.0
        %v1233 = vpack.c.bf16 %v1160, %v1160
        %v1234 = vpack.c.bf16 %v1193, %v1193
        %v1235 = vpack.c.bf16 %v1226, %v1226
        %v1237 = vsel %vm818, %v1233, 0
        %v1240 = vsel %vm818, %v1234, 0
        %1242 = vmatpush.bf16.xpose.msra.mxu0 0
        %1243 = vmatpush.bf16.xpose.msra.mxu0 0
        %1244 = vmatpush.bf16.xpose.msra.mxu0 0
        %1245 = vmatpush.bf16.xpose.msra.mxu0 0
        %1246 = vmatpush.bf16.xpose.msra.mxu0 0
        %1247 = vmatpush.bf16.xpose.msra.mxu0 0
        %1248 = vmatpush.bf16.xpose.msra.mxu0 0
        %1249 = vmatpush.bf16.xpose.msra.mxu0 %v1240
        %1250 = vmatmul.bf16.gmra.mxu0 %v1237
        %v1251 = vpop.f32.mrf.mxu0
        %v1252 = vadd.f32 %v1232, %v1251
        %v1253 = vpop.f32.mrf.mxu0
        %1254 = vdwg.mxu0
        %v1255 = vsel %vm818, %v1252, -inf
        %1256 = vmax.xlane.f32.xlu0 %v1255
        %v1257 = vpop.xlane.xlu0 %1256
        %v1258 = vsub.f32 %v1252, %v1257
        %v1259 = vmul.f32 %v1258, 1.442695
        %v1260 = vpow.pop %v1259
        %v1261 = vsel %vm818, %v1260, 0.0
        %1262 = vadd.xlane.f32.xlu0 %v1261
        %v1263 = vpop.xlane.xlu0 %1262
        %v1264 = vrcp.pop %v1263
        %v1265 = vmul.f32 %v1260, %v1264
        %v1266 = vpack.c.bf16 %v1265, %v1265
        %v1268 = vsel %vm818, %v1266, 0
        %v1271 = vsel %vm855, %v1235, 0
        %1273 = vmatpush.bf16.msra.mxu0 0
        %1274 = vmatpush.bf16.msra.mxu0 0
        %1275 = vmatpush.bf16.msra.mxu0 0
        %1276 = vmatpush.bf16.msra.mxu0 0
        %1277 = vmatpush.bf16.msra.mxu0 0
        %1278 = vmatpush.bf16.msra.mxu0 0
        %1279 = vmatpush.bf16.msra.mxu0 0
        %1280 = vmatpush.bf16.msra.mxu0 %v1271
        %1281 = vmatmul.bf16.gmra.mxu0 %v1268
        %v1282 = vpop.f32.mrf.mxu0
        %v1283 = vadd.f32 0.0, %v1282
        %v1284 = vpop.f32.mrf.mxu0
        %1285 = vdwg.mxu0
        %1286 = vst.msk [vmem:[#allocation2] sm:$0xff] %vm818, %v1283
        %1288 = vrot.lane.b32.xlu0 %v1233, 120
        %v1289 = vpop.permute.xlu0 %1288
        %1291 = vrot.lane.b32.xlu0 %v1234, 120
        %v1292 = vpop.permute.xlu0 %1291
        %v1294 = vsel %vm818, %v1289, 0
        %v1297 = vsel %vm818, %v1292, 0
        %1299 = vmatpush.bf16.xpose.msra.mxu0 0
        %1300 = vmatpush.bf16.xpose.msra.mxu0 0
        %1301 = vmatpush.bf16.xpose.msra.mxu0 0
        %1302 = vmatpush.bf16.xpose.msra.mxu0 0
        %1303 = vmatpush.bf16.xpose.msra.mxu0 0
        %1304 = vmatpush.bf16.xpose.msra.mxu0 0
        %1305 = vmatpush.bf16.xpose.msra.mxu0 0
        %1306 = vmatpush.bf16.xpose.msra.mxu0 %v1297
        %1307 = vmatmul.bf16.gmra.mxu0 %v1294
        %v1308 = vpop.f32.mrf.mxu0
        %v1309 = vadd.f32 %v1232, %v1308
        %v1310 = vpop.f32.mrf.mxu0
        %1311 = vdwg.mxu0
        %v1312 = vsel %vm818, %v1309, -inf
        %1313 = vmax.xlane.f32.xlu0 %v1312
        %v1314 = vpop.xlane.xlu0 %1313
        %v1315 = vsub.f32 %v1309, %v1314
        %v1316 = vmul.f32 %v1315, 1.442695
        %v1317 = vpow.pop %v1316
        %v1318 = vsel %vm818, %v1317, 0.0
        %1319 = vadd.xlane.f32.xlu0 %v1318
        %v1320 = vpop.xlane.xlu0 %1319
        %v1321 = vrcp.pop %v1320
        %v1322 = vmul.f32 %v1317, %v1321
        %v1323 = vpack.c.bf16 %v1322, %v1322
        %1325 = vrot.lane.b32.xlu0 %v1235, 120
        %v1326 = vpop.permute.xlu0 %1325
        %v1328 = vsel %vm818, %v1323, 0
        %v1331 = vsel %vm855, %v1326, 0
        %1333 = vmatpush.bf16.msra.mxu0 0
        %1334 = vmatpush.bf16.msra.mxu0 0
        %1335 = vmatpush.bf16.msra.mxu0 0
        %1336 = vmatpush.bf16.msra.mxu0 0
        %1337 = vmatpush.bf16.msra.mxu0 0
        %1338 = vmatpush.bf16.msra.mxu0 0
        %1339 = vmatpush.bf16.msra.mxu0 0
        %1340 = vmatpush.bf16.msra.mxu0 %v1331
        %1341 = vmatmul.bf16.gmra.mxu0 %v1328
        %v1342 = vpop.f32.mrf.mxu0
        %v1343 = vadd.f32 0.0, %v1342
        %v1344 = vpop.f32.mrf.mxu0
        %1345 = vdwg.mxu0
        %1347 = vrot.lane.b32.xlu0 %v1343, 8
        %v1348 = vpop.permute.xlu0 %1347
        %1350 = vst.msk [vmem:[#allocation2] sm:$0xff] %vm933, %v1348
        %1351 = vrot.lane.b32.xlu0 %v1233, 112
        %v1352 = vpop.permute.xlu0 %1351
        %1353 = vrot.lane.b32.xlu0 %v1234, 112
        %v1354 = vpop.permute.xlu0 %1353
        %v1356 = vsel %vm818, %v1352, 0
        %v1359 = vsel %vm818, %v1354, 0
        %1361 = vmatpush.bf16.xpose.msra.mxu0 0
        %1362 = vmatpush.bf16.xpose.msra.mxu0 0
        %1363 = vmatpush.bf16.xpose.msra.mxu0 0
        %1364 = vmatpush.bf16.xpose.msra.mxu0 0
        %1365 = vmatpush.bf16.xpose.msra.mxu0 0
        %1366 = vmatpush.bf16.xpose.msra.mxu0 0
        %1367 = vmatpush.bf16.xpose.msra.mxu0 0
        %1368 = vmatpush.bf16.xpose.msra.mxu0 %v1359
        %1369 = vmatmul.bf16.gmra.mxu0 %v1356
        %v1370 = vpop.f32.mrf.mxu0
        %v1371 = vadd.f32 %v1232, %v1370
        %v1372 = vpop.f32.mrf.mxu0
        %1373 = vdwg.mxu0
        %v1374 = vsel %vm818, %v1371, -inf
        %1375 = vmax.xlane.f32.xlu0 %v1374
        %v1376 = vpop.xlane.xlu0 %1375
        %v1377 = vsub.f32 %v1371, %v1376
        %v1378 = vmul.f32 %v1377, 1.442695
        %v1379 = vpow.pop %v1378
        %v1380 = vsel %vm818, %v1379, 0.0
        %1381 = vadd.xlane.f32.xlu0 %v1380
        %v1382 = vpop.xlane.xlu0 %1381
        %v1383 = vrcp.pop %v1382
        %v1384 = vmul.f32 %v1379, %v1383
        %v1385 = vpack.c.bf16 %v1384, %v1384
        %1386 = vrot.lane.b32.xlu0 %v1235, 112
        %v1387 = vpop.permute.xlu0 %1386
        %v1389 = vsel %vm818, %v1385, 0
        %v1392 = vsel %vm855, %v1387, 0
        %1394 = vmatpush.bf16.msra.mxu0 0
        %1395 = vmatpush.bf16.msra.mxu0 0
        %1396 = vmatpush.bf16.msra.mxu0 0
        %1397 = vmatpush.bf16.msra.mxu0 0
        %1398 = vmatpush.bf16.msra.mxu0 0
        %1399 = vmatpush.bf16.msra.mxu0 0
        %1400 = vmatpush.bf16.msra.mxu0 0
        %1401 = vmatpush.bf16.msra.mxu0 %v1392
        %1402 = vmatmul.bf16.gmra.mxu0 %v1389
        %v1403 = vpop.f32.mrf.mxu0
        %v1404 = vadd.f32 0.0, %v1403
        %v1405 = vpop.f32.mrf.mxu0
        %1406 = vdwg.mxu0
        %1408 = vrot.lane.b32.xlu0 %v1404, 16
        %v1409 = vpop.permute.xlu0 %1408
        %1411 = vst.msk [vmem:[#allocation2] sm:$0xff] %vm995, %v1409
        %1412 = vrot.lane.b32.xlu0 %v1233, 104
        %v1413 = vpop.permute.xlu0 %1412
        %1414 = vrot.lane.b32.xlu0 %v1234, 104
        %v1415 = vpop.permute.xlu0 %1414
        %v1417 = vsel %vm818, %v1413, 0
        %v1420 = vsel %vm818, %v1415, 0
        %1422 = vmatpush.bf16.xpose.msra.mxu0 0
        %1423 = vmatpush.bf16.xpose.msra.mxu0 0
        %1424 = vmatpush.bf16.xpose.msra.mxu0 0
        %1425 = vmatpush.bf16.xpose.msra.mxu0 0
        %1426 = vmatpush.bf16.xpose.msra.mxu0 0
        %1427 = vmatpush.bf16.xpose.msra.mxu0 0
        %1428 = vmatpush.bf16.xpose.msra.mxu0 0
        %1429 = vmatpush.bf16.xpose.msra.mxu0 %v1420
        %1430 = vmatmul.bf16.gmra.mxu0 %v1417
        %v1431 = vpop.f32.mrf.mxu0
        %v1432 = vadd.f32 %v1232, %v1431
        %v1433 = vpop.f32.mrf.mxu0
        %1434 = vdwg.mxu0
        %v1435 = vsel %vm818, %v1432, -inf
        %1436 = vmax.xlane.f32.xlu0 %v1435
        %v1437 = vpop.xlane.xlu0 %1436
        %v1438 = vsub.f32 %v1432, %v1437
        %v1439 = vmul.f32 %v1438, 1.442695
        %v1440 = vpow.pop %v1439
        %v1441 = vsel %vm818, %v1440, 0.0
        %1442 = vadd.xlane.f32.xlu0 %v1441
        %v1443 = vpop.xlane.xlu0 %1442
        %v1444 = vrcp.pop %v1443
        %v1445 = vmul.f32 %v1440, %v1444
        %v1446 = vpack.c.bf16 %v1445, %v1445
        %1447 = vrot.lane.b32.xlu0 %v1235, 104
        %v1448 = vpop.permute.xlu0 %1447
        %v1450 = vsel %vm818, %v1446, 0
        %v1453 = vsel %vm855, %v1448, 0
        %1455 = vmatpush.bf16.msra.mxu0 0
        %1456 = vmatpush.bf16.msra.mxu0 0
        %1457 = vmatpush.bf16.msra.mxu0 0
        %1458 = vmatpush.bf16.msra.mxu0 0
        %1459 = vmatpush.bf16.msra.mxu0 0
        %1460 = vmatpush.bf16.msra.mxu0 0
        %1461 = vmatpush.bf16.msra.mxu0 0
        %1462 = vmatpush.bf16.msra.mxu0 %v1453
        %1463 = vmatmul.bf16.gmra.mxu0 %v1450
        %v1464 = vpop.f32.mrf.mxu0
        %v1465 = vadd.f32 0.0, %v1464
        %v1466 = vpop.f32.mrf.mxu0
        %1467 = vdwg.mxu0
        %1469 = vrot.lane.b32.xlu0 %v1465, 24
        %v1470 = vpop.permute.xlu0 %1469
        %1472 = vst.msk [vmem:[#allocation2] sm:$0xff] %vm1057, %v1470
        %v1473 = vld [vmem:[#allocation2] sm:$0xff]
        %v1474 = vpack.c.bf16 %v1473, %v1473
        %v1475 = vld [vmem:[%s13] sm:$0xf]
        %v1476 = vld [vmem:[%s13 + $0x4] sm:$0xf]
        %v1477 = vld [vmem:[%s13 + $0x8] sm:$0xf]
        %v1478 = vld [vmem:[%s13 + $0xc] sm:$0xf]
        %v1479 = vld [vmem:[%s14] sm:$0x1]
        %v1481 = vperm.slane %v1479, 0
        %v1487 = vunpack.c.l.b16 %v1475
        %v1488 = vunpack.c.l.b16 %v1476
        %v1489 = vunpack.c.l.b16 %v1477
        %v1490 = vunpack.c.l.b16 %v1478
        %v1491 = vpack.c.b16 %v1488, %v1487
        %v1492 = vpack.c.b16 %v1490, %v1489
        %v1496 = vsel %vm793, %v1474, 0
        %1498 = vmatpush.bf16.msra.mxu0 0
        %1499 = vmatpush.bf16.msra.mxu0 0
        %1500 = vmatpush.bf16.msra.mxu0 0
        %1501 = vmatpush.bf16.msra.mxu0 0
        %1502 = vmatpush.bf16.msra.mxu0 0
        %1503 = vmatpush.bf16.msra.mxu0 0
        %1504 = vmatpush.bf16.msra.mxu0 %v1492
        %1505 = vmatpush.bf16.msra.mxu0 %v1491
        %1506 = vmatmul.bf16.gmra.mxu0 %v1496
        %v1507 = vpop.f32.mrf.mxu0
        %v1508 = vadd.f32 %v1481, %v1507
        %v1509 = vpop.f32.mrf.mxu0
        %1510 = vdwg.mxu0
        %v1511 = vadd.f32 %v1508, %v1129
        %v1512 = vld [vmem:[%s15] sm:$0x1]
        %v1513 = vld [vmem:[%s16] sm:$0x1]
        %v1514 = vsel %vm793, %v1511, 0.0
        %1515 = vadd.xlane.f32.xlu0 %v1514
        %v1516 = vpop.xlane.xlu0 %1515
        %v1517 = vmul.f32 %v1516, 0.03125
        %v1518 = vsub.f32 %v1511, %v1517
        %v1519 = vmul.f32 %v1518, %v1518
        %v1520 = vsel %vm793, %v1519, 0.0
        %1521 = vadd.xlane.f32.xlu0 %v1520
        %v1522 = vpop.xlane.xlu0 %1521
        %v1523 = vmul.f32 %v1522, 0.03125
        %v1524 = vadd.f32 %v1523, 1e-05
        %v1525 = vrsqrt.pop %v1524
        %v1526 = vmul.f32 %v1525, %v1524
        %v1527 = vmul.f32 %v1526, %v1525
        %v1528 = vmul.f32 0.5, %v1527
        %v1529 = vsub.f32 1.5, %v1528
        %v1530 = vmul.f32 %v1525, %v1529
        %vm1531 = vweird.f32 %v1524
        %vm1532 = vweird.f32 %v1525
        %vm1533 = vmor %vm1531, %vm1532
        %v1534 = vsel %vm1533, %v1525, %v1530
        %v1535 = vmul.f32 %v1518, %v1534
        %v1537 = vperm.slane %v1512, 0
        %v1539 = vmul.f32 %v1535, %v1537
        %v1541 = vperm.slane %v1513, 0
        %v1543 = vadd.f32 %v1539, %v1541
        %v1544 = vpack.c.bf16 %v1543, %v1543
        %v1545 = vld [vmem:[%s17] sm:$0xf]
        %v1546 = vld [vmem:[%s17 + $0x4] sm:$0xf]
        %v1547 = vld [vmem:[%s17 + $0x8] sm:$0xf]
        %v1548 = vld [vmem:[%s17 + $0xc] sm:$0xf]
        %v1549 = vld [vmem:[%s18] sm:$0x1]
        %v1551 = vperm.slane %v1549, 0
        %v1557 = vunpack.c.l.b16 %v1545
        %v1558 = vunpack.c.l.b16 %v1546
        %v1559 = vunpack.c.l.b16 %v1547
        %v1560 = vunpack.c.l.b16 %v1548
        %v1561 = vpack.c.b16 %v1558, %v1557
        %v1562 = vpack.c.b16 %v1560, %v1559
        %v1566 = vsel %vm793, %v1544, 0
        %1568 = vmatpush.bf16.msra.mxu0 0
        %1569 = vmatpush.bf16.msra.mxu0 0
        %1570 = vmatpush.bf16.msra.mxu0 0
        %1571 = vmatpush.bf16.msra.mxu0 0
        %1572 = vmatpush.bf16.msra.mxu0 0
        %1573 = vmatpush.bf16.msra.mxu0 0
        %1574 = vmatpush.bf16.msra.mxu0 %v1562
        %1575 = vmatpush.bf16.msra.mxu0 %v1561
        %1576 = vmatmul.bf16.gmra.mxu0 %v1566
        %v1577 = vpop.f32.mrf.mxu0
        %v1578 = vadd.f32 %v1551, %v1577
        %v1579 = vpop.f32.mrf.mxu0
        %1580 = vdwg.mxu0
        %v1581 = vmax.f32 %v1578, 0.0
        %v1582 = vpack.c.bf16 %v1581, %v1581
        %v1583 = vld [vmem:[%s19] sm:$0xf]
        %v1584 = vld [vmem:[%s19 + $0x4] sm:$0xf]
        %v1585 = vld [vmem:[%s19 + $0x8] sm:$0xf]
        %v1586 = vld [vmem:[%s19 + $0xc] sm:$0xf]
        %v1587 = vld [vmem:[%s19 + $0x10] sm:$0xf]
        %v1588 = vld [vmem:[%s19 + $0x14] sm:$0xf]
        %v1589 = vld [vmem:[%s19 + $0x18] sm:$0xf]
        %v1590 = vld [vmem:[%s19 + $0x1c] sm:$0xf]
        %v1591 = vld [vmem:[%s19 + $0x20] sm:$0xf]
        %v1592 = vld [vmem:[%s19 + $0x24] sm:$0xf]
        %v1593 = vld [vmem:[%s19 + $0x28] sm:$0xf]
        %v1594 = vld [vmem:[%s19 + $0x2c] sm:$0xf]
        %v1595 = vld [vmem:[%s19 + $0x30] sm:$0xf]
        %v1596 = vld [vmem:[%s19 + $0x34] sm:$0xf]
        %v1597 = vld [vmem:[%s19 + $0x38] sm:$0xf]
        %v1598 = vld [vmem:[%s19 + $0x3c] sm:$0xf]
        %v1599 = vld [vmem:[%s20] sm:$0x1]
        %v1601 = vperm.slane %v1599, 0
        %v1619 = vunpack.c.l.b16 %v1583
        %v1620 = vunpack.c.l.b16 %v1584
        %v1621 = vunpack.c.l.b16 %v1585
        %v1622 = vunpack.c.l.b16 %v1586
        %v1623 = vunpack.c.l.b16 %v1587
        %v1624 = vunpack.c.l.b16 %v1588
        %v1625 = vunpack.c.l.b16 %v1589
        %v1626 = vunpack.c.l.b16 %v1590
        %v1627 = vunpack.c.l.b16 %v1591
        %v1628 = vunpack.c.l.b16 %v1592
        %v1629 = vunpack.c.l.b16 %v1593
        %v1630 = vunpack.c.l.b16 %v1594
        %v1631 = vunpack.c.l.b16 %v1595
        %v1632 = vunpack.c.l.b16 %v1596
        %v1633 = vunpack.c.l.b16 %v1597
        %v1634 = vunpack.c.l.b16 %v1598
        %v1635 = vpack.c.b16 %v1620, %v1619
        %v1636 = vpack.c.b16 %v1622, %v1621
        %v1637 = vpack.c.b16 %v1624, %v1623
        %v1638 = vpack.c.b16 %v1626, %v1625
        %v1639 = vpack.c.b16 %v1628, %v1627
        %v1640 = vpack.c.b16 %v1630, %v1629
        %v1641 = vpack.c.b16 %v1632, %v1631
        %v1642 = vpack.c.b16 %v1634, %v1633
        %1651 = vmatpush.bf16.msra.mxu0 %v1642
        %1652 = vmatpush.bf16.msra.mxu0 %v1641
        %1653 = vmatpush.bf16.msra.mxu0 %v1640
        %1654 = vmatpush.bf16.msra.mxu0 %v1639
        %1655 = vmatpush.bf16.msra.mxu0 %v1638
        %1656 = vmatpush.bf16.msra.mxu0 %v1637
        %1657 = vmatpush.bf16.msra.mxu0 %v1636
        %1658 = vmatpush.bf16.msra.mxu0 %v1635
        %1659 = vmatmul.bf16.gmra.mxu0 %v1582
        %v1660 = vpop.f32.mrf.mxu0
        %v1661 = vadd.f32 %v1601, %v1660
        %v1662 = vpop.f32.mrf.mxu0
        %1663 = vdwg.mxu0
        %v1664 = vadd.f32 %v1661, %v1543
        %v1665 = vld [vmem:[%s21] sm:$0x1]
        %v1666 = vld [vmem:[%s22] sm:$0x1]
        %v1667 = vsel %vm793, %v1664, 0.0
        %1668 = vadd.xlane.f32.xlu0 %v1667
        %v1669 = vpop.xlane.xlu0 %1668
        %v1670 = vmul.f32 %v1669, 0.03125
        %v1671 = vsub.f32 %v1664, %v1670
        %v1672 = vmul.f32 %v1671, %v1671
        %v1673 = vsel %vm793, %v1672, 0.0
        %1674 = vadd.xlane.f32.xlu0 %v1673
        %v1675 = vpop.xlane.xlu0 %1674
        %v1676 = vmul.f32 %v1675, 0.03125
        %v1677 = vadd.f32 %v1676, 1e-05
        %v1678 = vrsqrt.pop %v1677
        %v1679 = vmul.f32 %v1678, %v1677
        %v1680 = vmul.f32 %v1679, %v1678
        %v1681 = vmul.f32 0.5, %v1680
        %v1682 = vsub.f32 1.5, %v1681
        %v1683 = vmul.f32 %v1678, %v1682
        %vm1684 = vweird.f32 %v1677
        %vm1685 = vweird.f32 %v1678
        %vm1686 = vmor %vm1684, %vm1685
        %v1687 = vsel %vm1686, %v1678, %v1683
        %v1688 = vmul.f32 %v1671, %v1687
        %v1690 = vperm.slane %v1665, 0
        %v1692 = vmul.f32 %v1688, %v1690
        %v1694 = vperm.slane %v1666, 0
        %v1696 = vadd.f32 %v1692, %v1694
        %v1697 = vpack.c.bf16 %v1696, %v1696
        %vm1698 = vcmask 257024
        %1699 = vst.msk [vmem:[%s753] sm:$0xf] %vm1698, %v1697
        %s1700 = sand.u32 %s553, 1
        %s1701 = scalar_lea.sflag [#allocation4], %s1700
        %s1702 = sand.u32 %s553, 1
        %s1703 = smul.addr %s1702, 4
        %s1704 = scalar_lea.vmem [#allocation3], %s1703
        // Predicated region
        $region113: #{decoder_block.1} parent=111 // pred_check
          %p1705 = pneg %p563
        $region114: #{decoder_block.1} parent=111 // pred_check_branch
          %1707 = sbr.rel (%p1705) target = $region116
        $region115: #{decoder_block.1} parent=111 // pred_region
          %1709 = vsyncadd %s1701, 0
          %s1710 = smul.addr %s37, 4
          %s1711 = scalar_lea.hbm %s23, %s1710
          %s1713 = sshll.u32 %s1704, 4
          %s1714 = int_to_ptr.vmem [resolvable:$true] %s1713
          %s1715 = sshll.u32 %s1711, 4
          %s1716 = int_to_ptr.hbm [resolvable:$true] %s1715
          %1718 = dma.vmem_to_hbm [thread:$0]  %s1714, 64, %s1716, %s1701
        $region116: #{decoder_block.1} parent=111 // pred_fallthru
          _
      $region112: #{decoder_block.1} parent=5 // pred_fallthru
        _
      %p1719 = scmp.le.s32.totalorder 2, %s32
      // Predicated region
      $region117: #{decoder_block.1} parent=5 // pred_check
        %p1720 = pneg %p1719
      $region118: #{decoder_block.1} parent=5 // pred_check_branch
        %1722 = sbr.rel (%p1720) target = $region120
      $region119: #{decoder_block.1} parent=5 // pred_region
        %s1723 = ssub.s32 %s32, 2
        // Predicated region
        $region121: #{decoder_block.1} parent=119 // pred_check
          %p1724 = pneg %p569
        $region122: #{decoder_block.1} parent=119 // pred_check_branch
          %1726 = sbr.rel (%p1724) target = $region124
        $region123: #{decoder_block.1} parent=119 // pred_region
          %s1727 = sand.u32 %s554, 1
          %s1728 = scalar_lea.sflag [#allocation4], %s1727
          %s1729 = sand.u32 %s554, 1
          %s1730 = smul.addr %s1729, 4
          %s1731 = scalar_lea.vmem [#allocation3], %s1730
          %1733 = dma.done %s1728, 64
        $region124: #{decoder_block.1} parent=119 // pred_fallthru
          _
      $region120: #{decoder_block.1} parent=5 // pred_fallthru
        _
    $region6: #{decoder_block.1} parent=1 // loop_footer
      %s36 = sadd.s32 1, %s32
    $region7: #{decoder_block.1} parent=1 // loop_footer_branch
      %31 = sbr.rel target = $region3
    $region8: #{decoder_block.1} parent=1 // loop_exit
      _
    %1734 = vsyncpa [#allocation4], 1
    %s1735 = scalar_lea.sflag [#allocation4], 1
    %1736 = vsyncpa %s1735, 1

</llo_original>
